<compile_context>
chip_gen: v7x
topology: tpu7x:2x2x1
jax: 0.10.0
libtpu: 0.0.40
codegen_flags: <defaults>
</compile_context>

<pallas_src>
import functools

import numpy as np
import jax
import jax.numpy as jnp
from jax.experimental import pallas as pl
from jax.experimental.pallas import tpu as pltpu


def _round_up(x, m):
    return ((x + m - 1) // m) * m


def _resident_spec(shape):
    """Whole-array block with a constant index map -> fetched once, resident."""
    nd = len(shape)
    return pl.BlockSpec(tuple(int(d) for d in shape),
                        lambda b, _nd=nd: (0,) * _nd)


# --------------------------- fused Pallas kernel -----------------------------

def _make_fused_kernel(init_slope, pyr_cfg):
    """Build the per-image fused kernel body.

    refs layout: p1, w1, (S_0, Wt_0), ..., (S_{n-1}, Wt_{n-1}), wfin, out
    """
    num_pyr = len(pyr_cfg)

    def kernel(*refs):
        p1_ref, w1_ref = refs[0], refs[1]
        wfin_ref = refs[2 + 2 * num_pyr]
        o_ref = refs[3 + 2 * num_pyr]

        def lrelu(a, slope):
            return jnp.where(a >= 0, a, jnp.float32(slope) * a)

        # ---- initial 4x4/s2 conv: (im2col patches) @ W1 + LeakyReLU --------
        act = jnp.dot(p1_ref[0], w1_ref[...],
                      preferred_element_type=jnp.float32)
        act = lrelu(act, init_slope)                       # (m_rows, ndf) f32

        # ---- pyramid 4x4/s2 convs: gather-matmul + per-tap dots ------------
        for l, cfg in enumerate(pyr_cfg):
            s_ref, wt_ref = refs[2 + 2 * l], refs[3 + 2 * l]
            mp, taps = cfg["out_m_pad"], cfg["taps"]
            # 0/1 selection matrix: rows (tap, out_pos) gather act spatial rows
            g = jnp.dot(s_ref[...], act.astype(jnp.bfloat16),
                        preferred_element_type=jnp.float32)   # (taps*mp, cin)
            nxt = jnp.dot(g[0:mp, :], wt_ref[0],
                          preferred_element_type=jnp.float32)
            for t in range(1, taps):
                nxt = nxt + jnp.dot(g[t * mp:(t + 1) * mp, :], wt_ref[t],
                                    preferred_element_type=jnp.float32)
            act = lrelu(nxt, cfg["slope"])                   # (mp, cout) f32

        # ---- final 6x6 valid conv (cout=1): VPU multiply + full reduce -----
        val = jnp.sum(act * wfin_ref[...])
        o_ref[...] = jnp.broadcast_to(val, o_ref.shape).astype(o_ref.dtype)

    return kernel


# --------------------------- wrapper-side im2col -----------------------------

def _im2col_nhwc(x, k, stride, pad):
    """x: (N, H, W, C) -> patches (N*OH*OW, k*k*C), (kh, kw, c) column order."""
    N, H, W, C = x.shape
    xp = jnp.pad(x, ((0, 0), (pad, pad), (pad, pad), (0, 0)))
    OH = (H + 2 * pad - k) // stride + 1
    OW = (W + 2 * pad - k) // stride + 1
    cols = []
    for kh in range(k):
        for kw in range(k):
            cols.append(xp[:, kh:kh + OH * stride:stride,
                           kw:kw + OW * stride:stride, :])
    patches = jnp.stack(cols, axis=3)                    # (N, OH, OW, k*k, C)
    return patches.reshape(N * OH * OW, k * k * C), (N, OH, OW)


# ------------------------------- CNN_D model ---------------------------------

def init_cnn_d_layers(key, isize, nc, ndf):
    """(w_oikk, k, s, p, slope) list mirroring m.weight.data.normal_(0, 0.02)."""
    layers = []
    key, sub = jax.random.split(key)
    layers.append((0.02 * jax.random.normal(sub, (ndf, nc, 4, 4), jnp.float32),
                   4, 2, 1, 0.2))
    csize, cndf = isize // 2, ndf
    while csize > 6:
        key, sub = jax.random.split(key)
        layers.append((0.02 * jax.random.normal(
            sub, (cndf * 2, cndf, 4, 4), jnp.float32), 4, 2, 1, 0.2))
        cndf *= 2
        csize //= 2
    key, sub = jax.random.split(key)
    layers.append((0.02 * jax.random.normal(sub, (1, cndf, 6, 6), jnp.float32),
                   6, 1, 0, None))
    return layers


def prepack_fused(layers, isize):
    """Prepack all weights / gather matrices for the single fused kernel."""
    # --- initial conv ---------------------------------------------------
    w, k, s, p, slope = layers[0]
    cout, cin = int(w.shape[0]), int(w.shape[1])
    hw = (isize + 2 * p - k) // s + 1
    init = dict(
        k=k, s=s, p=p, slope=slope, K=k * k * cin, out_m=hw * hw,
        w=jnp.transpose(w, (2, 3, 1, 0)).reshape(k * k * cin, cout)
          .astype(jnp.bfloat16))
    m_rows = hw * hw            # rows of the activation feeding the next stage

    # --- pyramid convs ----------------------------------------------------
    pyr_ops, pyr_cfg = [], []
    for (w, k, s, p, slope) in layers[1:-1]:
        cout, cin = int(w.shape[0]), int(w.shape[1])
        out_hw = (hw + 2 * p - k) // s + 1
        out_m = out_hw * out_hw
        out_m_pad = _round_up(out_m, 8)      # 8-aligned slabs inside the kernel
        S = np.zeros((k * k * out_m_pad, m_rows), np.float32)
        for kh in range(k):
            for kw in range(k):
                t = kh * k + kw
                for oh in range(out_hw):
                    for ow in range(out_hw):
                        ih = s * oh - p + kh
                        iw = s * ow - p + kw
                        if 0 <= ih < hw and 0 <= iw < hw:
                            S[t * out_m_pad + oh * out_hw + ow,
                              ih * hw + iw] = 1.0
        Wt = (jnp.transpose(w, (2, 3, 1, 0))
              .reshape(k * k, cin, cout).astype(jnp.float32))
        pyr_ops.append((jnp.asarray(S, jnp.bfloat16), Wt))
        pyr_cfg.append(dict(taps=k * k, out_m_pad=out_m_pad, cout=cout,
                            slope=slope))
        hw, m_rows = out_hw, out_m_pad

    # --- final 6x6 valid conv (cout == 1) ---------------------------------
    w, k, s, p, slope = layers[-1]
    cin = int(w.shape[1])
    wfin = jnp.transpose(w[0], (1, 2, 0)).reshape(k * k, cin)   # (kh*kw, cin)
    wfin = jnp.pad(wfin, ((0, m_rows - k * k), (0, 0))).astype(jnp.float32)
    return dict(init=init, pyr_ops=pyr_ops, pyr_cfg=pyr_cfg, wfin=wfin)


def cnn_d_forward(packed, x_nchw):
    init, pyr_cfg, pyr_ops, wfin = (packed["init"], packed["pyr_cfg"],
                                    packed["pyr_ops"], packed["wfin"])
    B = x_nchw.shape[0]

    # layout: NCHW (PyTorch) -> NHWC; first-layer im2col on the HBM input
    # (tiny: ~14 KB total at this config).
    x = jnp.transpose(x_nchw, (0, 2, 3, 1)).astype(jnp.bfloat16)
    p1, _ = _im2col_nhwc(x, init["k"], init["s"], init["p"])
    p1 = p1.reshape(B, init["out_m"], init["K"])

    kernel = _make_fused_kernel(init["slope"], pyr_cfg)

    args = [p1, init["w"]]
    in_specs = [pl.BlockSpec((1, init["out_m"], init["K"]),
                             lambda b: (b, 0, 0)),
                _resident_spec(init["w"].shape)]
    for (S, Wt) in pyr_ops:
        args += [S, Wt]
        in_specs += [_resident_spec(S.shape), _resident_spec(Wt.shape)]
    args.append(wfin)
    in_specs.append(_resident_spec(wfin.shape))

    # Output is one scalar per image; emit a lane-dense (8,128) tile per image
    # for unmasked stores and pick element [0,0] in the wrapper.
    out = pl.pallas_call(
        kernel,
        out_shape=jax.ShapeDtypeStruct((B, 8, 128), jnp.float32),
        grid_spec=pltpu.PrefetchScalarGridSpec(
            num_scalar_prefetch=0,
            grid=(B,),
            in_specs=in_specs,
            out_specs=pl.BlockSpec((1, 8, 128), lambda b: (b, 0, 0)),
        ),
        compiler_params=pltpu.CompilerParams(
            dimension_semantics=("parallel",),
            vmem_limit_bytes=32 * 1024 * 1024),
    )(*args)

    # PyTorch: output (B,1,1,1).squeeze()
    return jnp.squeeze(out[:, 0, 0])


# ------------------------------ reference (JAX) -------------------------------

def cnn_d_forward_ref(layers, x_nchw):
    x = x_nchw.astype(jnp.float32)
    for (w, k, s, p, slope) in layers:
        x = jax.lax.conv_general_dilated(
            x, w, window_strides=(s, s), padding=[(p, p), (p, p)],
            dimension_numbers=("NCHW", "OIHW", "NCHW"))
        if slope is not None:
            x = jnp.where(x >= 0, x, slope * x)
    return jnp.squeeze(x)


# ----------------------------------- main -------------------------------------

if __name__ == "__main__":
    key = jax.random.PRNGKey(0)

    # Small shapes consistent with the module: isize=24, nc=3, ndf=8, batch=2
    # Network: 24 -> 12 (init conv) -> 6 (one pyramid) -> final 6x6 valid -> 1x1
    isize, nc, ndf, batch = 24, 3, 8, 2

    kp, kx = jax.random.split(key)
    layers = init_cnn_d_layers(kp, isize, nc, ndf)
    packed = prepack_fused(layers, isize)
    x = jax.random.normal(kx, (batch, nc, isize, isize), jnp.float32)

    fwd = jax.jit(functools.partial(cnn_d_forward, packed))
    out = jax.block_until_ready(fwd(x))
    ref = jax.block_until_ready(cnn_d_forward_ref(layers, x))

    assert out.shape == (batch,), f"unexpected output shape {out.shape}"
    # bf16 MXU inputs (f32 accumulation) vs pure-f32 reference -> loosened tol
    assert jnp.allclose(out, ref, atol=5e-3, rtol=5e-2), (out, ref)

    print("KERNEL_OK")
</pallas_src>

<mosaic_0001>
module attributes {stable_mosaic.version = 11 : i64} {
  func.func @kernel(%arg0: i32, %arg1: memref<1x144x48xbf16, #tpu.memory_space<vmem>>, %arg2: memref<48x8xbf16, #tpu.memory_space<vmem>>, %arg3: memref<640x144xbf16, #tpu.memory_space<vmem>>, %arg4: memref<16x8x16xf32, #tpu.memory_space<vmem>>, %arg5: memref<40x16xf32, #tpu.memory_space<vmem>>, %arg6: memref<1x8x128xf32, #tpu.memory_space<vmem>>) attributes {dimension_semantics = [#tpu.dimension_semantics<parallel>], iteration_bounds = array<i64: 2>, scalar_prefetch = 0 : i64, scratch_operands = 0 : i64, tpu.core_type = #tpu.core_type<tc>, window_params = [{transform_indices = @transform_0, window_bounds = array<i64: 1, 144, 48>}, {pipeline_mode = #tpu.pipeline_mode<synchronous>, transform_indices = @transform_1, window_bounds = array<i64: 48, 8>}, {pipeline_mode = #tpu.pipeline_mode<synchronous>, transform_indices = @transform_2, window_bounds = array<i64: 640, 144>}, {pipeline_mode = #tpu.pipeline_mode<synchronous>, transform_indices = @transform_3, window_bounds = array<i64: 16, 8, 16>}, {pipeline_mode = #tpu.pipeline_mode<synchronous>, transform_indices = @transform_4, window_bounds = array<i64: 40, 16>}, {transform_indices = @transform_5, window_bounds = array<i64: 1, 8, 128>}]} {
    %c0 = arith.constant 0 : index
    %c0_0 = arith.constant 0 : index
    %c0_1 = arith.constant 0 : index
    %0 = vector.load %arg1[%c0, %c0_0, %c0_1] : memref<1x144x48xbf16, #tpu.memory_space<vmem>>, vector<1x144x48xbf16>
    %1 = vector.shape_cast %0 : vector<1x144x48xbf16> to vector<144x48xbf16>
    %c0_2 = arith.constant 0 : index
    %c0_3 = arith.constant 0 : index
    %2 = vector.load %arg2[%c0_2, %c0_3] : memref<48x8xbf16, #tpu.memory_space<vmem>>, vector<48x8xbf16>
    %cst = arith.constant dense<0.000000e+00> : vector<144x8xf32>
    %3 = tpu.matmul %1, %2, %cst {dimension_numbers = #tpu.dot_dimension_numbers<[1], [0], [0], [1], [0, 0, 1, 1], [], []>} : vector<144x48xbf16>, vector<48x8xbf16>, vector<144x8xf32> -> vector<144x8xf32>
    %cst_4 = arith.constant 0.000000e+00 : f32
    %4 = vector.broadcast %cst_4 : f32 to vector<144x8xf32>
    %5 = arith.cmpf oge, %3, %4 : vector<144x8xf32>
    %cst_5 = arith.constant 2.000000e-01 : f32
    %6 = vector.broadcast %cst_5 : f32 to vector<144x8xf32>
    %7 = arith.mulf %6, %3 : vector<144x8xf32>
    %8 = arith.select %5, %3, %7 : vector<144x8xi1>, vector<144x8xf32>
    %c0_6 = arith.constant 0 : index
    %c0_7 = arith.constant 0 : index
    %9 = vector.load %arg3[%c0_6, %c0_7] : memref<640x144xbf16, #tpu.memory_space<vmem>>, vector<640x144xbf16>
    %10 = arith.truncf %8 : vector<144x8xf32> to vector<144x8xbf16>
    %cst_8 = arith.constant dense<0.000000e+00> : vector<640x8xf32>
    %11 = tpu.matmul %9, %10, %cst_8 {dimension_numbers = #tpu.dot_dimension_numbers<[1], [0], [0], [1], [0, 0, 1, 1], [], []>} : vector<640x144xbf16>, vector<144x8xbf16>, vector<640x8xf32> -> vector<640x8xf32>
    %12 = vector.extract_strided_slice %11 {offsets = [0, 0], sizes = [40, 8], strides = [1, 1]} : vector<640x8xf32> to vector<40x8xf32>
    %c0_9 = arith.constant 0 : index
    %c0_10 = arith.constant 0 : index
    %c0_11 = arith.constant 0 : index
    %13 = vector.load %arg4[%c0_9, %c0_10, %c0_11] : memref<16x8x16xf32, #tpu.memory_space<vmem>>, vector<1x8x16xf32>
    %14 = vector.shape_cast %13 : vector<1x8x16xf32> to vector<8x16xf32>
    %cst_12 = arith.constant dense<0.000000e+00> : vector<40x16xf32>
    %15 = tpu.matmul %12, %14, %cst_12 {dimension_numbers = #tpu.dot_dimension_numbers<[1], [0], [0], [1], [0, 0, 1, 1], [], []>} : vector<40x8xf32>, vector<8x16xf32>, vector<40x16xf32> -> vector<40x16xf32>
    %16 = vector.extract_strided_slice %11 {offsets = [40, 0], sizes = [40, 8], strides = [1, 1]} : vector<640x8xf32> to vector<40x8xf32>
    %c1 = arith.constant 1 : index
    %c0_13 = arith.constant 0 : index
    %c0_14 = arith.constant 0 : index
    %17 = vector.load %arg4[%c1, %c0_13, %c0_14] : memref<16x8x16xf32, #tpu.memory_space<vmem>>, vector<1x8x16xf32>
    %18 = vector.shape_cast %17 : vector<1x8x16xf32> to vector<8x16xf32>
    %cst_15 = arith.constant dense<0.000000e+00> : vector<40x16xf32>
    %19 = tpu.matmul %16, %18, %cst_15 {dimension_numbers = #tpu.dot_dimension_numbers<[1], [0], [0], [1], [0, 0, 1, 1], [], []>} : vector<40x8xf32>, vector<8x16xf32>, vector<40x16xf32> -> vector<40x16xf32>
    %20 = arith.addf %15, %19 : vector<40x16xf32>
    %21 = vector.extract_strided_slice %11 {offsets = [80, 0], sizes = [40, 8], strides = [1, 1]} : vector<640x8xf32> to vector<40x8xf32>
    %c2 = arith.constant 2 : index
    %c0_16 = arith.constant 0 : index
    %c0_17 = arith.constant 0 : index
    %22 = vector.load %arg4[%c2, %c0_16, %c0_17] : memref<16x8x16xf32, #tpu.memory_space<vmem>>, vector<1x8x16xf32>
    %23 = vector.shape_cast %22 : vector<1x8x16xf32> to vector<8x16xf32>
    %cst_18 = arith.constant dense<0.000000e+00> : vector<40x16xf32>
    %24 = tpu.matmul %21, %23, %cst_18 {dimension_numbers = #tpu.dot_dimension_numbers<[1], [0], [0], [1], [0, 0, 1, 1], [], []>} : vector<40x8xf32>, vector<8x16xf32>, vector<40x16xf32> -> vector<40x16xf32>
    %25 = arith.addf %20, %24 : vector<40x16xf32>
    %26 = vector.extract_strided_slice %11 {offsets = [120, 0], sizes = [40, 8], strides = [1, 1]} : vector<640x8xf32> to vector<40x8xf32>
    %c3 = arith.constant 3 : index
    %c0_19 = arith.constant 0 : index
    %c0_20 = arith.constant 0 : index
    %27 = vector.load %arg4[%c3, %c0_19, %c0_20] : memref<16x8x16xf32, #tpu.memory_space<vmem>>, vector<1x8x16xf32>
    %28 = vector.shape_cast %27 : vector<1x8x16xf32> to vector<8x16xf32>
    %cst_21 = arith.constant dense<0.000000e+00> : vector<40x16xf32>
    %29 = tpu.matmul %26, %28, %cst_21 {dimension_numbers = #tpu.dot_dimension_numbers<[1], [0], [0], [1], [0, 0, 1, 1], [], []>} : vector<40x8xf32>, vector<8x16xf32>, vector<40x16xf32> -> vector<40x16xf32>
    %30 = arith.addf %25, %29 : vector<40x16xf32>
    %31 = vector.extract_strided_slice %11 {offsets = [160, 0], sizes = [40, 8], strides = [1, 1]} : vector<640x8xf32> to vector<40x8xf32>
    %c4 = arith.constant 4 : index
    %c0_22 = arith.constant 0 : index
    %c0_23 = arith.constant 0 : index
    %32 = vector.load %arg4[%c4, %c0_22, %c0_23] : memref<16x8x16xf32, #tpu.memory_space<vmem>>, vector<1x8x16xf32>
    %33 = vector.shape_cast %32 : vector<1x8x16xf32> to vector<8x16xf32>
    %cst_24 = arith.constant dense<0.000000e+00> : vector<40x16xf32>
    %34 = tpu.matmul %31, %33, %cst_24 {dimension_numbers = #tpu.dot_dimension_numbers<[1], [0], [0], [1], [0, 0, 1, 1], [], []>} : vector<40x8xf32>, vector<8x16xf32>, vector<40x16xf32> -> vector<40x16xf32>
    %35 = arith.addf %30, %34 : vector<40x16xf32>
    %36 = vector.extract_strided_slice %11 {offsets = [200, 0], sizes = [40, 8], strides = [1, 1]} : vector<640x8xf32> to vector<40x8xf32>
    %c5 = arith.constant 5 : index
    %c0_25 = arith.constant 0 : index
    %c0_26 = arith.constant 0 : index
    %37 = vector.load %arg4[%c5, %c0_25, %c0_26] : memref<16x8x16xf32, #tpu.memory_space<vmem>>, vector<1x8x16xf32>
    %38 = vector.shape_cast %37 : vector<1x8x16xf32> to vector<8x16xf32>
    %cst_27 = arith.constant dense<0.000000e+00> : vector<40x16xf32>
    %39 = tpu.matmul %36, %38, %cst_27 {dimension_numbers = #tpu.dot_dimension_numbers<[1], [0], [0], [1], [0, 0, 1, 1], [], []>} : vector<40x8xf32>, vector<8x16xf32>, vector<40x16xf32> -> vector<40x16xf32>
    %40 = arith.addf %35, %39 : vector<40x16xf32>
    %41 = vector.extract_strided_slice %11 {offsets = [240, 0], sizes = [40, 8], strides = [1, 1]} : vector<640x8xf32> to vector<40x8xf32>
    %c6 = arith.constant 6 : index
    %c0_28 = arith.constant 0 : index
    %c0_29 = arith.constant 0 : index
    %42 = vector.load %arg4[%c6, %c0_28, %c0_29] : memref<16x8x16xf32, #tpu.memory_space<vmem>>, vector<1x8x16xf32>
    %43 = vector.shape_cast %42 : vector<1x8x16xf32> to vector<8x16xf32>
    %cst_30 = arith.constant dense<0.000000e+00> : vector<40x16xf32>
    %44 = tpu.matmul %41, %43, %cst_30 {dimension_numbers = #tpu.dot_dimension_numbers<[1], [0], [0], [1], [0, 0, 1, 1], [], []>} : vector<40x8xf32>, vector<8x16xf32>, vector<40x16xf32> -> vector<40x16xf32>
    %45 = arith.addf %40, %44 : vector<40x16xf32>
    %46 = vector.extract_strided_slice %11 {offsets = [280, 0], sizes = [40, 8], strides = [1, 1]} : vector<640x8xf32> to vector<40x8xf32>
    %c7 = arith.constant 7 : index
    %c0_31 = arith.constant 0 : index
    %c0_32 = arith.constant 0 : index
    %47 = vector.load %arg4[%c7, %c0_31, %c0_32] : memref<16x8x16xf32, #tpu.memory_space<vmem>>, vector<1x8x16xf32>
    %48 = vector.shape_cast %47 : vector<1x8x16xf32> to vector<8x16xf32>
    %cst_33 = arith.constant dense<0.000000e+00> : vector<40x16xf32>
    %49 = tpu.matmul %46, %48, %cst_33 {dimension_numbers = #tpu.dot_dimension_numbers<[1], [0], [0], [1], [0, 0, 1, 1], [], []>} : vector<40x8xf32>, vector<8x16xf32>, vector<40x16xf32> -> vector<40x16xf32>
    %50 = arith.addf %45, %49 : vector<40x16xf32>
    %51 = vector.extract_strided_slice %11 {offsets = [320, 0], sizes = [40, 8], strides = [1, 1]} : vector<640x8xf32> to vector<40x8xf32>
    %c8 = arith.constant 8 : index
    %c0_34 = arith.constant 0 : index
    %c0_35 = arith.constant 0 : index
    %52 = vector.load %arg4[%c8, %c0_34, %c0_35] : memref<16x8x16xf32, #tpu.memory_space<vmem>>, vector<1x8x16xf32>
    %53 = vector.shape_cast %52 : vector<1x8x16xf32> to vector<8x16xf32>
    %cst_36 = arith.constant dense<0.000000e+00> : vector<40x16xf32>
    %54 = tpu.matmul %51, %53, %cst_36 {dimension_numbers = #tpu.dot_dimension_numbers<[1], [0], [0], [1], [0, 0, 1, 1], [], []>} : vector<40x8xf32>, vector<8x16xf32>, vector<40x16xf32> -> vector<40x16xf32>
    %55 = arith.addf %50, %54 : vector<40x16xf32>
    %56 = vector.extract_strided_slice %11 {offsets = [360, 0], sizes = [40, 8], strides = [1, 1]} : vector<640x8xf32> to vector<40x8xf32>
    %c9 = arith.constant 9 : index
    %c0_37 = arith.constant 0 : index
    %c0_38 = arith.constant 0 : index
    %57 = vector.load %arg4[%c9, %c0_37, %c0_38] : memref<16x8x16xf32, #tpu.memory_space<vmem>>, vector<1x8x16xf32>
    %58 = vector.shape_cast %57 : vector<1x8x16xf32> to vector<8x16xf32>
    %cst_39 = arith.constant dense<0.000000e+00> : vector<40x16xf32>
    %59 = tpu.matmul %56, %58, %cst_39 {dimension_numbers = #tpu.dot_dimension_numbers<[1], [0], [0], [1], [0, 0, 1, 1], [], []>} : vector<40x8xf32>, vector<8x16xf32>, vector<40x16xf32> -> vector<40x16xf32>
    %60 = arith.addf %55, %59 : vector<40x16xf32>
    %61 = vector.extract_strided_slice %11 {offsets = [400, 0], sizes = [40, 8], strides = [1, 1]} : vector<640x8xf32> to vector<40x8xf32>
    %c10 = arith.constant 10 : index
    %c0_40 = arith.constant 0 : index
    %c0_41 = arith.constant 0 : index
    %62 = vector.load %arg4[%c10, %c0_40, %c0_41] : memref<16x8x16xf32, #tpu.memory_space<vmem>>, vector<1x8x16xf32>
    %63 = vector.shape_cast %62 : vector<1x8x16xf32> to vector<8x16xf32>
    %cst_42 = arith.constant dense<0.000000e+00> : vector<40x16xf32>
    %64 = tpu.matmul %61, %63, %cst_42 {dimension_numbers = #tpu.dot_dimension_numbers<[1], [0], [0], [1], [0, 0, 1, 1], [], []>} : vector<40x8xf32>, vector<8x16xf32>, vector<40x16xf32> -> vector<40x16xf32>
    %65 = arith.addf %60, %64 : vector<40x16xf32>
    %66 = vector.extract_strided_slice %11 {offsets = [440, 0], sizes = [40, 8], strides = [1, 1]} : vector<640x8xf32> to vector<40x8xf32>
    %c11 = arith.constant 11 : index
    %c0_43 = arith.constant 0 : index
    %c0_44 = arith.constant 0 : index
    %67 = vector.load %arg4[%c11, %c0_43, %c0_44] : memref<16x8x16xf32, #tpu.memory_space<vmem>>, vector<1x8x16xf32>
    %68 = vector.shape_cast %67 : vector<1x8x16xf32> to vector<8x16xf32>
    %cst_45 = arith.constant dense<0.000000e+00> : vector<40x16xf32>
    %69 = tpu.matmul %66, %68, %cst_45 {dimension_numbers = #tpu.dot_dimension_numbers<[1], [0], [0], [1], [0, 0, 1, 1], [], []>} : vector<40x8xf32>, vector<8x16xf32>, vector<40x16xf32> -> vector<40x16xf32>
    %70 = arith.addf %65, %69 : vector<40x16xf32>
    %71 = vector.extract_strided_slice %11 {offsets = [480, 0], sizes = [40, 8], strides = [1, 1]} : vector<640x8xf32> to vector<40x8xf32>
    %c12 = arith.constant 12 : index
    %c0_46 = arith.constant 0 : index
    %c0_47 = arith.constant 0 : index
    %72 = vector.load %arg4[%c12, %c0_46, %c0_47] : memref<16x8x16xf32, #tpu.memory_space<vmem>>, vector<1x8x16xf32>
    %73 = vector.shape_cast %72 : vector<1x8x16xf32> to vector<8x16xf32>
    %cst_48 = arith.constant dense<0.000000e+00> : vector<40x16xf32>
    %74 = tpu.matmul %71, %73, %cst_48 {dimension_numbers = #tpu.dot_dimension_numbers<[1], [0], [0], [1], [0, 0, 1, 1], [], []>} : vector<40x8xf32>, vector<8x16xf32>, vector<40x16xf32> -> vector<40x16xf32>
    %75 = arith.addf %70, %74 : vector<40x16xf32>
    %76 = vector.extract_strided_slice %11 {offsets = [520, 0], sizes = [40, 8], strides = [1, 1]} : vector<640x8xf32> to vector<40x8xf32>
    %c13 = arith.constant 13 : index
    %c0_49 = arith.constant 0 : index
    %c0_50 = arith.constant 0 : index
    %77 = vector.load %arg4[%c13, %c0_49, %c0_50] : memref<16x8x16xf32, #tpu.memory_space<vmem>>, vector<1x8x16xf32>
    %78 = vector.shape_cast %77 : vector<1x8x16xf32> to vector<8x16xf32>
    %cst_51 = arith.constant dense<0.000000e+00> : vector<40x16xf32>
    %79 = tpu.matmul %76, %78, %cst_51 {dimension_numbers = #tpu.dot_dimension_numbers<[1], [0], [0], [1], [0, 0, 1, 1], [], []>} : vector<40x8xf32>, vector<8x16xf32>, vector<40x16xf32> -> vector<40x16xf32>
    %80 = arith.addf %75, %79 : vector<40x16xf32>
    %81 = vector.extract_strided_slice %11 {offsets = [560, 0], sizes = [40, 8], strides = [1, 1]} : vector<640x8xf32> to vector<40x8xf32>
    %c14 = arith.constant 14 : index
    %c0_52 = arith.constant 0 : index
    %c0_53 = arith.constant 0 : index
    %82 = vector.load %arg4[%c14, %c0_52, %c0_53] : memref<16x8x16xf32, #tpu.memory_space<vmem>>, vector<1x8x16xf32>
    %83 = vector.shape_cast %82 : vector<1x8x16xf32> to vector<8x16xf32>
    %cst_54 = arith.constant dense<0.000000e+00> : vector<40x16xf32>
    %84 = tpu.matmul %81, %83, %cst_54 {dimension_numbers = #tpu.dot_dimension_numbers<[1], [0], [0], [1], [0, 0, 1, 1], [], []>} : vector<40x8xf32>, vector<8x16xf32>, vector<40x16xf32> -> vector<40x16xf32>
    %85 = arith.addf %80, %84 : vector<40x16xf32>
    %86 = vector.extract_strided_slice %11 {offsets = [600, 0], sizes = [40, 8], strides = [1, 1]} : vector<640x8xf32> to vector<40x8xf32>
    %c15 = arith.constant 15 : index
    %c0_55 = arith.constant 0 : index
    %c0_56 = arith.constant 0 : index
    %87 = vector.load %arg4[%c15, %c0_55, %c0_56] : memref<16x8x16xf32, #tpu.memory_space<vmem>>, vector<1x8x16xf32>
    %88 = vector.shape_cast %87 : vector<1x8x16xf32> to vector<8x16xf32>
    %cst_57 = arith.constant dense<0.000000e+00> : vector<40x16xf32>
    %89 = tpu.matmul %86, %88, %cst_57 {dimension_numbers = #tpu.dot_dimension_numbers<[1], [0], [0], [1], [0, 0, 1, 1], [], []>} : vector<40x8xf32>, vector<8x16xf32>, vector<40x16xf32> -> vector<40x16xf32>
    %90 = arith.addf %85, %89 : vector<40x16xf32>
    %cst_58 = arith.constant 0.000000e+00 : f32
    %91 = vector.broadcast %cst_58 : f32 to vector<40x16xf32>
    %92 = arith.cmpf oge, %90, %91 : vector<40x16xf32>
    %cst_59 = arith.constant 2.000000e-01 : f32
    %93 = vector.broadcast %cst_59 : f32 to vector<40x16xf32>
    %94 = arith.mulf %93, %90 : vector<40x16xf32>
    %95 = arith.select %92, %90, %94 : vector<40x16xi1>, vector<40x16xf32>
    %c0_60 = arith.constant 0 : index
    %c0_61 = arith.constant 0 : index
    %96 = vector.load %arg5[%c0_60, %c0_61] : memref<40x16xf32, #tpu.memory_space<vmem>>, vector<40x16xf32>
    %97 = arith.mulf %95, %96 : vector<40x16xf32>
    %98 = vector.shape_cast %97 : vector<40x16xf32> to vector<1x40x16xf32>
    %cst_62 = arith.constant dense<0.000000e+00> : vector<1xf32>
    %99 = vector.multi_reduction <add>, %98, %cst_62 [1, 2] : vector<1x40x16xf32> to vector<1xf32>
    %100 = vector.shape_cast %99 : vector<1xf32> to vector<1x1x1xf32>
    %101 = vector.extract %100[0, 0, 0] : f32 from vector<1x1x1xf32>
    %102 = vector.broadcast %101 : f32 to vector<1x8x128xf32>
    %c0_63 = arith.constant 0 : index
    %c0_64 = arith.constant 0 : index
    %c0_65 = arith.constant 0 : index
    %103 = vector.load %arg6[%c0_63, %c0_64, %c0_65] : memref<1x8x128xf32, #tpu.memory_space<vmem>>, vector<1x8x128xf32>
    tpu.vector_store %arg6[%c0_63, %c0_64, %c0_65], %102 {strides = array<i32>} : memref<1x8x128xf32, #tpu.memory_space<vmem>>, vector<1x8x128xf32>,
    return
  }
  func.func @transform_0(%arg0: i32) -> (i32, i32, i32) {
    %c0_i32 = arith.constant 0 : i32
    %c0_i32_0 = arith.constant 0 : i32
    %c0_i32_1 = arith.constant 0 : i32
    return %arg0, %c0_i32, %c0_i32_0 : i32, i32, i32
  }
  func.func @transform_1(%arg0: i32) -> (i32, i32) {
    %c0_i32 = arith.constant 0 : i32
    %c0_i32_0 = arith.constant 0 : i32
    %c0_i32_1 = arith.constant 0 : i32
    return %c0_i32, %c0_i32_0 : i32, i32
  }
  func.func @transform_2(%arg0: i32) -> (i32, i32) {
    %c0_i32 = arith.constant 0 : i32
    %c0_i32_0 = arith.constant 0 : i32
    %c0_i32_1 = arith.constant 0 : i32
    return %c0_i32, %c0_i32_0 : i32, i32
  }
  func.func @transform_3(%arg0: i32) -> (i32, i32, i32) {
    %c0_i32 = arith.constant 0 : i32
    %c0_i32_0 = arith.constant 0 : i32
    %c0_i32_1 = arith.constant 0 : i32
    %c0_i32_2 = arith.constant 0 : i32
    return %c0_i32, %c0_i32_0, %c0_i32_1 : i32, i32, i32
  }
  func.func @transform_4(%arg0: i32) -> (i32, i32) {
    %c0_i32 = arith.constant 0 : i32
    %c0_i32_0 = arith.constant 0 : i32
    %c0_i32_1 = arith.constant 0 : i32
    return %c0_i32, %c0_i32_0 : i32, i32
  }
  func.func @transform_5(%arg0: i32) -> (i32, i32, i32) {
    %c0_i32 = arith.constant 0 : i32
    %c0_i32_0 = arith.constant 0 : i32
    %c0_i32_1 = arith.constant 0 : i32
    return %arg0, %c0_i32, %c0_i32_0 : i32, i32, i32
  }
}

</mosaic_0001>

<llo_original>
// kernel: cnn_d_forward.1
$region0: #{cnn_d_forward.1}
  #allocation0 [shape = 'u32[]', space=smem, size = 0x4, offset = 0x4, fixed_abs, tag = 'smem constant byte address 0x4 - core index']
  #allocation1 [shape = 'u32[144,128]{1,0:T(1,128)}', space=vmem, size = 0x12000, scoped, tag = 'internal scratch']
  %s0 = inlined_call_operand.vmem [shape: bf16[2,144,48], index: 0, kind: input, shape index: {}]
  %s1 = inlined_call_operand.vmem [shape: bf16[48,8], index: 1, kind: input, shape index: {}]
  %s2 = inlined_call_operand.vmem [shape: bf16[640,144], index: 2, kind: input, shape index: {}]
  %s3 = inlined_call_operand.vmem [shape: f32[16,8,16], index: 3, kind: input, shape index: {}]
  %s4 = inlined_call_operand.vmem [shape: f32[40,16], index: 4, kind: input, shape index: {}]
  %s5 = inlined_call_operand.vmem [shape: f32[2,8,128], index: 5, kind: output, shape index: {}]
  %s6 = sld [smem:[#allocation0]]
  $region53: #{cnn_d_forward.1} parent=0
    _
  %s8 = ssub.s32 1, %s6
  %s9 = scalar_select 0, %s8, %s6
  loop: start=0, step=1, limit=4
  $region2: #{cnn_d_forward.1} parent=0 // loop_pre_header
    _
  $region3: #{cnn_d_forward.1} parent=0 // loop_header
    %s11 = sphi 0, %s15
    %p12 = scmp.ge.s32.totalorder %s11, 4
    %s21 = sphi 0, %s23
    %s24 = sphi 0, %s21
    %s25 = sphi 0, %s24
    %s41 = sphi 0, %s25
    %s45 = sphi 0, %s45
    %s47 = sphi 0, %s45
    %s48 = sphi 0, %s47
    %s62 = sphi 0, %s48
    %s66 = sphi 0, %s66
    %s68 = sphi 0, %s66
    %s69 = sphi 0, %s68
    %s83 = sphi 0, %s69
    %s87 = sphi 0, %s87
    %s89 = sphi 0, %s87
    %s90 = sphi 0, %s89
    %s104 = sphi 0, %s90
    %s108 = sphi 0, %s108
    %s110 = sphi 0, %s108
    %s111 = sphi 0, %s110
    %s125 = sphi 0, %s111
    %s131 = sphi 0, %s133
    %s134 = sphi 0, %s131
    %s135 = sphi 0, %s134
    %s151 = sphi 0, %s135
  $region4: #{cnn_d_forward.1} parent=0 // loop_header_branch
    %14 = sbr.rel (%p12) target = $region8
  $region5: #{cnn_d_forward.1} parent=0 // loop_body
    %s16 = ssub.s32 %s11, 1
    %s17 = ssub.s32 %s11, 2
    %s18 = sadd.s32 %s11, 1
    %s19 = ssub.s32 %s11, %s18
    %p20 = scmp.eq.s32.totalorder %s19, 0
    %s22 = sadd.s32 %s21, 1
    %s23 = scalar_select %p20, %s21, %s22
    %p26 = pneg %p20
    %p27 = scmp.eq.s32.totalorder %s11, 1
    %p28 = por %p26, %p27
    %p29 = scmp.ne.s32.totalorder %s21, %s24
    %p30 = scmp.eq.s32.totalorder %s11, 0
    %p31 = por %p29, %p30
    %p32 = scmp.ne.s32.totalorder %s21, %s24
    %p33 = scmp.eq.s32.totalorder %s16, 1
    %p34 = por %p32, %p33
    %p35 = scmp.ne.s32.totalorder %s24, %s25
    %p36 = scmp.eq.s32.totalorder %s16, 0
    %p37 = por %p35, %p36
    %p38 = scmp.ne.s32.totalorder %s24, %s25
    %p39 = scmp.eq.s32.totalorder %s17, 1
    %p40 = por %p38, %p39
    %p42 = scmp.ne.s32.totalorder %s25, %s41
    %p43 = scmp.eq.s32.totalorder %s17, 0
    %p44 = por %p42, %p43
    %s46 = sadd.s32 %s45, 1
    %p49 = scmp.eq.s32.totalorder %s11, 1
    %p50 = scmp.ne.s32.totalorder %s45, %s47
    %p51 = scmp.eq.s32.totalorder %s11, 0
    %p52 = por %p50, %p51
    %p53 = scmp.ne.s32.totalorder %s45, %s47
    %p54 = scmp.eq.s32.totalorder %s16, 1
    %p55 = por %p53, %p54
    %p56 = scmp.ne.s32.totalorder %s47, %s48
    %p57 = scmp.eq.s32.totalorder %s16, 0
    %p58 = por %p56, %p57
    %p59 = scmp.ne.s32.totalorder %s47, %s48
    %p60 = scmp.eq.s32.totalorder %s17, 1
    %p61 = por %p59, %p60
    %p63 = scmp.ne.s32.totalorder %s48, %s62
    %p64 = scmp.eq.s32.totalorder %s17, 0
    %p65 = por %p63, %p64
    %s67 = sadd.s32 %s66, 1
    %p70 = scmp.eq.s32.totalorder %s11, 1
    %p71 = scmp.ne.s32.totalorder %s66, %s68
    %p72 = scmp.eq.s32.totalorder %s11, 0
    %p73 = por %p71, %p72
    %p74 = scmp.ne.s32.totalorder %s66, %s68
    %p75 = scmp.eq.s32.totalorder %s16, 1
    %p76 = por %p74, %p75
    %p77 = scmp.ne.s32.totalorder %s68, %s69
    %p78 = scmp.eq.s32.totalorder %s16, 0
    %p79 = por %p77, %p78
    %p80 = scmp.ne.s32.totalorder %s68, %s69
    %p81 = scmp.eq.s32.totalorder %s17, 1
    %p82 = por %p80, %p81
    %p84 = scmp.ne.s32.totalorder %s69, %s83
    %p85 = scmp.eq.s32.totalorder %s17, 0
    %p86 = por %p84, %p85
    %s88 = sadd.s32 %s87, 1
    %p91 = scmp.eq.s32.totalorder %s11, 1
    %p92 = scmp.ne.s32.totalorder %s87, %s89
    %p93 = scmp.eq.s32.totalorder %s11, 0
    %p94 = por %p92, %p93
    %p95 = scmp.ne.s32.totalorder %s87, %s89
    %p96 = scmp.eq.s32.totalorder %s16, 1
    %p97 = por %p95, %p96
    %p98 = scmp.ne.s32.totalorder %s89, %s90
    %p99 = scmp.eq.s32.totalorder %s16, 0
    %p100 = por %p98, %p99
    %p101 = scmp.ne.s32.totalorder %s89, %s90
    %p102 = scmp.eq.s32.totalorder %s17, 1
    %p103 = por %p101, %p102
    %p105 = scmp.ne.s32.totalorder %s90, %s104
    %p106 = scmp.eq.s32.totalorder %s17, 0
    %p107 = por %p105, %p106
    %s109 = sadd.s32 %s108, 1
    %p112 = scmp.eq.s32.totalorder %s11, 1
    %p113 = scmp.ne.s32.totalorder %s108, %s110
    %p114 = scmp.eq.s32.totalorder %s11, 0
    %p115 = por %p113, %p114
    %p116 = scmp.ne.s32.totalorder %s108, %s110
    %p117 = scmp.eq.s32.totalorder %s16, 1
    %p118 = por %p116, %p117
    %p119 = scmp.ne.s32.totalorder %s110, %s111
    %p120 = scmp.eq.s32.totalorder %s16, 0
    %p121 = por %p119, %p120
    %p122 = scmp.ne.s32.totalorder %s110, %s111
    %p123 = scmp.eq.s32.totalorder %s17, 1
    %p124 = por %p122, %p123
    %p126 = scmp.ne.s32.totalorder %s111, %s125
    %p127 = scmp.eq.s32.totalorder %s17, 0
    %p128 = por %p126, %p127
    %s129 = ssub.s32 %s11, %s18
    %p130 = scmp.eq.s32.totalorder %s129, 0
    %s132 = sadd.s32 %s131, 1
    %s133 = scalar_select %p130, %s131, %s132
    %p136 = pneg %p130
    %p137 = scmp.eq.s32.totalorder %s11, 1
    %p138 = por %p136, %p137
    %p139 = scmp.ne.s32.totalorder %s131, %s134
    %p140 = scmp.eq.s32.totalorder %s11, 0
    %p141 = por %p139, %p140
    %p142 = scmp.ne.s32.totalorder %s131, %s134
    %p143 = scmp.eq.s32.totalorder %s16, 1
    %p144 = por %p142, %p143
    %p145 = scmp.ne.s32.totalorder %s134, %s135
    %p146 = scmp.eq.s32.totalorder %s16, 0
    %p147 = por %p145, %p146
    %p148 = scmp.ne.s32.totalorder %s134, %s135
    %p149 = scmp.eq.s32.totalorder %s17, 1
    %p150 = por %p148, %p149
    %p152 = scmp.ne.s32.totalorder %s135, %s151
    %p153 = scmp.eq.s32.totalorder %s17, 0
    %p154 = por %p152, %p153
    %p155 = scmp.le.s32.totalorder 1, %s11
    %p156 = scmp.lt.s32.totalorder %s11, 3
    %p157 = pnand %p155, %p156
    %p158 = pneg %p157
    // Predicated region
    $region9: #{cnn_d_forward.1} parent=5 // pred_check
      _
    $region10: #{cnn_d_forward.1} parent=5 // pred_check_branch
      %160 = sbr.rel (%p157) target = $region12
    $region11: #{cnn_d_forward.1} parent=5 // pred_region
      %s161 = ssub.s32 %s11, 1
      // Predicated region
      $region13: #{cnn_d_forward.1} parent=11 // pred_check
        %p162 = pneg %p58
      $region14: #{cnn_d_forward.1} parent=11 // pred_check_branch
        %164 = sbr.rel (%p162) target = $region16
      $region15: #{cnn_d_forward.1} parent=11 // pred_region
        _
      $region16: #{cnn_d_forward.1} parent=11 // pred_fallthru
        _
      // Predicated region
      $region17: #{cnn_d_forward.1} parent=11 // pred_check
        %p165 = pneg %p79
      $region18: #{cnn_d_forward.1} parent=11 // pred_check_branch
        %167 = sbr.rel (%p165) target = $region20
      $region19: #{cnn_d_forward.1} parent=11 // pred_region
        _
      $region20: #{cnn_d_forward.1} parent=11 // pred_fallthru
        _
      // Predicated region
      $region21: #{cnn_d_forward.1} parent=11 // pred_check
        %p168 = pneg %p100
      $region22: #{cnn_d_forward.1} parent=11 // pred_check_branch
        %170 = sbr.rel (%p168) target = $region24
      $region23: #{cnn_d_forward.1} parent=11 // pred_region
        _
      $region24: #{cnn_d_forward.1} parent=11 // pred_fallthru
        _
      // Predicated region
      $region25: #{cnn_d_forward.1} parent=11 // pred_check
        %p171 = pneg %p121
      $region26: #{cnn_d_forward.1} parent=11 // pred_check_branch
        %173 = sbr.rel (%p171) target = $region28
      $region27: #{cnn_d_forward.1} parent=11 // pred_region
        _
      $region28: #{cnn_d_forward.1} parent=11 // pred_fallthru
        _
    $region12: #{cnn_d_forward.1} parent=5 // pred_fallthru
      _
    %p174 = scmp.lt.s32.totalorder %s11, 2
    // Predicated region
    $region29: #{cnn_d_forward.1} parent=5 // pred_check
      %p175 = pneg %p174
    $region30: #{cnn_d_forward.1} parent=5 // pred_check_branch
      %177 = sbr.rel (%p175) target = $region32
    $region31: #{cnn_d_forward.1} parent=5 // pred_region
      // Predicated region
      $region33: #{cnn_d_forward.1} parent=31 // pred_check
        %p178 = pneg %p31
      $region34: #{cnn_d_forward.1} parent=31 // pred_check_branch
        %180 = sbr.rel (%p178) target = $region36
      $region35: #{cnn_d_forward.1} parent=31 // pred_region
        %p181 = scmp.lt.s32.totalorder %s11, 1
        %s182 = scalar_select %p181, %s11, 1
        %s183 = smul.addr %s182, 18
        %s184 = smul.addr %s183, 4
        %s185 = scalar_lea.vmem %s0, %s184
      $region36: #{cnn_d_forward.1} parent=31 // pred_fallthru
        _
    $region32: #{cnn_d_forward.1} parent=5 // pred_fallthru
      _
    %p186 = scmp.le.s32.totalorder 1, %s11
    %p187 = scmp.lt.s32.totalorder %s11, 3
    %p188 = pnand %p186, %p187
    %p189 = pneg %p188
    // Predicated region
    $region37: #{cnn_d_forward.1} parent=5 // pred_check
      _
    $region38: #{cnn_d_forward.1} parent=5 // pred_check_branch
      %191 = sbr.rel (%p188) target = $region40
    $region39: #{cnn_d_forward.1} parent=5 // pred_region
      %s192 = ssub.s32 %s11, 1
      %p193 = scmp.lt.s32.totalorder %s16, 1
      %s194 = scalar_select %p193, %s16, 1
      %s195 = smul.addr %s194, 18
      %s196 = smul.addr %s195, 4
      %s197 = scalar_lea.vmem %s0, %s196
      %p198 = pneg %p37
      %p199 = pneg %p34
      %p200 = pneg %p58
      %p201 = pneg %p55
      %p202 = pneg %p79
      %p203 = pneg %p76
      %p204 = pneg %p100
      %p205 = pneg %p97
      %p206 = pneg %p121
      %p207 = pneg %p118
      %p208 = pneg %p147
      %p209 = pneg %p144
      %p210 = scmp.lt.s32.totalorder %s16, 1
      %s211 = scalar_select %p210, %s16, 1
      %s212 = smul.addr %s211, 8
      %s213 = scalar_lea.vmem %s5, %s212
      %p214 = scmp.lt.s32.totalorder %s16, 1
      %s215 = scalar_select %p214, %s16, 1
      %s216 = smul.addr %s215, 18
      %s217 = smul.addr %s216, 4
      %s218 = scalar_lea.vmem %s0, %s217
      %p219 = scmp.lt.s32.totalorder %s16, 1
      %s220 = scalar_select %p219, %s16, 1
      %s221 = smul.addr %s220, 8
      %s222 = scalar_lea.vmem %s5, %s221
      %v224 = vld [vmem:[%s218] sm:$0xf]
      %v225 = vld [vmem:[%s218 + $0x4] sm:$0xf]
      %v226 = vld [vmem:[%s218 + $0x8] sm:$0xf]
      %v227 = vld [vmem:[%s218 + $0xc] sm:$0xf]
      %v228 = vld [vmem:[%s218 + $0x10] sm:$0xf]
      %v229 = vld [vmem:[%s218 + $0x14] sm:$0xf]
      %v230 = vld [vmem:[%s218 + $0x18] sm:$0xf]
      %v231 = vld [vmem:[%s218 + $0x1c] sm:$0xf]
      %v232 = vld [vmem:[%s218 + $0x20] sm:$0xf]
      %v233 = vld [vmem:[%s218 + $0x24] sm:$0xf]
      %v234 = vld [vmem:[%s218 + $0x28] sm:$0xf]
      %v235 = vld [vmem:[%s218 + $0x2c] sm:$0xf]
      %v236 = vld [vmem:[%s218 + $0x30] sm:$0xf]
      %v237 = vld [vmem:[%s218 + $0x34] sm:$0xf]
      %v238 = vld [vmem:[%s218 + $0x38] sm:$0xf]
      %v239 = vld [vmem:[%s218 + $0x3c] sm:$0xf]
      %v240 = vld [vmem:[%s218 + $0x40] sm:$0xf]
      %v241 = vld [vmem:[%s218 + $0x44] sm:$0xf]
      %v242 = vld [vmem:[%s1] sm:$0xf]
      %v243 = vld [vmem:[%s1 + $0x4] sm:$0xf]
      %v244 = vld [vmem:[%s1 + $0x8] sm:$0xf]
      %v245 = vld [vmem:[%s1 + $0xc] sm:$0xf]
      %v246 = vld [vmem:[%s1 + $0x10] sm:$0xf]
      %v247 = vld [vmem:[%s1 + $0x14] sm:$0xf]
      %v266 = vunpack.c.l.b16 %v224
      %v267 = vunpack.c.l.b16 %v225
      %v268 = vunpack.c.l.b16 %v226
      %v269 = vunpack.c.l.b16 %v227
      %v270 = vunpack.c.l.b16 %v228
      %v271 = vunpack.c.l.b16 %v229
      %v272 = vunpack.c.l.b16 %v230
      %v273 = vunpack.c.l.b16 %v231
      %v274 = vunpack.c.l.b16 %v232
      %v275 = vunpack.c.l.b16 %v233
      %v276 = vunpack.c.l.b16 %v234
      %v277 = vunpack.c.l.b16 %v235
      %v278 = vunpack.c.l.b16 %v236
      %v279 = vunpack.c.l.b16 %v237
      %v280 = vunpack.c.l.b16 %v238
      %v281 = vunpack.c.l.b16 %v239
      %v282 = vunpack.c.l.b16 %v240
      %v283 = vunpack.c.l.b16 %v241
      %v284 = vpack.c.b16 %v267, %v266
      %v285 = vpack.c.b16 %v269, %v268
      %v286 = vpack.c.b16 %v271, %v270
      %v287 = vpack.c.b16 %v273, %v272
      %v288 = vpack.c.b16 %v275, %v274
      %v289 = vpack.c.b16 %v277, %v276
      %v290 = vpack.c.b16 %v279, %v278
      %v291 = vpack.c.b16 %v281, %v280
      %v292 = vpack.c.b16 %v283, %v282
      %v299 = vunpack.c.l.b16 %v242
      %v300 = vunpack.c.l.b16 %v243
      %v301 = vunpack.c.l.b16 %v244
      %v302 = vunpack.c.l.b16 %v245
      %v303 = vunpack.c.l.b16 %v246
      %v304 = vunpack.c.l.b16 %v247
      %v305 = vpack.c.b16 %v300, %v299
      %v306 = vpack.c.b16 %v302, %v301
      %v307 = vpack.c.b16 %v304, %v303
      %vm311 = vcmask 392192
      %v313 = vsel %vm311, %v284, 0
      %v316 = vsel %vm311, %v285, 0
      %v319 = vsel %vm311, %v286, 0
      %v322 = vsel %vm311, %v287, 0
      %v325 = vsel %vm311, %v288, 0
      %v328 = vsel %vm311, %v289, 0
      %v331 = vsel %vm311, %v290, 0
      %v334 = vsel %vm311, %v291, 0
      %v337 = vsel %vm311, %v292, 0
      %339 = vmatprep.subr.bf16.mxu0 0
      %340 = vmatpush1.bf16.msra.mxu0 %v305
      %341 = vmatprep.subr.bf16.mxu0 0
      %342 = vmatpush1.bf16.msra.mxu0 %v306
      %343 = vmatprep.subr.bf16.mxu0 0
      %344 = vmatpush1.bf16.msra.mxu0 %v307
      %345 = vmatprep.subr.bf16.mxu0 0
      %346 = vmatpush1.bf16.msra.mxu0 0
      %347 = vmatprep.subr.bf16.mxu0 0
      %348 = vmatpush1.bf16.msra.mxu0 0
      %349 = vmatprep.subr.bf16.mxu0 0
      %350 = vmatpush1.bf16.msra.mxu0 0
      %351 = vmatprep.subr.bf16.mxu0 0
      %352 = vmatpush1.bf16.msra.mxu0 0
      %353 = vmatprep.subr.bf16.mxu0 0
      %354 = vmatpush1.bf16.msra.mxu0 0
      %355 = vmatprep.subr.bf16.mxu0 0
      %356 = vmatpush1.bf16.msra.mxu0 0
      %357 = vmatprep.subr.bf16.mxu0 0
      %358 = vmatpush1.bf16.msra.mxu0 0
      %359 = vmatprep.subr.bf16.mxu0 0
      %360 = vmatpush1.bf16.msra.mxu0 0
      %361 = vmatprep.subr.bf16.mxu0 0
      %362 = vmatpush1.bf16.msra.mxu0 0
      %363 = vmatprep.subr.bf16.mxu0 0
      %364 = vmatpush1.bf16.msra.mxu0 0
      %365 = vmatprep.subr.bf16.mxu0 0
      %366 = vmatpush1.bf16.msra.mxu0 0
      %367 = vmatprep.subr.bf16.mxu0 0
      %368 = vmatpush1.bf16.msra.mxu0 0
      %369 = vmatprep.subr.bf16.mxu0 0
      %370 = vmatpush1.bf16.msra.mxu0 0
      %371 = vmatprep.mubr.bf16.mxu0 0
      %372 = vmatmul.mubr.bf16.gmra.mrb[0].mxu0 %v313
      %v373 = vpop.f32.mrb[0].mxu0
      %v374 = vadd.f32 0.0, %v373
      %v375 = vpop.f32.mrb[0].mxu0
      %v376 = vpop.f32.mrb[0].mxu0
      %v377 = vadd.f32 0.0, %v376
      %v378 = vpop.f32.mrb[0].mxu0
      %379 = vmatprep.mubr.bf16.mxu0 0
      %380 = vmatmul.mubr.bf16.gmra.mrb[0].mxu0 %v316
      %v381 = vpop.f32.mrb[0].mxu0
      %v382 = vadd.f32 0.0, %v381
      %v383 = vpop.f32.mrb[0].mxu0
      %v384 = vpop.f32.mrb[0].mxu0
      %v385 = vadd.f32 0.0, %v384
      %v386 = vpop.f32.mrb[0].mxu0
      %387 = vmatprep.mubr.bf16.mxu0 0
      %388 = vmatmul.mubr.bf16.gmra.mrb[0].mxu0 %v319
      %v389 = vpop.f32.mrb[0].mxu0
      %v390 = vadd.f32 0.0, %v389
      %v391 = vpop.f32.mrb[0].mxu0
      %v392 = vpop.f32.mrb[0].mxu0
      %v393 = vadd.f32 0.0, %v392
      %v394 = vpop.f32.mrb[0].mxu0
      %395 = vmatprep.mubr.bf16.mxu0 0
      %396 = vmatmul.mubr.bf16.gmra.mrb[0].mxu0 %v322
      %v397 = vpop.f32.mrb[0].mxu0
      %v398 = vadd.f32 0.0, %v397
      %v399 = vpop.f32.mrb[0].mxu0
      %v400 = vpop.f32.mrb[0].mxu0
      %v401 = vadd.f32 0.0, %v400
      %v402 = vpop.f32.mrb[0].mxu0
      %403 = vmatprep.mubr.bf16.mxu0 0
      %404 = vmatmul.mubr.bf16.gmra.mrb[0].mxu0 %v325
      %v405 = vpop.f32.mrb[0].mxu0
      %v406 = vadd.f32 0.0, %v405
      %v407 = vpop.f32.mrb[0].mxu0
      %v408 = vpop.f32.mrb[0].mxu0
      %v409 = vadd.f32 0.0, %v408
      %v410 = vpop.f32.mrb[0].mxu0
      %411 = vmatprep.mubr.bf16.mxu0 0
      %412 = vmatmul.mubr.bf16.gmra.mrb[0].mxu0 %v328
      %v413 = vpop.f32.mrb[0].mxu0
      %v414 = vadd.f32 0.0, %v413
      %v415 = vpop.f32.mrb[0].mxu0
      %v416 = vpop.f32.mrb[0].mxu0
      %v417 = vadd.f32 0.0, %v416
      %v418 = vpop.f32.mrb[0].mxu0
      %419 = vmatprep.mubr.bf16.mxu0 0
      %420 = vmatmul.mubr.bf16.gmra.mrb[0].mxu0 %v331
      %v421 = vpop.f32.mrb[0].mxu0
      %v422 = vadd.f32 0.0, %v421
      %v423 = vpop.f32.mrb[0].mxu0
      %v424 = vpop.f32.mrb[0].mxu0
      %v425 = vadd.f32 0.0, %v424
      %v426 = vpop.f32.mrb[0].mxu0
      %427 = vmatprep.mubr.bf16.mxu0 0
      %428 = vmatmul.mubr.bf16.gmra.mrb[0].mxu0 %v334
      %v429 = vpop.f32.mrb[0].mxu0
      %v430 = vadd.f32 0.0, %v429
      %v431 = vpop.f32.mrb[0].mxu0
      %v432 = vpop.f32.mrb[0].mxu0
      %v433 = vadd.f32 0.0, %v432
      %v434 = vpop.f32.mrb[0].mxu0
      %435 = vmatprep.mubr.bf16.mxu0 0
      %436 = vmatmul.mubr.bf16.gmra.mrb[0].mxu0 %v337
      %v437 = vpop.f32.mrb[0].mxu0
      %v438 = vadd.f32 0.0, %v437
      %v439 = vpop.f32.mrb[0].mxu0
      %v440 = vpop.f32.mrb[0].mxu0
      %v441 = vadd.f32 0.0, %v440
      %v442 = vpop.f32.mrb[0].mxu0
      %443 = vdwg.mxu0
      %vm444 = vcmp.ge.f32.partialorder %v374, 0.0
      %vm445 = vcmp.ge.f32.partialorder %v377, 0.0
      %vm446 = vcmp.ge.f32.partialorder %v382, 0.0
      %vm447 = vcmp.ge.f32.partialorder %v385, 0.0
      %vm448 = vcmp.ge.f32.partialorder %v390, 0.0
      %vm449 = vcmp.ge.f32.partialorder %v393, 0.0
      %vm450 = vcmp.ge.f32.partialorder %v398, 0.0
      %vm451 = vcmp.ge.f32.partialorder %v401, 0.0
      %vm452 = vcmp.ge.f32.partialorder %v406, 0.0
      %vm453 = vcmp.ge.f32.partialorder %v409, 0.0
      %vm454 = vcmp.ge.f32.partialorder %v414, 0.0
      %vm455 = vcmp.ge.f32.partialorder %v417, 0.0
      %vm456 = vcmp.ge.f32.partialorder %v422, 0.0
      %vm457 = vcmp.ge.f32.partialorder %v425, 0.0
      %vm458 = vcmp.ge.f32.partialorder %v430, 0.0
      %vm459 = vcmp.ge.f32.partialorder %v433, 0.0
      %vm460 = vcmp.ge.f32.partialorder %v438, 0.0
      %vm461 = vcmp.ge.f32.partialorder %v441, 0.0
      %v462 = vmul.f32 %v374, 0.2
      %v463 = vmul.f32 %v377, 0.2
      %v464 = vmul.f32 %v382, 0.2
      %v465 = vmul.f32 %v385, 0.2
      %v466 = vmul.f32 %v390, 0.2
      %v467 = vmul.f32 %v393, 0.2
      %v468 = vmul.f32 %v398, 0.2
      %v469 = vmul.f32 %v401, 0.2
      %v470 = vmul.f32 %v406, 0.2
      %v471 = vmul.f32 %v409, 0.2
      %v472 = vmul.f32 %v414, 0.2
      %v473 = vmul.f32 %v417, 0.2
      %v474 = vmul.f32 %v422, 0.2
      %v475 = vmul.f32 %v425, 0.2
      %v476 = vmul.f32 %v430, 0.2
      %v477 = vmul.f32 %v433, 0.2
      %v478 = vmul.f32 %v438, 0.2
      %v479 = vmul.f32 %v441, 0.2
      %v480 = vsel %vm444, %v374, %v462
      %v481 = vsel %vm445, %v377, %v463
      %v482 = vsel %vm446, %v382, %v464
      %v483 = vsel %vm447, %v385, %v465
      %v484 = vsel %vm448, %v390, %v466
      %v485 = vsel %vm449, %v393, %v467
      %v486 = vsel %vm450, %v398, %v468
      %v487 = vsel %vm451, %v401, %v469
      %v488 = vsel %vm452, %v406, %v470
      %v489 = vsel %vm453, %v409, %v471
      %v490 = vsel %vm454, %v414, %v472
      %v491 = vsel %vm455, %v417, %v473
      %v492 = vsel %vm456, %v422, %v474
      %v493 = vsel %vm457, %v425, %v475
      %v494 = vsel %vm458, %v430, %v476
      %v495 = vsel %vm459, %v433, %v477
      %v496 = vsel %vm460, %v438, %v478
      %v497 = vsel %vm461, %v441, %v479
      %v498 = vld [vmem:[%s2] sm:$0xff]
      %v499 = vld [vmem:[%s2 + $0x8] sm:$0xff]
      %v500 = vld [vmem:[%s2 + $0x10] sm:$0xff]
      %v501 = vld [vmem:[%s2 + $0x18] sm:$0xff]
      %v502 = vld [vmem:[%s2 + $0x20] sm:$0xff]
      %v503 = vld [vmem:[%s2 + $0x28] sm:$0xff]
      %v504 = vld [vmem:[%s2 + $0x30] sm:$0xff]
      %v505 = vld [vmem:[%s2 + $0x38] sm:$0xff]
      %v506 = vld [vmem:[%s2 + $0x40] sm:$0xff]
      %v507 = vld [vmem:[%s2 + $0x48] sm:$0xff]
      %v508 = vld [vmem:[%s2 + $0x50] sm:$0xff]
      %v509 = vld [vmem:[%s2 + $0x58] sm:$0xff]
      %v510 = vld [vmem:[%s2 + $0x60] sm:$0xff]
      %v511 = vld [vmem:[%s2 + $0x68] sm:$0xff]
      %v512 = vld [vmem:[%s2 + $0x70] sm:$0xff]
      %v513 = vld [vmem:[%s2 + $0x78] sm:$0xff]
      %v514 = vld [vmem:[%s2 + $0x80] sm:$0xff]
      %v515 = vld [vmem:[%s2 + $0x88] sm:$0xff]
      %v516 = vld [vmem:[%s2 + $0x90] sm:$0xff]
      %v517 = vld [vmem:[%s2 + $0x98] sm:$0xff]
      %v518 = vld [vmem:[%s2 + $0xa0] sm:$0xff]
      %v519 = vld [vmem:[%s2 + $0xa8] sm:$0xff]
      %v520 = vld [vmem:[%s2 + $0xb0] sm:$0xff]
      %v521 = vld [vmem:[%s2 + $0xb8] sm:$0xff]
      %v522 = vld [vmem:[%s2 + $0xc0] sm:$0xff]
      %v523 = vld [vmem:[%s2 + $0xc8] sm:$0xff]
      %v524 = vld [vmem:[%s2 + $0xd0] sm:$0xff]
      %v525 = vld [vmem:[%s2 + $0xd8] sm:$0xff]
      %v526 = vld [vmem:[%s2 + $0xe0] sm:$0xff]
      %v527 = vld [vmem:[%s2 + $0xe8] sm:$0xff]
      %v528 = vld [vmem:[%s2 + $0xf0] sm:$0xff]
      %v529 = vld [vmem:[%s2 + $0xf8] sm:$0xff]
      %v530 = vld [vmem:[%s2 + $0x100] sm:$0xff]
      %v531 = vld [vmem:[%s2 + $0x108] sm:$0xff]
      %v532 = vld [vmem:[%s2 + $0x110] sm:$0xff]
      %v533 = vld [vmem:[%s2 + $0x118] sm:$0xff]
      %v534 = vld [vmem:[%s2 + $0x120] sm:$0xff]
      %v535 = vld [vmem:[%s2 + $0x128] sm:$0xff]
      %v536 = vld [vmem:[%s2 + $0x130] sm:$0xff]
      %v537 = vld [vmem:[%s2 + $0x138] sm:$0xff]
      %v538 = vld [vmem:[%s2 + $0x140] sm:$0xff]
      %v539 = vld [vmem:[%s2 + $0x148] sm:$0xff]
      %v540 = vld [vmem:[%s2 + $0x150] sm:$0xff]
      %v541 = vld [vmem:[%s2 + $0x158] sm:$0xff]
      %v542 = vld [vmem:[%s2 + $0x160] sm:$0xff]
      %v543 = vld [vmem:[%s2 + $0x168] sm:$0xff]
      %v544 = vld [vmem:[%s2 + $0x170] sm:$0xff]
      %v545 = vld [vmem:[%s2 + $0x178] sm:$0xff]
      %v546 = vld [vmem:[%s2 + $0x180] sm:$0xff]
      %v547 = vld [vmem:[%s2 + $0x188] sm:$0xff]
      %v548 = vld [vmem:[%s2 + $0x190] sm:$0xff]
      %v549 = vld [vmem:[%s2 + $0x198] sm:$0xff]
      %v550 = vld [vmem:[%s2 + $0x1a0] sm:$0xff]
      %v551 = vld [vmem:[%s2 + $0x1a8] sm:$0xff]
      %v552 = vld [vmem:[%s2 + $0x1b0] sm:$0xff]
      %v553 = vld [vmem:[%s2 + $0x1b8] sm:$0xff]
      %v554 = vld [vmem:[%s2 + $0x1c0] sm:$0xff]
      %v555 = vld [vmem:[%s2 + $0x1c8] sm:$0xff]
      %v556 = vld [vmem:[%s2 + $0x1d0] sm:$0xff]
      %v557 = vld [vmem:[%s2 + $0x1d8] sm:$0xff]
      %v558 = vld [vmem:[%s2 + $0x1e0] sm:$0xff]
      %v559 = vld [vmem:[%s2 + $0x1e8] sm:$0xff]
      %v560 = vld [vmem:[%s2 + $0x1f0] sm:$0xff]
      %v561 = vld [vmem:[%s2 + $0x1f8] sm:$0xff]
      %v562 = vld [vmem:[%s2 + $0x200] sm:$0xff]
      %v563 = vld [vmem:[%s2 + $0x208] sm:$0xff]
      %v564 = vld [vmem:[%s2 + $0x210] sm:$0xff]
      %v565 = vld [vmem:[%s2 + $0x218] sm:$0xff]
      %v566 = vld [vmem:[%s2 + $0x220] sm:$0xff]
      %v567 = vld [vmem:[%s2 + $0x228] sm:$0xff]
      %v568 = vld [vmem:[%s2 + $0x230] sm:$0xff]
      %v569 = vld [vmem:[%s2 + $0x238] sm:$0xff]
      %v570 = vld [vmem:[%s2 + $0x240] sm:$0xff]
      %v571 = vld [vmem:[%s2 + $0x248] sm:$0xff]
      %v572 = vld [vmem:[%s2 + $0x250] sm:$0xff]
      %v573 = vld [vmem:[%s2 + $0x258] sm:$0xff]
      %v574 = vld [vmem:[%s2 + $0x260] sm:$0xff]
      %v575 = vld [vmem:[%s2 + $0x268] sm:$0xff]
      %v576 = vld [vmem:[%s2 + $0x270] sm:$0xff]
      %v577 = vld [vmem:[%s2 + $0x278] sm:$0xff]
      %v578 = vpack.c.bf16 %v481, %v480
      %v579 = vpack.c.bf16 %v483, %v482
      %v580 = vpack.c.bf16 %v485, %v484
      %v581 = vpack.c.bf16 %v487, %v486
      %v582 = vpack.c.bf16 %v489, %v488
      %v583 = vpack.c.bf16 %v491, %v490
      %v584 = vpack.c.bf16 %v493, %v492
      %v585 = vpack.c.bf16 %v495, %v494
      %v586 = vpack.c.bf16 %v497, %v496
      %v667 = vunpack.c.l.b16 %v498
      %v668 = vunpack.c.h.b16 %v498
      %v669 = vunpack.c.l.b16 %v499
      %v670 = vunpack.c.h.b16 %v499
      %v671 = vunpack.c.l.b16 %v500
      %v672 = vunpack.c.h.b16 %v500
      %v673 = vunpack.c.l.b16 %v501
      %v674 = vunpack.c.h.b16 %v501
      %v675 = vunpack.c.l.b16 %v502
      %v676 = vunpack.c.h.b16 %v502
      %v677 = vunpack.c.l.b16 %v503
      %v678 = vunpack.c.h.b16 %v503
      %v679 = vunpack.c.l.b16 %v504
      %v680 = vunpack.c.h.b16 %v504
      %v681 = vunpack.c.l.b16 %v505
      %v682 = vunpack.c.h.b16 %v505
      %v683 = vunpack.c.l.b16 %v506
      %v684 = vunpack.c.h.b16 %v506
      %v685 = vunpack.c.l.b16 %v507
      %v686 = vunpack.c.h.b16 %v507
      %v687 = vunpack.c.l.b16 %v508
      %v688 = vunpack.c.h.b16 %v508
      %v689 = vunpack.c.l.b16 %v509
      %v690 = vunpack.c.h.b16 %v509
      %v691 = vunpack.c.l.b16 %v510
      %v692 = vunpack.c.h.b16 %v510
      %v693 = vunpack.c.l.b16 %v511
      %v694 = vunpack.c.h.b16 %v511
      %v695 = vunpack.c.l.b16 %v512
      %v696 = vunpack.c.h.b16 %v512
      %v697 = vunpack.c.l.b16 %v513
      %v698 = vunpack.c.h.b16 %v513
      %v699 = vunpack.c.l.b16 %v514
      %v700 = vunpack.c.h.b16 %v514
      %v701 = vunpack.c.l.b16 %v515
      %v702 = vunpack.c.h.b16 %v515
      %v703 = vunpack.c.l.b16 %v516
      %v704 = vunpack.c.h.b16 %v516
      %v705 = vunpack.c.l.b16 %v517
      %v706 = vunpack.c.h.b16 %v517
      %v707 = vunpack.c.l.b16 %v518
      %v708 = vunpack.c.h.b16 %v518
      %v709 = vunpack.c.l.b16 %v519
      %v710 = vunpack.c.h.b16 %v519
      %v711 = vunpack.c.l.b16 %v520
      %v712 = vunpack.c.h.b16 %v520
      %v713 = vunpack.c.l.b16 %v521
      %v714 = vunpack.c.h.b16 %v521
      %v715 = vunpack.c.l.b16 %v522
      %v716 = vunpack.c.h.b16 %v522
      %v717 = vunpack.c.l.b16 %v523
      %v718 = vunpack.c.h.b16 %v523
      %v719 = vunpack.c.l.b16 %v524
      %v720 = vunpack.c.h.b16 %v524
      %v721 = vunpack.c.l.b16 %v525
      %v722 = vunpack.c.h.b16 %v525
      %v723 = vunpack.c.l.b16 %v526
      %v724 = vunpack.c.h.b16 %v526
      %v725 = vunpack.c.l.b16 %v527
      %v726 = vunpack.c.h.b16 %v527
      %v727 = vunpack.c.l.b16 %v528
      %v728 = vunpack.c.h.b16 %v528
      %v729 = vunpack.c.l.b16 %v529
      %v730 = vunpack.c.h.b16 %v529
      %v731 = vunpack.c.l.b16 %v530
      %v732 = vunpack.c.h.b16 %v530
      %v733 = vunpack.c.l.b16 %v531
      %v734 = vunpack.c.h.b16 %v531
      %v735 = vunpack.c.l.b16 %v532
      %v736 = vunpack.c.h.b16 %v532
      %v737 = vunpack.c.l.b16 %v533
      %v738 = vunpack.c.h.b16 %v533
      %v739 = vunpack.c.l.b16 %v534
      %v740 = vunpack.c.h.b16 %v534
      %v741 = vunpack.c.l.b16 %v535
      %v742 = vunpack.c.h.b16 %v535
      %v743 = vunpack.c.l.b16 %v536
      %v744 = vunpack.c.h.b16 %v536
      %v745 = vunpack.c.l.b16 %v537
      %v746 = vunpack.c.h.b16 %v537
      %v747 = vunpack.c.l.b16 %v538
      %v748 = vunpack.c.h.b16 %v538
      %v749 = vunpack.c.l.b16 %v539
      %v750 = vunpack.c.h.b16 %v539
      %v751 = vunpack.c.l.b16 %v540
      %v752 = vunpack.c.h.b16 %v540
      %v753 = vunpack.c.l.b16 %v541
      %v754 = vunpack.c.h.b16 %v541
      %v755 = vunpack.c.l.b16 %v542
      %v756 = vunpack.c.h.b16 %v542
      %v757 = vunpack.c.l.b16 %v543
      %v758 = vunpack.c.h.b16 %v543
      %v759 = vunpack.c.l.b16 %v544
      %v760 = vunpack.c.h.b16 %v544
      %v761 = vunpack.c.l.b16 %v545
      %v762 = vunpack.c.h.b16 %v545
      %v763 = vunpack.c.l.b16 %v546
      %v764 = vunpack.c.h.b16 %v546
      %v765 = vunpack.c.l.b16 %v547
      %v766 = vunpack.c.h.b16 %v547
      %v767 = vunpack.c.l.b16 %v548
      %v768 = vunpack.c.h.b16 %v548
      %v769 = vunpack.c.l.b16 %v549
      %v770 = vunpack.c.h.b16 %v549
      %v771 = vunpack.c.l.b16 %v550
      %v772 = vunpack.c.h.b16 %v550
      %v773 = vunpack.c.l.b16 %v551
      %v774 = vunpack.c.h.b16 %v551
      %v775 = vunpack.c.l.b16 %v552
      %v776 = vunpack.c.h.b16 %v552
      %v777 = vunpack.c.l.b16 %v553
      %v778 = vunpack.c.h.b16 %v553
      %v779 = vunpack.c.l.b16 %v554
      %v780 = vunpack.c.h.b16 %v554
      %v781 = vunpack.c.l.b16 %v555
      %v782 = vunpack.c.h.b16 %v555
      %v783 = vunpack.c.l.b16 %v556
      %v784 = vunpack.c.h.b16 %v556
      %v785 = vunpack.c.l.b16 %v557
      %v786 = vunpack.c.h.b16 %v557
      %v787 = vunpack.c.l.b16 %v558
      %v788 = vunpack.c.h.b16 %v558
      %v789 = vunpack.c.l.b16 %v559
      %v790 = vunpack.c.h.b16 %v559
      %v791 = vunpack.c.l.b16 %v560
      %v792 = vunpack.c.h.b16 %v560
      %v793 = vunpack.c.l.b16 %v561
      %v794 = vunpack.c.h.b16 %v561
      %v795 = vunpack.c.l.b16 %v562
      %v796 = vunpack.c.h.b16 %v562
      %v797 = vunpack.c.l.b16 %v563
      %v798 = vunpack.c.h.b16 %v563
      %v799 = vunpack.c.l.b16 %v564
      %v800 = vunpack.c.h.b16 %v564
      %v801 = vunpack.c.l.b16 %v565
      %v802 = vunpack.c.h.b16 %v565
      %v803 = vunpack.c.l.b16 %v566
      %v804 = vunpack.c.h.b16 %v566
      %v805 = vunpack.c.l.b16 %v567
      %v806 = vunpack.c.h.b16 %v567
      %v807 = vunpack.c.l.b16 %v568
      %v808 = vunpack.c.h.b16 %v568
      %v809 = vunpack.c.l.b16 %v569
      %v810 = vunpack.c.h.b16 %v569
      %v811 = vunpack.c.l.b16 %v570
      %v812 = vunpack.c.h.b16 %v570
      %v813 = vunpack.c.l.b16 %v571
      %v814 = vunpack.c.h.b16 %v571
      %v815 = vunpack.c.l.b16 %v572
      %v816 = vunpack.c.h.b16 %v572
      %v817 = vunpack.c.l.b16 %v573
      %v818 = vunpack.c.h.b16 %v573
      %v819 = vunpack.c.l.b16 %v574
      %v820 = vunpack.c.h.b16 %v574
      %v821 = vunpack.c.l.b16 %v575
      %v822 = vunpack.c.h.b16 %v575
      %v823 = vunpack.c.l.b16 %v576
      %v824 = vunpack.c.h.b16 %v576
      %v825 = vunpack.c.l.b16 %v577
      %v826 = vunpack.c.h.b16 %v577
      %v827 = vpack.c.b16 %v669, %v667
      %v828 = vpack.c.b16 %v670, %v668
      %v829 = vpack.c.b16 %v673, %v671
      %v830 = vpack.c.b16 %v674, %v672
      %v831 = vpack.c.b16 %v677, %v675
      %v832 = vpack.c.b16 %v678, %v676
      %v833 = vpack.c.b16 %v681, %v679
      %v834 = vpack.c.b16 %v682, %v680
      %v835 = vpack.c.b16 %v685, %v683
      %v836 = vpack.c.b16 %v686, %v684
      %v837 = vpack.c.b16 %v689, %v687
      %v838 = vpack.c.b16 %v690, %v688
      %v839 = vpack.c.b16 %v693, %v691
      %v840 = vpack.c.b16 %v694, %v692
      %v841 = vpack.c.b16 %v697, %v695
      %v842 = vpack.c.b16 %v698, %v696
      %v843 = vpack.c.b16 %v701, %v699
      %v844 = vpack.c.b16 %v702, %v700
      %v845 = vpack.c.b16 %v705, %v703
      %v846 = vpack.c.b16 %v706, %v704
      %v847 = vpack.c.b16 %v709, %v707
      %v848 = vpack.c.b16 %v710, %v708
      %v849 = vpack.c.b16 %v713, %v711
      %v850 = vpack.c.b16 %v714, %v712
      %v851 = vpack.c.b16 %v717, %v715
      %v852 = vpack.c.b16 %v718, %v716
      %v853 = vpack.c.b16 %v721, %v719
      %v854 = vpack.c.b16 %v722, %v720
      %v855 = vpack.c.b16 %v725, %v723
      %v856 = vpack.c.b16 %v726, %v724
      %v857 = vpack.c.b16 %v729, %v727
      %v858 = vpack.c.b16 %v730, %v728
      %v859 = vpack.c.b16 %v733, %v731
      %v860 = vpack.c.b16 %v734, %v732
      %v861 = vpack.c.b16 %v737, %v735
      %v862 = vpack.c.b16 %v738, %v736
      %v863 = vpack.c.b16 %v741, %v739
      %v864 = vpack.c.b16 %v742, %v740
      %v865 = vpack.c.b16 %v745, %v743
      %v866 = vpack.c.b16 %v746, %v744
      %v867 = vpack.c.b16 %v749, %v747
      %v868 = vpack.c.b16 %v750, %v748
      %v869 = vpack.c.b16 %v753, %v751
      %v870 = vpack.c.b16 %v754, %v752
      %v871 = vpack.c.b16 %v757, %v755
      %v872 = vpack.c.b16 %v758, %v756
      %v873 = vpack.c.b16 %v761, %v759
      %v874 = vpack.c.b16 %v762, %v760
      %v875 = vpack.c.b16 %v765, %v763
      %v876 = vpack.c.b16 %v766, %v764
      %v877 = vpack.c.b16 %v769, %v767
      %v878 = vpack.c.b16 %v770, %v768
      %v879 = vpack.c.b16 %v773, %v771
      %v880 = vpack.c.b16 %v774, %v772
      %v881 = vpack.c.b16 %v777, %v775
      %v882 = vpack.c.b16 %v778, %v776
      %v883 = vpack.c.b16 %v781, %v779
      %v884 = vpack.c.b16 %v782, %v780
      %v885 = vpack.c.b16 %v785, %v783
      %v886 = vpack.c.b16 %v786, %v784
      %v887 = vpack.c.b16 %v789, %v787
      %v888 = vpack.c.b16 %v790, %v788
      %v889 = vpack.c.b16 %v793, %v791
      %v890 = vpack.c.b16 %v794, %v792
      %v891 = vpack.c.b16 %v797, %v795
      %v892 = vpack.c.b16 %v798, %v796
      %v893 = vpack.c.b16 %v801, %v799
      %v894 = vpack.c.b16 %v802, %v800
      %v895 = vpack.c.b16 %v805, %v803
      %v896 = vpack.c.b16 %v806, %v804
      %v897 = vpack.c.b16 %v809, %v807
      %v898 = vpack.c.b16 %v810, %v808
      %v899 = vpack.c.b16 %v813, %v811
      %v900 = vpack.c.b16 %v814, %v812
      %v901 = vpack.c.b16 %v817, %v815
      %v902 = vpack.c.b16 %v818, %v816
      %v903 = vpack.c.b16 %v821, %v819
      %v904 = vpack.c.b16 %v822, %v820
      %v905 = vpack.c.b16 %v825, %v823
      %v906 = vpack.c.b16 %v826, %v824
      %vm947 = vcmask 130048
      %v949 = vsel %vm947, %v828, 0
      %v952 = vsel %vm947, %v830, 0
      %v955 = vsel %vm947, %v832, 0
      %v958 = vsel %vm947, %v834, 0
      %v961 = vsel %vm947, %v836, 0
      %v964 = vsel %vm947, %v838, 0
      %v967 = vsel %vm947, %v840, 0
      %v970 = vsel %vm947, %v842, 0
      %v973 = vsel %vm947, %v844, 0
      %v976 = vsel %vm947, %v846, 0
      %v979 = vsel %vm947, %v848, 0
      %v982 = vsel %vm947, %v850, 0
      %v985 = vsel %vm947, %v852, 0
      %v988 = vsel %vm947, %v854, 0
      %v991 = vsel %vm947, %v856, 0
      %v994 = vsel %vm947, %v858, 0
      %v997 = vsel %vm947, %v860, 0
      %v1000 = vsel %vm947, %v862, 0
      %v1003 = vsel %vm947, %v864, 0
      %v1006 = vsel %vm947, %v866, 0
      %v1009 = vsel %vm947, %v868, 0
      %v1012 = vsel %vm947, %v870, 0
      %v1015 = vsel %vm947, %v872, 0
      %v1018 = vsel %vm947, %v874, 0
      %v1021 = vsel %vm947, %v876, 0
      %v1024 = vsel %vm947, %v878, 0
      %v1027 = vsel %vm947, %v880, 0
      %v1030 = vsel %vm947, %v882, 0
      %v1033 = vsel %vm947, %v884, 0
      %v1036 = vsel %vm947, %v886, 0
      %v1039 = vsel %vm947, %v888, 0
      %v1042 = vsel %vm947, %v890, 0
      %v1045 = vsel %vm947, %v892, 0
      %v1048 = vsel %vm947, %v894, 0
      %v1051 = vsel %vm947, %v896, 0
      %v1054 = vsel %vm947, %v898, 0
      %v1057 = vsel %vm947, %v900, 0
      %v1060 = vsel %vm947, %v902, 0
      %v1063 = vsel %vm947, %v904, 0
      %v1066 = vsel %vm947, %v906, 0
      %1068 = vmatprep.subr.bf16.mxu0 0
      %1069 = vmatpush1.bf16.msra.mxu0 %v578
      %1070 = vmatprep.subr.bf16.mxu0 0
      %1071 = vmatpush1.bf16.msra.mxu0 %v579
      %1072 = vmatprep.subr.bf16.mxu0 0
      %1073 = vmatpush1.bf16.msra.mxu0 %v580
      %1074 = vmatprep.subr.bf16.mxu0 0
      %1075 = vmatpush1.bf16.msra.mxu0 %v581
      %1076 = vmatprep.subr.bf16.mxu0 0
      %1077 = vmatpush1.bf16.msra.mxu0 %v582
      %1078 = vmatprep.subr.bf16.mxu0 0
      %1079 = vmatpush1.bf16.msra.mxu0 %v583
      %1080 = vmatprep.subr.bf16.mxu0 0
      %1081 = vmatpush1.bf16.msra.mxu0 %v584
      %1082 = vmatprep.subr.bf16.mxu0 0
      %1083 = vmatpush1.bf16.msra.mxu0 %v585
      %1084 = vmatprep.subr.bf16.mxu0 0
      %1085 = vmatpush1.bf16.msra.mxu0 %v586
      %1086 = vmatprep.subr.bf16.mxu0 0
      %1087 = vmatpush1.bf16.msra.mxu0 0
      %1088 = vmatprep.subr.bf16.mxu0 0
      %1089 = vmatpush1.bf16.msra.mxu0 0
      %1090 = vmatprep.subr.bf16.mxu0 0
      %1091 = vmatpush1.bf16.msra.mxu0 0
      %1092 = vmatprep.subr.bf16.mxu0 0
      %1093 = vmatpush1.bf16.msra.mxu0 0
      %1094 = vmatprep.subr.bf16.mxu0 0
      %1095 = vmatpush1.bf16.msra.mxu0 0
      %1096 = vmatprep.subr.bf16.mxu0 0
      %1097 = vmatpush1.bf16.msra.mxu0 0
      %1098 = vmatprep.subr.bf16.mxu0 0
      %1099 = vmatpush1.bf16.msra.mxu0 0
      %1100 = vmatprep.mubr.bf16.mxu0 %v949
      %1101 = vmatmul.mubr.bf16.gmra.mrb[0].mxu0 %v827
      %v1102 = vpop.f32.mrb[0].mxu0
      %v1103 = vadd.f32 0.0, %v1102
      %v1104 = vpop.f32.mrb[0].mxu0
      %v1105 = vpop.f32.mrb[0].mxu0
      %v1106 = vadd.f32 0.0, %v1105
      %v1107 = vpop.f32.mrb[0].mxu0
      %1108 = vmatprep.mubr.bf16.mxu0 %v952
      %1109 = vmatmul.mubr.bf16.gmra.mrb[0].mxu0 %v829
      %v1110 = vpop.f32.mrb[0].mxu0
      %v1111 = vadd.f32 0.0, %v1110
      %v1112 = vpop.f32.mrb[0].mxu0
      %v1113 = vpop.f32.mrb[0].mxu0
      %v1114 = vadd.f32 0.0, %v1113
      %v1115 = vpop.f32.mrb[0].mxu0
      %1116 = vmatprep.mubr.bf16.mxu0 %v955
      %1117 = vmatmul.mubr.bf16.gmra.mrb[0].mxu0 %v831
      %v1118 = vpop.f32.mrb[0].mxu0
      %v1119 = vadd.f32 0.0, %v1118
      %v1120 = vpop.f32.mrb[0].mxu0
      %v1121 = vpop.f32.mrb[0].mxu0
      %v1122 = vadd.f32 0.0, %v1121
      %v1123 = vpop.f32.mrb[0].mxu0
      %1124 = vmatprep.mubr.bf16.mxu0 %v958
      %1125 = vmatmul.mubr.bf16.gmra.mrb[0].mxu0 %v833
      %v1126 = vpop.f32.mrb[0].mxu0
      %v1127 = vadd.f32 0.0, %v1126
      %v1128 = vpop.f32.mrb[0].mxu0
      %v1129 = vpop.f32.mrb[0].mxu0
      %v1130 = vadd.f32 0.0, %v1129
      %v1131 = vpop.f32.mrb[0].mxu0
      %1132 = vmatprep.mubr.bf16.mxu0 %v961
      %1133 = vmatmul.mubr.bf16.gmra.mrb[0].mxu0 %v835
      %v1134 = vpop.f32.mrb[0].mxu0
      %v1135 = vadd.f32 0.0, %v1134
      %v1136 = vpop.f32.mrb[0].mxu0
      %v1137 = vpop.f32.mrb[0].mxu0
      %v1138 = vadd.f32 0.0, %v1137
      %v1139 = vpop.f32.mrb[0].mxu0
      %1140 = vmatprep.mubr.bf16.mxu0 %v964
      %1141 = vmatmul.mubr.bf16.gmra.mrb[0].mxu0 %v837
      %v1142 = vpop.f32.mrb[0].mxu0
      %v1143 = vadd.f32 0.0, %v1142
      %v1144 = vpop.f32.mrb[0].mxu0
      %v1145 = vpop.f32.mrb[0].mxu0
      %v1146 = vadd.f32 0.0, %v1145
      %v1147 = vpop.f32.mrb[0].mxu0
      %1148 = vmatprep.mubr.bf16.mxu0 %v967
      %1149 = vmatmul.mubr.bf16.gmra.mrb[0].mxu0 %v839
      %v1150 = vpop.f32.mrb[0].mxu0
      %v1151 = vadd.f32 0.0, %v1150
      %v1152 = vpop.f32.mrb[0].mxu0
      %v1153 = vpop.f32.mrb[0].mxu0
      %v1154 = vadd.f32 0.0, %v1153
      %v1155 = vpop.f32.mrb[0].mxu0
      %1156 = vmatprep.mubr.bf16.mxu0 %v970
      %1157 = vmatmul.mubr.bf16.gmra.mrb[0].mxu0 %v841
      %v1158 = vpop.f32.mrb[0].mxu0
      %v1159 = vadd.f32 0.0, %v1158
      %v1160 = vpop.f32.mrb[0].mxu0
      %v1161 = vpop.f32.mrb[0].mxu0
      %v1162 = vadd.f32 0.0, %v1161
      %v1163 = vpop.f32.mrb[0].mxu0
      %1164 = vmatprep.mubr.bf16.mxu0 %v973
      %1165 = vmatmul.mubr.bf16.gmra.mrb[0].mxu0 %v843
      %v1166 = vpop.f32.mrb[0].mxu0
      %v1167 = vadd.f32 0.0, %v1166
      %v1168 = vpop.f32.mrb[0].mxu0
      %v1169 = vpop.f32.mrb[0].mxu0
      %v1170 = vadd.f32 0.0, %v1169
      %v1171 = vpop.f32.mrb[0].mxu0
      %1172 = vmatprep.mubr.bf16.mxu0 %v976
      %1173 = vmatmul.mubr.bf16.gmra.mrb[0].mxu0 %v845
      %v1174 = vpop.f32.mrb[0].mxu0
      %v1175 = vadd.f32 0.0, %v1174
      %v1176 = vpop.f32.mrb[0].mxu0
      %v1177 = vpop.f32.mrb[0].mxu0
      %v1178 = vadd.f32 0.0, %v1177
      %v1179 = vpop.f32.mrb[0].mxu0
      %1180 = vmatprep.mubr.bf16.mxu0 %v979
      %1181 = vmatmul.mubr.bf16.gmra.mrb[0].mxu0 %v847
      %v1182 = vpop.f32.mrb[0].mxu0
      %v1183 = vadd.f32 0.0, %v1182
      %v1184 = vpop.f32.mrb[0].mxu0
      %v1185 = vpop.f32.mrb[0].mxu0
      %v1186 = vadd.f32 0.0, %v1185
      %v1187 = vpop.f32.mrb[0].mxu0
      %1188 = vmatprep.mubr.bf16.mxu0 %v982
      %1189 = vmatmul.mubr.bf16.gmra.mrb[0].mxu0 %v849
      %v1190 = vpop.f32.mrb[0].mxu0
      %v1191 = vadd.f32 0.0, %v1190
      %v1192 = vpop.f32.mrb[0].mxu0
      %v1193 = vpop.f32.mrb[0].mxu0
      %v1194 = vadd.f32 0.0, %v1193
      %v1195 = vpop.f32.mrb[0].mxu0
      %1196 = vmatprep.mubr.bf16.mxu0 %v985
      %1197 = vmatmul.mubr.bf16.gmra.mrb[0].mxu0 %v851
      %v1198 = vpop.f32.mrb[0].mxu0
      %v1199 = vadd.f32 0.0, %v1198
      %v1200 = vpop.f32.mrb[0].mxu0
      %v1201 = vpop.f32.mrb[0].mxu0
      %v1202 = vadd.f32 0.0, %v1201
      %v1203 = vpop.f32.mrb[0].mxu0
      %1204 = vmatprep.mubr.bf16.mxu0 %v988
      %1205 = vmatmul.mubr.bf16.gmra.mrb[0].mxu0 %v853
      %v1206 = vpop.f32.mrb[0].mxu0
      %v1207 = vadd.f32 0.0, %v1206
      %v1208 = vpop.f32.mrb[0].mxu0
      %v1209 = vpop.f32.mrb[0].mxu0
      %v1210 = vadd.f32 0.0, %v1209
      %v1211 = vpop.f32.mrb[0].mxu0
      %1212 = vmatprep.mubr.bf16.mxu0 %v991
      %1213 = vmatmul.mubr.bf16.gmra.mrb[0].mxu0 %v855
      %v1214 = vpop.f32.mrb[0].mxu0
      %v1215 = vadd.f32 0.0, %v1214
      %v1216 = vpop.f32.mrb[0].mxu0
      %v1217 = vpop.f32.mrb[0].mxu0
      %v1218 = vadd.f32 0.0, %v1217
      %v1219 = vpop.f32.mrb[0].mxu0
      %1220 = vmatprep.mubr.bf16.mxu0 %v994
      %1221 = vmatmul.mubr.bf16.gmra.mrb[0].mxu0 %v857
      %v1222 = vpop.f32.mrb[0].mxu0
      %v1223 = vadd.f32 0.0, %v1222
      %v1224 = vpop.f32.mrb[0].mxu0
      %v1225 = vpop.f32.mrb[0].mxu0
      %v1226 = vadd.f32 0.0, %v1225
      %v1227 = vpop.f32.mrb[0].mxu0
      %1228 = vmatprep.mubr.bf16.mxu0 %v997
      %1229 = vmatmul.mubr.bf16.gmra.mrb[0].mxu0 %v859
      %v1230 = vpop.f32.mrb[0].mxu0
      %v1231 = vadd.f32 0.0, %v1230
      %v1232 = vpop.f32.mrb[0].mxu0
      %v1233 = vpop.f32.mrb[0].mxu0
      %v1234 = vadd.f32 0.0, %v1233
      %v1235 = vpop.f32.mrb[0].mxu0
      %1236 = vmatprep.mubr.bf16.mxu0 %v1000
      %1237 = vmatmul.mubr.bf16.gmra.mrb[0].mxu0 %v861
      %v1238 = vpop.f32.mrb[0].mxu0
      %v1239 = vadd.f32 0.0, %v1238
      %v1240 = vpop.f32.mrb[0].mxu0
      %v1241 = vpop.f32.mrb[0].mxu0
      %v1242 = vadd.f32 0.0, %v1241
      %v1243 = vpop.f32.mrb[0].mxu0
      %1244 = vmatprep.mubr.bf16.mxu0 %v1003
      %1245 = vmatmul.mubr.bf16.gmra.mrb[0].mxu0 %v863
      %v1246 = vpop.f32.mrb[0].mxu0
      %v1247 = vadd.f32 0.0, %v1246
      %v1248 = vpop.f32.mrb[0].mxu0
      %v1249 = vpop.f32.mrb[0].mxu0
      %v1250 = vadd.f32 0.0, %v1249
      %v1251 = vpop.f32.mrb[0].mxu0
      %1252 = vmatprep.mubr.bf16.mxu0 %v1006
      %1253 = vmatmul.mubr.bf16.gmra.mrb[0].mxu0 %v865
      %v1254 = vpop.f32.mrb[0].mxu0
      %v1255 = vadd.f32 0.0, %v1254
      %v1256 = vpop.f32.mrb[0].mxu0
      %v1257 = vpop.f32.mrb[0].mxu0
      %v1258 = vadd.f32 0.0, %v1257
      %v1259 = vpop.f32.mrb[0].mxu0
      %1260 = vmatprep.mubr.bf16.mxu0 %v1009
      %1261 = vmatmul.mubr.bf16.gmra.mrb[0].mxu0 %v867
      %v1262 = vpop.f32.mrb[0].mxu0
      %v1263 = vadd.f32 0.0, %v1262
      %v1264 = vpop.f32.mrb[0].mxu0
      %v1265 = vpop.f32.mrb[0].mxu0
      %v1266 = vadd.f32 0.0, %v1265
      %v1267 = vpop.f32.mrb[0].mxu0
      %1268 = vmatprep.mubr.bf16.mxu0 %v1012
      %1269 = vmatmul.mubr.bf16.gmra.mrb[0].mxu0 %v869
      %v1270 = vpop.f32.mrb[0].mxu0
      %v1271 = vadd.f32 0.0, %v1270
      %v1272 = vpop.f32.mrb[0].mxu0
      %v1273 = vpop.f32.mrb[0].mxu0
      %v1274 = vadd.f32 0.0, %v1273
      %v1275 = vpop.f32.mrb[0].mxu0
      %1276 = vmatprep.mubr.bf16.mxu0 %v1015
      %1277 = vmatmul.mubr.bf16.gmra.mrb[0].mxu0 %v871
      %v1278 = vpop.f32.mrb[0].mxu0
      %v1279 = vadd.f32 0.0, %v1278
      %v1280 = vpop.f32.mrb[0].mxu0
      %v1281 = vpop.f32.mrb[0].mxu0
      %v1282 = vadd.f32 0.0, %v1281
      %v1283 = vpop.f32.mrb[0].mxu0
      %1284 = vmatprep.mubr.bf16.mxu0 %v1018
      %1285 = vmatmul.mubr.bf16.gmra.mrb[0].mxu0 %v873
      %v1286 = vpop.f32.mrb[0].mxu0
      %v1287 = vadd.f32 0.0, %v1286
      %v1288 = vpop.f32.mrb[0].mxu0
      %v1289 = vpop.f32.mrb[0].mxu0
      %v1290 = vadd.f32 0.0, %v1289
      %v1291 = vpop.f32.mrb[0].mxu0
      %1292 = vmatprep.mubr.bf16.mxu0 %v1021
      %1293 = vmatmul.mubr.bf16.gmra.mrb[0].mxu0 %v875
      %v1294 = vpop.f32.mrb[0].mxu0
      %v1295 = vadd.f32 0.0, %v1294
      %v1296 = vpop.f32.mrb[0].mxu0
      %v1297 = vpop.f32.mrb[0].mxu0
      %v1298 = vadd.f32 0.0, %v1297
      %v1299 = vpop.f32.mrb[0].mxu0
      %1300 = vmatprep.mubr.bf16.mxu0 %v1024
      %1301 = vmatmul.mubr.bf16.gmra.mrb[0].mxu0 %v877
      %v1302 = vpop.f32.mrb[0].mxu0
      %v1303 = vadd.f32 0.0, %v1302
      %v1304 = vpop.f32.mrb[0].mxu0
      %v1305 = vpop.f32.mrb[0].mxu0
      %v1306 = vadd.f32 0.0, %v1305
      %v1307 = vpop.f32.mrb[0].mxu0
      %1308 = vmatprep.mubr.bf16.mxu0 %v1027
      %1309 = vmatmul.mubr.bf16.gmra.mrb[0].mxu0 %v879
      %v1310 = vpop.f32.mrb[0].mxu0
      %v1311 = vadd.f32 0.0, %v1310
      %v1312 = vpop.f32.mrb[0].mxu0
      %v1313 = vpop.f32.mrb[0].mxu0
      %v1314 = vadd.f32 0.0, %v1313
      %v1315 = vpop.f32.mrb[0].mxu0
      %1316 = vmatprep.mubr.bf16.mxu0 %v1030
      %1317 = vmatmul.mubr.bf16.gmra.mrb[0].mxu0 %v881
      %v1318 = vpop.f32.mrb[0].mxu0
      %v1319 = vadd.f32 0.0, %v1318
      %v1320 = vpop.f32.mrb[0].mxu0
      %v1321 = vpop.f32.mrb[0].mxu0
      %v1322 = vadd.f32 0.0, %v1321
      %v1323 = vpop.f32.mrb[0].mxu0
      %1324 = vmatprep.mubr.bf16.mxu0 %v1033
      %1325 = vmatmul.mubr.bf16.gmra.mrb[0].mxu0 %v883
      %v1326 = vpop.f32.mrb[0].mxu0
      %v1327 = vadd.f32 0.0, %v1326
      %v1328 = vpop.f32.mrb[0].mxu0
      %v1329 = vpop.f32.mrb[0].mxu0
      %v1330 = vadd.f32 0.0, %v1329
      %v1331 = vpop.f32.mrb[0].mxu0
      %1332 = vmatprep.mubr.bf16.mxu0 %v1036
      %1333 = vmatmul.mubr.bf16.gmra.mrb[0].mxu0 %v885
      %v1334 = vpop.f32.mrb[0].mxu0
      %v1335 = vadd.f32 0.0, %v1334
      %v1336 = vpop.f32.mrb[0].mxu0
      %v1337 = vpop.f32.mrb[0].mxu0
      %v1338 = vadd.f32 0.0, %v1337
      %v1339 = vpop.f32.mrb[0].mxu0
      %1340 = vmatprep.mubr.bf16.mxu0 %v1039
      %1341 = vmatmul.mubr.bf16.gmra.mrb[0].mxu0 %v887
      %v1342 = vpop.f32.mrb[0].mxu0
      %v1343 = vadd.f32 0.0, %v1342
      %v1344 = vpop.f32.mrb[0].mxu0
      %v1345 = vpop.f32.mrb[0].mxu0
      %v1346 = vadd.f32 0.0, %v1345
      %v1347 = vpop.f32.mrb[0].mxu0
      %1348 = vmatprep.mubr.bf16.mxu0 %v1042
      %1349 = vmatmul.mubr.bf16.gmra.mrb[0].mxu0 %v889
      %v1350 = vpop.f32.mrb[0].mxu0
      %v1351 = vadd.f32 0.0, %v1350
      %v1352 = vpop.f32.mrb[0].mxu0
      %v1353 = vpop.f32.mrb[0].mxu0
      %v1354 = vadd.f32 0.0, %v1353
      %v1355 = vpop.f32.mrb[0].mxu0
      %1356 = vmatprep.mubr.bf16.mxu0 %v1045
      %1357 = vmatmul.mubr.bf16.gmra.mrb[0].mxu0 %v891
      %v1358 = vpop.f32.mrb[0].mxu0
      %v1359 = vadd.f32 0.0, %v1358
      %v1360 = vpop.f32.mrb[0].mxu0
      %v1361 = vpop.f32.mrb[0].mxu0
      %v1362 = vadd.f32 0.0, %v1361
      %v1363 = vpop.f32.mrb[0].mxu0
      %1364 = vmatprep.mubr.bf16.mxu0 %v1048
      %1365 = vmatmul.mubr.bf16.gmra.mrb[0].mxu0 %v893
      %v1366 = vpop.f32.mrb[0].mxu0
      %v1367 = vadd.f32 0.0, %v1366
      %v1368 = vpop.f32.mrb[0].mxu0
      %v1369 = vpop.f32.mrb[0].mxu0
      %v1370 = vadd.f32 0.0, %v1369
      %v1371 = vpop.f32.mrb[0].mxu0
      %1372 = vmatprep.mubr.bf16.mxu0 %v1051
      %1373 = vmatmul.mubr.bf16.gmra.mrb[0].mxu0 %v895
      %v1374 = vpop.f32.mrb[0].mxu0
      %v1375 = vadd.f32 0.0, %v1374
      %v1376 = vpop.f32.mrb[0].mxu0
      %v1377 = vpop.f32.mrb[0].mxu0
      %v1378 = vadd.f32 0.0, %v1377
      %v1379 = vpop.f32.mrb[0].mxu0
      %1380 = vmatprep.mubr.bf16.mxu0 %v1054
      %1381 = vmatmul.mubr.bf16.gmra.mrb[0].mxu0 %v897
      %v1382 = vpop.f32.mrb[0].mxu0
      %v1383 = vadd.f32 0.0, %v1382
      %v1384 = vpop.f32.mrb[0].mxu0
      %v1385 = vpop.f32.mrb[0].mxu0
      %v1386 = vadd.f32 0.0, %v1385
      %v1387 = vpop.f32.mrb[0].mxu0
      %1388 = vmatprep.mubr.bf16.mxu0 %v1057
      %1389 = vmatmul.mubr.bf16.gmra.mrb[0].mxu0 %v899
      %v1390 = vpop.f32.mrb[0].mxu0
      %v1391 = vadd.f32 0.0, %v1390
      %v1392 = vpop.f32.mrb[0].mxu0
      %v1393 = vpop.f32.mrb[0].mxu0
      %v1394 = vadd.f32 0.0, %v1393
      %v1395 = vpop.f32.mrb[0].mxu0
      %1396 = vmatprep.mubr.bf16.mxu0 %v1060
      %1397 = vmatmul.mubr.bf16.gmra.mrb[0].mxu0 %v901
      %v1398 = vpop.f32.mrb[0].mxu0
      %v1399 = vadd.f32 0.0, %v1398
      %v1400 = vpop.f32.mrb[0].mxu0
      %v1401 = vpop.f32.mrb[0].mxu0
      %v1402 = vadd.f32 0.0, %v1401
      %v1403 = vpop.f32.mrb[0].mxu0
      %1404 = vmatprep.mubr.bf16.mxu0 %v1063
      %1405 = vmatmul.mubr.bf16.gmra.mrb[0].mxu0 %v903
      %v1406 = vpop.f32.mrb[0].mxu0
      %v1407 = vadd.f32 0.0, %v1406
      %v1408 = vpop.f32.mrb[0].mxu0
      %v1409 = vpop.f32.mrb[0].mxu0
      %v1410 = vadd.f32 0.0, %v1409
      %v1411 = vpop.f32.mrb[0].mxu0
      %1412 = vmatprep.mubr.bf16.mxu0 %v1066
      %1413 = vmatmul.mubr.bf16.gmra.mrb[0].mxu0 %v905
      %v1414 = vpop.f32.mrb[0].mxu0
      %v1415 = vadd.f32 0.0, %v1414
      %v1416 = vpop.f32.mrb[0].mxu0
      %v1417 = vpop.f32.mrb[0].mxu0
      %v1418 = vadd.f32 0.0, %v1417
      %v1419 = vpop.f32.mrb[0].mxu0
      %1420 = vdwg.mxu0
      %v1421 = vld [vmem:[%s3] sm:$0xff]
      %s1422 = scalar_lea.vmem %s3, 8
      %v1423 = vld [vmem:[%s1422] sm:$0xff]
      %vm1424 = vcmask 64512
      %v1426 = vsel %vm1424, %v1122, 0
      %v1429 = vsel %vm1424, %v1127, 0
      %v1432 = vsel %vm1424, %v1130, 0
      %v1435 = vsel %vm1424, %v1135, 0
      %v1438 = vsel %vm1424, %v1138, 0
      %1440 = vmatprep.subr.mxu0 0.0
      %1441 = vmatpush1.msra.mxu0 %v1423
      %1442 = vmatprep.subr.mxu0 0.0
      %1443 = vmatpush1.msra.mxu0 0.0
      %1444 = vmatprep.subr.mxu0 0.0
      %1445 = vmatpush1.msra.mxu0 0.0
      %1446 = vmatprep.subr.mxu0 0.0
      %1447 = vmatpush1.msra.mxu0 0.0
      %1448 = vmatprep.subr.mxu0 0.0
      %1449 = vmatpush1.msra.mxu0 0.0
      %1450 = vmatprep.subr.mxu0 0.0
      %1451 = vmatpush1.msra.mxu0 0.0
      %1452 = vmatprep.subr.mxu0 0.0
      %1453 = vmatpush1.msra.mxu0 0.0
      %1454 = vmatprep.subr.mxu0 0.0
      %1455 = vmatpush1.msra.mxu0 0.0
      %1456 = vmatprep.subr.mxu0 0.0
      %1457 = vmatpush1.msra.mxu0 0.0
      %1458 = vmatprep.subr.mxu0 0.0
      %1459 = vmatpush1.msra.mxu0 0.0
      %1460 = vmatprep.subr.mxu0 0.0
      %1461 = vmatpush1.msra.mxu0 0.0
      %1462 = vmatprep.subr.mxu0 0.0
      %1463 = vmatpush1.msra.mxu0 0.0
      %1464 = vmatprep.subr.mxu0 0.0
      %1465 = vmatpush1.msra.mxu0 0.0
      %1466 = vmatprep.subr.mxu0 0.0
      %1467 = vmatpush1.msra.mxu0 0.0
      %1468 = vmatprep.subr.mxu0 0.0
      %1469 = vmatpush1.msra.mxu0 0.0
      %1470 = vmatprep.subr.mxu0 0.0
      %1471 = vmatpush1.msra.mxu0 0.0
      %1472 = vmatprep.subr.mxu0 0.0
      %1473 = vmatpush1.msra.mxu0 0.0
      %1474 = vmatprep.subr.mxu0 0.0
      %1475 = vmatpush1.msra.mxu0 0.0
      %1476 = vmatprep.subr.mxu0 0.0
      %1477 = vmatpush1.msra.mxu0 0.0
      %1478 = vmatprep.subr.mxu0 0.0
      %1479 = vmatpush1.msra.mxu0 0.0
      %1480 = vmatprep.subr.mxu0 0.0
      %1481 = vmatpush1.msra.mxu0 0.0
      %1482 = vmatprep.subr.mxu0 0.0
      %1483 = vmatpush1.msra.mxu0 0.0
      %1484 = vmatprep.subr.mxu0 0.0
      %1485 = vmatpush1.msra.mxu0 0.0
      %1486 = vmatprep.subr.mxu0 0.0
      %1487 = vmatpush1.msra.mxu0 0.0
      %1488 = vmatprep.subr.mxu0 0.0
      %1489 = vmatpush1.msra.mxu0 0.0
      %1490 = vmatprep.subr.mxu0 0.0
      %1491 = vmatpush1.msra.mxu0 0.0
      %1492 = vmatprep.subr.mxu0 0.0
      %1493 = vmatpush1.msra.mxu0 0.0
      %1494 = vmatprep.subr.mxu0 0.0
      %1495 = vmatpush1.msra.mxu0 0.0
      %1496 = vmatprep.subr.mxu0 0.0
      %1497 = vmatpush1.msra.mxu0 0.0
      %1498 = vmatprep.subr.mxu0 0.0
      %1499 = vmatpush1.msra.mxu0 0.0
      %1500 = vmatprep.subr.mxu0 0.0
      %1501 = vmatpush1.msra.mxu0 0.0
      %1502 = vmatprep.subr.mxu0 0.0
      %1503 = vmatpush1.msra.mxu0 0.0
      %1504 = vmatprep.mubr.f32.mxu0 0.0
      %1505 = vmatmul.mubr.f32.gmra.mrb[0].mxu0 %v1426
      %v1506 = vpop.f32.mrb[0].mxu0
      %v1507 = vadd.f32 0.0, %v1506
      %v1508 = vpop.f32.mrb[0].mxu0
      %1509 = vmatprep.mubr.f32.mxu0 0.0
      %1510 = vmatmul.mubr.f32.gmra.mrb[0].mxu0 %v1429
      %v1511 = vpop.f32.mrb[0].mxu0
      %v1512 = vadd.f32 0.0, %v1511
      %v1513 = vpop.f32.mrb[0].mxu0
      %1514 = vmatprep.mubr.f32.mxu0 0.0
      %1515 = vmatmul.mubr.f32.gmra.mrb[0].mxu0 %v1432
      %v1516 = vpop.f32.mrb[0].mxu0
      %v1517 = vadd.f32 0.0, %v1516
      %v1518 = vpop.f32.mrb[0].mxu0
      %1519 = vmatprep.mubr.f32.mxu0 0.0
      %1520 = vmatmul.mubr.f32.gmra.mrb[0].mxu0 %v1435
      %v1521 = vpop.f32.mrb[0].mxu0
      %v1522 = vadd.f32 0.0, %v1521
      %v1523 = vpop.f32.mrb[0].mxu0
      %1524 = vmatprep.mubr.f32.mxu0 0.0
      %1525 = vmatmul.mubr.f32.gmra.mrb[0].mxu0 %v1438
      %v1526 = vpop.f32.mrb[0].mxu0
      %v1527 = vadd.f32 0.0, %v1526
      %v1528 = vpop.f32.mrb[0].mxu0
      %1529 = vdwg.mxu0
      %v1531 = vsel %vm1424, %v1103, 0
      %v1534 = vsel %vm1424, %v1106, 0
      %v1537 = vsel %vm1424, %v1111, 0
      %v1540 = vsel %vm1424, %v1114, 0
      %v1543 = vsel %vm1424, %v1119, 0
      %1545 = vmatprep.subr.mxu0 0.0
      %1546 = vmatpush1.msra.mxu0 %v1421
      %1547 = vmatprep.subr.mxu0 0.0
      %1548 = vmatpush1.msra.mxu0 0.0
      %1549 = vmatprep.subr.mxu0 0.0
      %1550 = vmatpush1.msra.mxu0 0.0
      %1551 = vmatprep.subr.mxu0 0.0
      %1552 = vmatpush1.msra.mxu0 0.0
      %1553 = vmatprep.subr.mxu0 0.0
      %1554 = vmatpush1.msra.mxu0 0.0
      %1555 = vmatprep.subr.mxu0 0.0
      %1556 = vmatpush1.msra.mxu0 0.0
      %1557 = vmatprep.subr.mxu0 0.0
      %1558 = vmatpush1.msra.mxu0 0.0
      %1559 = vmatprep.subr.mxu0 0.0
      %1560 = vmatpush1.msra.mxu0 0.0
      %1561 = vmatprep.subr.mxu0 0.0
      %1562 = vmatpush1.msra.mxu0 0.0
      %1563 = vmatprep.subr.mxu0 0.0
      %1564 = vmatpush1.msra.mxu0 0.0
      %1565 = vmatprep.subr.mxu0 0.0
      %1566 = vmatpush1.msra.mxu0 0.0
      %1567 = vmatprep.subr.mxu0 0.0
      %1568 = vmatpush1.msra.mxu0 0.0
      %1569 = vmatprep.subr.mxu0 0.0
      %1570 = vmatpush1.msra.mxu0 0.0
      %1571 = vmatprep.subr.mxu0 0.0
      %1572 = vmatpush1.msra.mxu0 0.0
      %1573 = vmatprep.subr.mxu0 0.0
      %1574 = vmatpush1.msra.mxu0 0.0
      %1575 = vmatprep.subr.mxu0 0.0
      %1576 = vmatpush1.msra.mxu0 0.0
      %1577 = vmatprep.subr.mxu0 0.0
      %1578 = vmatpush1.msra.mxu0 0.0
      %1579 = vmatprep.subr.mxu0 0.0
      %1580 = vmatpush1.msra.mxu0 0.0
      %1581 = vmatprep.subr.mxu0 0.0
      %1582 = vmatpush1.msra.mxu0 0.0
      %1583 = vmatprep.subr.mxu0 0.0
      %1584 = vmatpush1.msra.mxu0 0.0
      %1585 = vmatprep.subr.mxu0 0.0
      %1586 = vmatpush1.msra.mxu0 0.0
      %1587 = vmatprep.subr.mxu0 0.0
      %1588 = vmatpush1.msra.mxu0 0.0
      %1589 = vmatprep.subr.mxu0 0.0
      %1590 = vmatpush1.msra.mxu0 0.0
      %1591 = vmatprep.subr.mxu0 0.0
      %1592 = vmatpush1.msra.mxu0 0.0
      %1593 = vmatprep.subr.mxu0 0.0
      %1594 = vmatpush1.msra.mxu0 0.0
      %1595 = vmatprep.subr.mxu0 0.0
      %1596 = vmatpush1.msra.mxu0 0.0
      %1597 = vmatprep.subr.mxu0 0.0
      %1598 = vmatpush1.msra.mxu0 0.0
      %1599 = vmatprep.subr.mxu0 0.0
      %1600 = vmatpush1.msra.mxu0 0.0
      %1601 = vmatprep.subr.mxu0 0.0
      %1602 = vmatpush1.msra.mxu0 0.0
      %1603 = vmatprep.subr.mxu0 0.0
      %1604 = vmatpush1.msra.mxu0 0.0
      %1605 = vmatprep.subr.mxu0 0.0
      %1606 = vmatpush1.msra.mxu0 0.0
      %1607 = vmatprep.subr.mxu0 0.0
      %1608 = vmatpush1.msra.mxu0 0.0
      %1609 = vmatprep.mubr.f32.mxu0 0.0
      %1610 = vmatmul.mubr.f32.gmra.mrb[0].mxu0 %v1531
      %v1611 = vpop.f32.mrb[0].mxu0
      %v1612 = vadd.f32 %v1507, %v1611
      %v1613 = vpop.f32.mrb[0].mxu0
      %1614 = vmatprep.mubr.f32.mxu0 0.0
      %1615 = vmatmul.mubr.f32.gmra.mrb[0].mxu0 %v1534
      %v1616 = vpop.f32.mrb[0].mxu0
      %v1617 = vadd.f32 %v1512, %v1616
      %v1618 = vpop.f32.mrb[0].mxu0
      %1619 = vmatprep.mubr.f32.mxu0 0.0
      %1620 = vmatmul.mubr.f32.gmra.mrb[0].mxu0 %v1537
      %v1621 = vpop.f32.mrb[0].mxu0
      %v1622 = vadd.f32 %v1517, %v1621
      %v1623 = vpop.f32.mrb[0].mxu0
      %1624 = vmatprep.mubr.f32.mxu0 0.0
      %1625 = vmatmul.mubr.f32.gmra.mrb[0].mxu0 %v1540
      %v1626 = vpop.f32.mrb[0].mxu0
      %v1627 = vadd.f32 %v1522, %v1626
      %v1628 = vpop.f32.mrb[0].mxu0
      %1629 = vmatprep.mubr.f32.mxu0 0.0
      %1630 = vmatmul.mubr.f32.gmra.mrb[0].mxu0 %v1543
      %v1631 = vpop.f32.mrb[0].mxu0
      %v1632 = vadd.f32 %v1527, %v1631
      %v1633 = vpop.f32.mrb[0].mxu0
      %1634 = vdwg.mxu0
      %s1635 = scalar_lea.vmem %s3, 16
      %v1636 = vld [vmem:[%s1635] sm:$0xff]
      %v1638 = vsel %vm1424, %v1143, 0
      %v1641 = vsel %vm1424, %v1146, 0
      %v1644 = vsel %vm1424, %v1151, 0
      %v1647 = vsel %vm1424, %v1154, 0
      %v1650 = vsel %vm1424, %v1159, 0
      %1652 = vmatprep.subr.mxu0 0.0
      %1653 = vmatpush1.msra.mxu0 %v1636
      %1654 = vmatprep.subr.mxu0 0.0
      %1655 = vmatpush1.msra.mxu0 0.0
      %1656 = vmatprep.subr.mxu0 0.0
      %1657 = vmatpush1.msra.mxu0 0.0
      %1658 = vmatprep.subr.mxu0 0.0
      %1659 = vmatpush1.msra.mxu0 0.0
      %1660 = vmatprep.subr.mxu0 0.0
      %1661 = vmatpush1.msra.mxu0 0.0
      %1662 = vmatprep.subr.mxu0 0.0
      %1663 = vmatpush1.msra.mxu0 0.0
      %1664 = vmatprep.subr.mxu0 0.0
      %1665 = vmatpush1.msra.mxu0 0.0
      %1666 = vmatprep.subr.mxu0 0.0
      %1667 = vmatpush1.msra.mxu0 0.0
      %1668 = vmatprep.subr.mxu0 0.0
      %1669 = vmatpush1.msra.mxu0 0.0
      %1670 = vmatprep.subr.mxu0 0.0
      %1671 = vmatpush1.msra.mxu0 0.0
      %1672 = vmatprep.subr.mxu0 0.0
      %1673 = vmatpush1.msra.mxu0 0.0
      %1674 = vmatprep.subr.mxu0 0.0
      %1675 = vmatpush1.msra.mxu0 0.0
      %1676 = vmatprep.subr.mxu0 0.0
      %1677 = vmatpush1.msra.mxu0 0.0
      %1678 = vmatprep.subr.mxu0 0.0
      %1679 = vmatpush1.msra.mxu0 0.0
      %1680 = vmatprep.subr.mxu0 0.0
      %1681 = vmatpush1.msra.mxu0 0.0
      %1682 = vmatprep.subr.mxu0 0.0
      %1683 = vmatpush1.msra.mxu0 0.0
      %1684 = vmatprep.subr.mxu0 0.0
      %1685 = vmatpush1.msra.mxu0 0.0
      %1686 = vmatprep.subr.mxu0 0.0
      %1687 = vmatpush1.msra.mxu0 0.0
      %1688 = vmatprep.subr.mxu0 0.0
      %1689 = vmatpush1.msra.mxu0 0.0
      %1690 = vmatprep.subr.mxu0 0.0
      %1691 = vmatpush1.msra.mxu0 0.0
      %1692 = vmatprep.subr.mxu0 0.0
      %1693 = vmatpush1.msra.mxu0 0.0
      %1694 = vmatprep.subr.mxu0 0.0
      %1695 = vmatpush1.msra.mxu0 0.0
      %1696 = vmatprep.subr.mxu0 0.0
      %1697 = vmatpush1.msra.mxu0 0.0
      %1698 = vmatprep.subr.mxu0 0.0
      %1699 = vmatpush1.msra.mxu0 0.0
      %1700 = vmatprep.subr.mxu0 0.0
      %1701 = vmatpush1.msra.mxu0 0.0
      %1702 = vmatprep.subr.mxu0 0.0
      %1703 = vmatpush1.msra.mxu0 0.0
      %1704 = vmatprep.subr.mxu0 0.0
      %1705 = vmatpush1.msra.mxu0 0.0
      %1706 = vmatprep.subr.mxu0 0.0
      %1707 = vmatpush1.msra.mxu0 0.0
      %1708 = vmatprep.subr.mxu0 0.0
      %1709 = vmatpush1.msra.mxu0 0.0
      %1710 = vmatprep.subr.mxu0 0.0
      %1711 = vmatpush1.msra.mxu0 0.0
      %1712 = vmatprep.subr.mxu0 0.0
      %1713 = vmatpush1.msra.mxu0 0.0
      %1714 = vmatprep.subr.mxu0 0.0
      %1715 = vmatpush1.msra.mxu0 0.0
      %1716 = vmatprep.mubr.f32.mxu0 0.0
      %1717 = vmatmul.mubr.f32.gmra.mrb[0].mxu0 %v1638
      %v1718 = vpop.f32.mrb[0].mxu0
      %v1719 = vadd.f32 0.0, %v1718
      %v1720 = vpop.f32.mrb[0].mxu0
      %1721 = vmatprep.mubr.f32.mxu0 0.0
      %1722 = vmatmul.mubr.f32.gmra.mrb[0].mxu0 %v1641
      %v1723 = vpop.f32.mrb[0].mxu0
      %v1724 = vadd.f32 0.0, %v1723
      %v1725 = vpop.f32.mrb[0].mxu0
      %1726 = vmatprep.mubr.f32.mxu0 0.0
      %1727 = vmatmul.mubr.f32.gmra.mrb[0].mxu0 %v1644
      %v1728 = vpop.f32.mrb[0].mxu0
      %v1729 = vadd.f32 0.0, %v1728
      %v1730 = vpop.f32.mrb[0].mxu0
      %1731 = vmatprep.mubr.f32.mxu0 0.0
      %1732 = vmatmul.mubr.f32.gmra.mrb[0].mxu0 %v1647
      %v1733 = vpop.f32.mrb[0].mxu0
      %v1734 = vadd.f32 0.0, %v1733
      %v1735 = vpop.f32.mrb[0].mxu0
      %1736 = vmatprep.mubr.f32.mxu0 0.0
      %1737 = vmatmul.mubr.f32.gmra.mrb[0].mxu0 %v1650
      %v1738 = vpop.f32.mrb[0].mxu0
      %v1739 = vadd.f32 0.0, %v1738
      %v1740 = vpop.f32.mrb[0].mxu0
      %1741 = vdwg.mxu0
      %v1742 = vadd.f32 %v1612, %v1719
      %v1743 = vadd.f32 %v1617, %v1724
      %v1744 = vadd.f32 %v1622, %v1729
      %v1745 = vadd.f32 %v1627, %v1734
      %v1746 = vadd.f32 %v1632, %v1739
      %s1747 = scalar_lea.vmem %s3, 24
      %v1748 = vld [vmem:[%s1747] sm:$0xff]
      %v1750 = vsel %vm1424, %v1162, 0
      %v1753 = vsel %vm1424, %v1167, 0
      %v1756 = vsel %vm1424, %v1170, 0
      %v1759 = vsel %vm1424, %v1175, 0
      %v1762 = vsel %vm1424, %v1178, 0
      %1764 = vmatprep.subr.mxu0 0.0
      %1765 = vmatpush1.msra.mxu0 %v1748
      %1766 = vmatprep.subr.mxu0 0.0
      %1767 = vmatpush1.msra.mxu0 0.0
      %1768 = vmatprep.subr.mxu0 0.0
      %1769 = vmatpush1.msra.mxu0 0.0
      %1770 = vmatprep.subr.mxu0 0.0
      %1771 = vmatpush1.msra.mxu0 0.0
      %1772 = vmatprep.subr.mxu0 0.0
      %1773 = vmatpush1.msra.mxu0 0.0
      %1774 = vmatprep.subr.mxu0 0.0
      %1775 = vmatpush1.msra.mxu0 0.0
      %1776 = vmatprep.subr.mxu0 0.0
      %1777 = vmatpush1.msra.mxu0 0.0
      %1778 = vmatprep.subr.mxu0 0.0
      %1779 = vmatpush1.msra.mxu0 0.0
      %1780 = vmatprep.subr.mxu0 0.0
      %1781 = vmatpush1.msra.mxu0 0.0
      %1782 = vmatprep.subr.mxu0 0.0
      %1783 = vmatpush1.msra.mxu0 0.0
      %1784 = vmatprep.subr.mxu0 0.0
      %1785 = vmatpush1.msra.mxu0 0.0
      %1786 = vmatprep.subr.mxu0 0.0
      %1787 = vmatpush1.msra.mxu0 0.0
      %1788 = vmatprep.subr.mxu0 0.0
      %1789 = vmatpush1.msra.mxu0 0.0
      %1790 = vmatprep.subr.mxu0 0.0
      %1791 = vmatpush1.msra.mxu0 0.0
      %1792 = vmatprep.subr.mxu0 0.0
      %1793 = vmatpush1.msra.mxu0 0.0
      %1794 = vmatprep.subr.mxu0 0.0
      %1795 = vmatpush1.msra.mxu0 0.0
      %1796 = vmatprep.subr.mxu0 0.0
      %1797 = vmatpush1.msra.mxu0 0.0
      %1798 = vmatprep.subr.mxu0 0.0
      %1799 = vmatpush1.msra.mxu0 0.0
      %1800 = vmatprep.subr.mxu0 0.0
      %1801 = vmatpush1.msra.mxu0 0.0
      %1802 = vmatprep.subr.mxu0 0.0
      %1803 = vmatpush1.msra.mxu0 0.0
      %1804 = vmatprep.subr.mxu0 0.0
      %1805 = vmatpush1.msra.mxu0 0.0
      %1806 = vmatprep.subr.mxu0 0.0
      %1807 = vmatpush1.msra.mxu0 0.0
      %1808 = vmatprep.subr.mxu0 0.0
      %1809 = vmatpush1.msra.mxu0 0.0
      %1810 = vmatprep.subr.mxu0 0.0
      %1811 = vmatpush1.msra.mxu0 0.0
      %1812 = vmatprep.subr.mxu0 0.0
      %1813 = vmatpush1.msra.mxu0 0.0
      %1814 = vmatprep.subr.mxu0 0.0
      %1815 = vmatpush1.msra.mxu0 0.0
      %1816 = vmatprep.subr.mxu0 0.0
      %1817 = vmatpush1.msra.mxu0 0.0
      %1818 = vmatprep.subr.mxu0 0.0
      %1819 = vmatpush1.msra.mxu0 0.0
      %1820 = vmatprep.subr.mxu0 0.0
      %1821 = vmatpush1.msra.mxu0 0.0
      %1822 = vmatprep.subr.mxu0 0.0
      %1823 = vmatpush1.msra.mxu0 0.0
      %1824 = vmatprep.subr.mxu0 0.0
      %1825 = vmatpush1.msra.mxu0 0.0
      %1826 = vmatprep.subr.mxu0 0.0
      %1827 = vmatpush1.msra.mxu0 0.0
      %1828 = vmatprep.mubr.f32.mxu0 0.0
      %1829 = vmatmul.mubr.f32.gmra.mrb[0].mxu0 %v1750
      %v1830 = vpop.f32.mrb[0].mxu0
      %v1831 = vadd.f32 0.0, %v1830
      %v1832 = vpop.f32.mrb[0].mxu0
      %1833 = vmatprep.mubr.f32.mxu0 0.0
      %1834 = vmatmul.mubr.f32.gmra.mrb[0].mxu0 %v1753
      %v1835 = vpop.f32.mrb[0].mxu0
      %v1836 = vadd.f32 0.0, %v1835
      %v1837 = vpop.f32.mrb[0].mxu0
      %1838 = vmatprep.mubr.f32.mxu0 0.0
      %1839 = vmatmul.mubr.f32.gmra.mrb[0].mxu0 %v1756
      %v1840 = vpop.f32.mrb[0].mxu0
      %v1841 = vadd.f32 0.0, %v1840
      %v1842 = vpop.f32.mrb[0].mxu0
      %1843 = vmatprep.mubr.f32.mxu0 0.0
      %1844 = vmatmul.mubr.f32.gmra.mrb[0].mxu0 %v1759
      %v1845 = vpop.f32.mrb[0].mxu0
      %v1846 = vadd.f32 0.0, %v1845
      %v1847 = vpop.f32.mrb[0].mxu0
      %1848 = vmatprep.mubr.f32.mxu0 0.0
      %1849 = vmatmul.mubr.f32.gmra.mrb[0].mxu0 %v1762
      %v1850 = vpop.f32.mrb[0].mxu0
      %v1851 = vadd.f32 0.0, %v1850
      %v1852 = vpop.f32.mrb[0].mxu0
      %1853 = vdwg.mxu0
      %v1854 = vadd.f32 %v1742, %v1831
      %v1855 = vadd.f32 %v1743, %v1836
      %v1856 = vadd.f32 %v1744, %v1841
      %v1857 = vadd.f32 %v1745, %v1846
      %v1858 = vadd.f32 %v1746, %v1851
      %s1859 = scalar_lea.vmem %s3, 32
      %v1860 = vld [vmem:[%s1859] sm:$0xff]
      %v1862 = vsel %vm1424, %v1183, 0
      %v1865 = vsel %vm1424, %v1186, 0
      %v1868 = vsel %vm1424, %v1191, 0
      %v1871 = vsel %vm1424, %v1194, 0
      %v1874 = vsel %vm1424, %v1199, 0
      %1876 = vmatprep.subr.mxu0 0.0
      %1877 = vmatpush1.msra.mxu0 %v1860
      %1878 = vmatprep.subr.mxu0 0.0
      %1879 = vmatpush1.msra.mxu0 0.0
      %1880 = vmatprep.subr.mxu0 0.0
      %1881 = vmatpush1.msra.mxu0 0.0
      %1882 = vmatprep.subr.mxu0 0.0
      %1883 = vmatpush1.msra.mxu0 0.0
      %1884 = vmatprep.subr.mxu0 0.0
      %1885 = vmatpush1.msra.mxu0 0.0
      %1886 = vmatprep.subr.mxu0 0.0
      %1887 = vmatpush1.msra.mxu0 0.0
      %1888 = vmatprep.subr.mxu0 0.0
      %1889 = vmatpush1.msra.mxu0 0.0
      %1890 = vmatprep.subr.mxu0 0.0
      %1891 = vmatpush1.msra.mxu0 0.0
      %1892 = vmatprep.subr.mxu0 0.0
      %1893 = vmatpush1.msra.mxu0 0.0
      %1894 = vmatprep.subr.mxu0 0.0
      %1895 = vmatpush1.msra.mxu0 0.0
      %1896 = vmatprep.subr.mxu0 0.0
      %1897 = vmatpush1.msra.mxu0 0.0
      %1898 = vmatprep.subr.mxu0 0.0
      %1899 = vmatpush1.msra.mxu0 0.0
      %1900 = vmatprep.subr.mxu0 0.0
      %1901 = vmatpush1.msra.mxu0 0.0
      %1902 = vmatprep.subr.mxu0 0.0
      %1903 = vmatpush1.msra.mxu0 0.0
      %1904 = vmatprep.subr.mxu0 0.0
      %1905 = vmatpush1.msra.mxu0 0.0
      %1906 = vmatprep.subr.mxu0 0.0
      %1907 = vmatpush1.msra.mxu0 0.0
      %1908 = vmatprep.subr.mxu0 0.0
      %1909 = vmatpush1.msra.mxu0 0.0
      %1910 = vmatprep.subr.mxu0 0.0
      %1911 = vmatpush1.msra.mxu0 0.0
      %1912 = vmatprep.subr.mxu0 0.0
      %1913 = vmatpush1.msra.mxu0 0.0
      %1914 = vmatprep.subr.mxu0 0.0
      %1915 = vmatpush1.msra.mxu0 0.0
      %1916 = vmatprep.subr.mxu0 0.0
      %1917 = vmatpush1.msra.mxu0 0.0
      %1918 = vmatprep.subr.mxu0 0.0
      %1919 = vmatpush1.msra.mxu0 0.0
      %1920 = vmatprep.subr.mxu0 0.0
      %1921 = vmatpush1.msra.mxu0 0.0
      %1922 = vmatprep.subr.mxu0 0.0
      %1923 = vmatpush1.msra.mxu0 0.0
      %1924 = vmatprep.subr.mxu0 0.0
      %1925 = vmatpush1.msra.mxu0 0.0
      %1926 = vmatprep.subr.mxu0 0.0
      %1927 = vmatpush1.msra.mxu0 0.0
      %1928 = vmatprep.subr.mxu0 0.0
      %1929 = vmatpush1.msra.mxu0 0.0
      %1930 = vmatprep.subr.mxu0 0.0
      %1931 = vmatpush1.msra.mxu0 0.0
      %1932 = vmatprep.subr.mxu0 0.0
      %1933 = vmatpush1.msra.mxu0 0.0
      %1934 = vmatprep.subr.mxu0 0.0
      %1935 = vmatpush1.msra.mxu0 0.0
      %1936 = vmatprep.subr.mxu0 0.0
      %1937 = vmatpush1.msra.mxu0 0.0
      %1938 = vmatprep.subr.mxu0 0.0
      %1939 = vmatpush1.msra.mxu0 0.0
      %1940 = vmatprep.mubr.f32.mxu0 0.0
      %1941 = vmatmul.mubr.f32.gmra.mrb[0].mxu0 %v1862
      %v1942 = vpop.f32.mrb[0].mxu0
      %v1943 = vadd.f32 0.0, %v1942
      %v1944 = vpop.f32.mrb[0].mxu0
      %1945 = vmatprep.mubr.f32.mxu0 0.0
      %1946 = vmatmul.mubr.f32.gmra.mrb[0].mxu0 %v1865
      %v1947 = vpop.f32.mrb[0].mxu0
      %v1948 = vadd.f32 0.0, %v1947
      %v1949 = vpop.f32.mrb[0].mxu0
      %1950 = vmatprep.mubr.f32.mxu0 0.0
      %1951 = vmatmul.mubr.f32.gmra.mrb[0].mxu0 %v1868
      %v1952 = vpop.f32.mrb[0].mxu0
      %v1953 = vadd.f32 0.0, %v1952
      %v1954 = vpop.f32.mrb[0].mxu0
      %1955 = vmatprep.mubr.f32.mxu0 0.0
      %1956 = vmatmul.mubr.f32.gmra.mrb[0].mxu0 %v1871
      %v1957 = vpop.f32.mrb[0].mxu0
      %v1958 = vadd.f32 0.0, %v1957
      %v1959 = vpop.f32.mrb[0].mxu0
      %1960 = vmatprep.mubr.f32.mxu0 0.0
      %1961 = vmatmul.mubr.f32.gmra.mrb[0].mxu0 %v1874
      %v1962 = vpop.f32.mrb[0].mxu0
      %v1963 = vadd.f32 0.0, %v1962
      %v1964 = vpop.f32.mrb[0].mxu0
      %1965 = vdwg.mxu0
      %v1966 = vadd.f32 %v1854, %v1943
      %v1967 = vadd.f32 %v1855, %v1948
      %v1968 = vadd.f32 %v1856, %v1953
      %v1969 = vadd.f32 %v1857, %v1958
      %v1970 = vadd.f32 %v1858, %v1963
      %s1971 = scalar_lea.vmem %s3, 40
      %v1972 = vld [vmem:[%s1971] sm:$0xff]
      %v1974 = vsel %vm1424, %v1202, 0
      %v1977 = vsel %vm1424, %v1207, 0
      %v1980 = vsel %vm1424, %v1210, 0
      %v1983 = vsel %vm1424, %v1215, 0
      %v1986 = vsel %vm1424, %v1218, 0
      %1988 = vmatprep.subr.mxu0 0.0
      %1989 = vmatpush1.msra.mxu0 %v1972
      %1990 = vmatprep.subr.mxu0 0.0
      %1991 = vmatpush1.msra.mxu0 0.0
      %1992 = vmatprep.subr.mxu0 0.0
      %1993 = vmatpush1.msra.mxu0 0.0
      %1994 = vmatprep.subr.mxu0 0.0
      %1995 = vmatpush1.msra.mxu0 0.0
      %1996 = vmatprep.subr.mxu0 0.0
      %1997 = vmatpush1.msra.mxu0 0.0
      %1998 = vmatprep.subr.mxu0 0.0
      %1999 = vmatpush1.msra.mxu0 0.0
      %2000 = vmatprep.subr.mxu0 0.0
      %2001 = vmatpush1.msra.mxu0 0.0
      %2002 = vmatprep.subr.mxu0 0.0
      %2003 = vmatpush1.msra.mxu0 0.0
      %2004 = vmatprep.subr.mxu0 0.0
      %2005 = vmatpush1.msra.mxu0 0.0
      %2006 = vmatprep.subr.mxu0 0.0
      %2007 = vmatpush1.msra.mxu0 0.0
      %2008 = vmatprep.subr.mxu0 0.0
      %2009 = vmatpush1.msra.mxu0 0.0
      %2010 = vmatprep.subr.mxu0 0.0
      %2011 = vmatpush1.msra.mxu0 0.0
      %2012 = vmatprep.subr.mxu0 0.0
      %2013 = vmatpush1.msra.mxu0 0.0
      %2014 = vmatprep.subr.mxu0 0.0
      %2015 = vmatpush1.msra.mxu0 0.0
      %2016 = vmatprep.subr.mxu0 0.0
      %2017 = vmatpush1.msra.mxu0 0.0
      %2018 = vmatprep.subr.mxu0 0.0
      %2019 = vmatpush1.msra.mxu0 0.0
      %2020 = vmatprep.subr.mxu0 0.0
      %2021 = vmatpush1.msra.mxu0 0.0
      %2022 = vmatprep.subr.mxu0 0.0
      %2023 = vmatpush1.msra.mxu0 0.0
      %2024 = vmatprep.subr.mxu0 0.0
      %2025 = vmatpush1.msra.mxu0 0.0
      %2026 = vmatprep.subr.mxu0 0.0
      %2027 = vmatpush1.msra.mxu0 0.0
      %2028 = vmatprep.subr.mxu0 0.0
      %2029 = vmatpush1.msra.mxu0 0.0
      %2030 = vmatprep.subr.mxu0 0.0
      %2031 = vmatpush1.msra.mxu0 0.0
      %2032 = vmatprep.subr.mxu0 0.0
      %2033 = vmatpush1.msra.mxu0 0.0
      %2034 = vmatprep.subr.mxu0 0.0
      %2035 = vmatpush1.msra.mxu0 0.0
      %2036 = vmatprep.subr.mxu0 0.0
      %2037 = vmatpush1.msra.mxu0 0.0
      %2038 = vmatprep.subr.mxu0 0.0
      %2039 = vmatpush1.msra.mxu0 0.0
      %2040 = vmatprep.subr.mxu0 0.0
      %2041 = vmatpush1.msra.mxu0 0.0
      %2042 = vmatprep.subr.mxu0 0.0
      %2043 = vmatpush1.msra.mxu0 0.0
      %2044 = vmatprep.subr.mxu0 0.0
      %2045 = vmatpush1.msra.mxu0 0.0
      %2046 = vmatprep.subr.mxu0 0.0
      %2047 = vmatpush1.msra.mxu0 0.0
      %2048 = vmatprep.subr.mxu0 0.0
      %2049 = vmatpush1.msra.mxu0 0.0
      %2050 = vmatprep.subr.mxu0 0.0
      %2051 = vmatpush1.msra.mxu0 0.0
      %2052 = vmatprep.mubr.f32.mxu0 0.0
      %2053 = vmatmul.mubr.f32.gmra.mrb[0].mxu0 %v1974
      %v2054 = vpop.f32.mrb[0].mxu0
      %v2055 = vadd.f32 0.0, %v2054
      %v2056 = vpop.f32.mrb[0].mxu0
      %2057 = vmatprep.mubr.f32.mxu0 0.0
      %2058 = vmatmul.mubr.f32.gmra.mrb[0].mxu0 %v1977
      %v2059 = vpop.f32.mrb[0].mxu0
      %v2060 = vadd.f32 0.0, %v2059
      %v2061 = vpop.f32.mrb[0].mxu0
      %2062 = vmatprep.mubr.f32.mxu0 0.0
      %2063 = vmatmul.mubr.f32.gmra.mrb[0].mxu0 %v1980
      %v2064 = vpop.f32.mrb[0].mxu0
      %v2065 = vadd.f32 0.0, %v2064
      %v2066 = vpop.f32.mrb[0].mxu0
      %2067 = vmatprep.mubr.f32.mxu0 0.0
      %2068 = vmatmul.mubr.f32.gmra.mrb[0].mxu0 %v1983
      %v2069 = vpop.f32.mrb[0].mxu0
      %v2070 = vadd.f32 0.0, %v2069
      %v2071 = vpop.f32.mrb[0].mxu0
      %2072 = vmatprep.mubr.f32.mxu0 0.0
      %2073 = vmatmul.mubr.f32.gmra.mrb[0].mxu0 %v1986
      %v2074 = vpop.f32.mrb[0].mxu0
      %v2075 = vadd.f32 0.0, %v2074
      %v2076 = vpop.f32.mrb[0].mxu0
      %2077 = vdwg.mxu0
      %v2078 = vadd.f32 %v1966, %v2055
      %v2079 = vadd.f32 %v1967, %v2060
      %v2080 = vadd.f32 %v1968, %v2065
      %v2081 = vadd.f32 %v1969, %v2070
      %v2082 = vadd.f32 %v1970, %v2075
      %s2083 = scalar_lea.vmem %s3, 48
      %v2084 = vld [vmem:[%s2083] sm:$0xff]
      %v2086 = vsel %vm1424, %v1223, 0
      %v2089 = vsel %vm1424, %v1226, 0
      %v2092 = vsel %vm1424, %v1231, 0
      %v2095 = vsel %vm1424, %v1234, 0
      %v2098 = vsel %vm1424, %v1239, 0
      %2100 = vmatprep.subr.mxu0 0.0
      %2101 = vmatpush1.msra.mxu0 %v2084
      %2102 = vmatprep.subr.mxu0 0.0
      %2103 = vmatpush1.msra.mxu0 0.0
      %2104 = vmatprep.subr.mxu0 0.0
      %2105 = vmatpush1.msra.mxu0 0.0
      %2106 = vmatprep.subr.mxu0 0.0
      %2107 = vmatpush1.msra.mxu0 0.0
      %2108 = vmatprep.subr.mxu0 0.0
      %2109 = vmatpush1.msra.mxu0 0.0
      %2110 = vmatprep.subr.mxu0 0.0
      %2111 = vmatpush1.msra.mxu0 0.0
      %2112 = vmatprep.subr.mxu0 0.0
      %2113 = vmatpush1.msra.mxu0 0.0
      %2114 = vmatprep.subr.mxu0 0.0
      %2115 = vmatpush1.msra.mxu0 0.0
      %2116 = vmatprep.subr.mxu0 0.0
      %2117 = vmatpush1.msra.mxu0 0.0
      %2118 = vmatprep.subr.mxu0 0.0
      %2119 = vmatpush1.msra.mxu0 0.0
      %2120 = vmatprep.subr.mxu0 0.0
      %2121 = vmatpush1.msra.mxu0 0.0
      %2122 = vmatprep.subr.mxu0 0.0
      %2123 = vmatpush1.msra.mxu0 0.0
      %2124 = vmatprep.subr.mxu0 0.0
      %2125 = vmatpush1.msra.mxu0 0.0
      %2126 = vmatprep.subr.mxu0 0.0
      %2127 = vmatpush1.msra.mxu0 0.0
      %2128 = vmatprep.subr.mxu0 0.0
      %2129 = vmatpush1.msra.mxu0 0.0
      %2130 = vmatprep.subr.mxu0 0.0
      %2131 = vmatpush1.msra.mxu0 0.0
      %2132 = vmatprep.subr.mxu0 0.0
      %2133 = vmatpush1.msra.mxu0 0.0
      %2134 = vmatprep.subr.mxu0 0.0
      %2135 = vmatpush1.msra.mxu0 0.0
      %2136 = vmatprep.subr.mxu0 0.0
      %2137 = vmatpush1.msra.mxu0 0.0
      %2138 = vmatprep.subr.mxu0 0.0
      %2139 = vmatpush1.msra.mxu0 0.0
      %2140 = vmatprep.subr.mxu0 0.0
      %2141 = vmatpush1.msra.mxu0 0.0
      %2142 = vmatprep.subr.mxu0 0.0
      %2143 = vmatpush1.msra.mxu0 0.0
      %2144 = vmatprep.subr.mxu0 0.0
      %2145 = vmatpush1.msra.mxu0 0.0
      %2146 = vmatprep.subr.mxu0 0.0
      %2147 = vmatpush1.msra.mxu0 0.0
      %2148 = vmatprep.subr.mxu0 0.0
      %2149 = vmatpush1.msra.mxu0 0.0
      %2150 = vmatprep.subr.mxu0 0.0
      %2151 = vmatpush1.msra.mxu0 0.0
      %2152 = vmatprep.subr.mxu0 0.0
      %2153 = vmatpush1.msra.mxu0 0.0
      %2154 = vmatprep.subr.mxu0 0.0
      %2155 = vmatpush1.msra.mxu0 0.0
      %2156 = vmatprep.subr.mxu0 0.0
      %2157 = vmatpush1.msra.mxu0 0.0
      %2158 = vmatprep.subr.mxu0 0.0
      %2159 = vmatpush1.msra.mxu0 0.0
      %2160 = vmatprep.subr.mxu0 0.0
      %2161 = vmatpush1.msra.mxu0 0.0
      %2162 = vmatprep.subr.mxu0 0.0
      %2163 = vmatpush1.msra.mxu0 0.0
      %2164 = vmatprep.mubr.f32.mxu0 0.0
      %2165 = vmatmul.mubr.f32.gmra.mrb[0].mxu0 %v2086
      %v2166 = vpop.f32.mrb[0].mxu0
      %v2167 = vadd.f32 0.0, %v2166
      %v2168 = vpop.f32.mrb[0].mxu0
      %2169 = vmatprep.mubr.f32.mxu0 0.0
      %2170 = vmatmul.mubr.f32.gmra.mrb[0].mxu0 %v2089
      %v2171 = vpop.f32.mrb[0].mxu0
      %v2172 = vadd.f32 0.0, %v2171
      %v2173 = vpop.f32.mrb[0].mxu0
      %2174 = vmatprep.mubr.f32.mxu0 0.0
      %2175 = vmatmul.mubr.f32.gmra.mrb[0].mxu0 %v2092
      %v2176 = vpop.f32.mrb[0].mxu0
      %v2177 = vadd.f32 0.0, %v2176
      %v2178 = vpop.f32.mrb[0].mxu0
      %2179 = vmatprep.mubr.f32.mxu0 0.0
      %2180 = vmatmul.mubr.f32.gmra.mrb[0].mxu0 %v2095
      %v2181 = vpop.f32.mrb[0].mxu0
      %v2182 = vadd.f32 0.0, %v2181
      %v2183 = vpop.f32.mrb[0].mxu0
      %2184 = vmatprep.mubr.f32.mxu0 0.0
      %2185 = vmatmul.mubr.f32.gmra.mrb[0].mxu0 %v2098
      %v2186 = vpop.f32.mrb[0].mxu0
      %v2187 = vadd.f32 0.0, %v2186
      %v2188 = vpop.f32.mrb[0].mxu0
      %2189 = vdwg.mxu0
      %v2190 = vadd.f32 %v2078, %v2167
      %v2191 = vadd.f32 %v2079, %v2172
      %v2192 = vadd.f32 %v2080, %v2177
      %v2193 = vadd.f32 %v2081, %v2182
      %v2194 = vadd.f32 %v2082, %v2187
      %s2195 = scalar_lea.vmem %s3, 56
      %v2196 = vld [vmem:[%s2195] sm:$0xff]
      %v2198 = vsel %vm1424, %v1242, 0
      %v2201 = vsel %vm1424, %v1247, 0
      %v2204 = vsel %vm1424, %v1250, 0
      %v2207 = vsel %vm1424, %v1255, 0
      %v2210 = vsel %vm1424, %v1258, 0
      %2212 = vmatprep.subr.mxu0 0.0
      %2213 = vmatpush1.msra.mxu0 %v2196
      %2214 = vmatprep.subr.mxu0 0.0
      %2215 = vmatpush1.msra.mxu0 0.0
      %2216 = vmatprep.subr.mxu0 0.0
      %2217 = vmatpush1.msra.mxu0 0.0
      %2218 = vmatprep.subr.mxu0 0.0
      %2219 = vmatpush1.msra.mxu0 0.0
      %2220 = vmatprep.subr.mxu0 0.0
      %2221 = vmatpush1.msra.mxu0 0.0
      %2222 = vmatprep.subr.mxu0 0.0
      %2223 = vmatpush1.msra.mxu0 0.0
      %2224 = vmatprep.subr.mxu0 0.0
      %2225 = vmatpush1.msra.mxu0 0.0
      %2226 = vmatprep.subr.mxu0 0.0
      %2227 = vmatpush1.msra.mxu0 0.0
      %2228 = vmatprep.subr.mxu0 0.0
      %2229 = vmatpush1.msra.mxu0 0.0
      %2230 = vmatprep.subr.mxu0 0.0
      %2231 = vmatpush1.msra.mxu0 0.0
      %2232 = vmatprep.subr.mxu0 0.0
      %2233 = vmatpush1.msra.mxu0 0.0
      %2234 = vmatprep.subr.mxu0 0.0
      %2235 = vmatpush1.msra.mxu0 0.0
      %2236 = vmatprep.subr.mxu0 0.0
      %2237 = vmatpush1.msra.mxu0 0.0
      %2238 = vmatprep.subr.mxu0 0.0
      %2239 = vmatpush1.msra.mxu0 0.0
      %2240 = vmatprep.subr.mxu0 0.0
      %2241 = vmatpush1.msra.mxu0 0.0
      %2242 = vmatprep.subr.mxu0 0.0
      %2243 = vmatpush1.msra.mxu0 0.0
      %2244 = vmatprep.subr.mxu0 0.0
      %2245 = vmatpush1.msra.mxu0 0.0
      %2246 = vmatprep.subr.mxu0 0.0
      %2247 = vmatpush1.msra.mxu0 0.0
      %2248 = vmatprep.subr.mxu0 0.0
      %2249 = vmatpush1.msra.mxu0 0.0
      %2250 = vmatprep.subr.mxu0 0.0
      %2251 = vmatpush1.msra.mxu0 0.0
      %2252 = vmatprep.subr.mxu0 0.0
      %2253 = vmatpush1.msra.mxu0 0.0
      %2254 = vmatprep.subr.mxu0 0.0
      %2255 = vmatpush1.msra.mxu0 0.0
      %2256 = vmatprep.subr.mxu0 0.0
      %2257 = vmatpush1.msra.mxu0 0.0
      %2258 = vmatprep.subr.mxu0 0.0
      %2259 = vmatpush1.msra.mxu0 0.0
      %2260 = vmatprep.subr.mxu0 0.0
      %2261 = vmatpush1.msra.mxu0 0.0
      %2262 = vmatprep.subr.mxu0 0.0
      %2263 = vmatpush1.msra.mxu0 0.0
      %2264 = vmatprep.subr.mxu0 0.0
      %2265 = vmatpush1.msra.mxu0 0.0
      %2266 = vmatprep.subr.mxu0 0.0
      %2267 = vmatpush1.msra.mxu0 0.0
      %2268 = vmatprep.subr.mxu0 0.0
      %2269 = vmatpush1.msra.mxu0 0.0
      %2270 = vmatprep.subr.mxu0 0.0
      %2271 = vmatpush1.msra.mxu0 0.0
      %2272 = vmatprep.subr.mxu0 0.0
      %2273 = vmatpush1.msra.mxu0 0.0
      %2274 = vmatprep.subr.mxu0 0.0
      %2275 = vmatpush1.msra.mxu0 0.0
      %2276 = vmatprep.mubr.f32.mxu0 0.0
      %2277 = vmatmul.mubr.f32.gmra.mrb[0].mxu0 %v2198
      %v2278 = vpop.f32.mrb[0].mxu0
      %v2279 = vadd.f32 0.0, %v2278
      %v2280 = vpop.f32.mrb[0].mxu0
      %2281 = vmatprep.mubr.f32.mxu0 0.0
      %2282 = vmatmul.mubr.f32.gmra.mrb[0].mxu0 %v2201
      %v2283 = vpop.f32.mrb[0].mxu0
      %v2284 = vadd.f32 0.0, %v2283
      %v2285 = vpop.f32.mrb[0].mxu0
      %2286 = vmatprep.mubr.f32.mxu0 0.0
      %2287 = vmatmul.mubr.f32.gmra.mrb[0].mxu0 %v2204
      %v2288 = vpop.f32.mrb[0].mxu0
      %v2289 = vadd.f32 0.0, %v2288
      %v2290 = vpop.f32.mrb[0].mxu0
      %2291 = vmatprep.mubr.f32.mxu0 0.0
      %2292 = vmatmul.mubr.f32.gmra.mrb[0].mxu0 %v2207
      %v2293 = vpop.f32.mrb[0].mxu0
      %v2294 = vadd.f32 0.0, %v2293
      %v2295 = vpop.f32.mrb[0].mxu0
      %2296 = vmatprep.mubr.f32.mxu0 0.0
      %2297 = vmatmul.mubr.f32.gmra.mrb[0].mxu0 %v2210
      %v2298 = vpop.f32.mrb[0].mxu0
      %v2299 = vadd.f32 0.0, %v2298
      %v2300 = vpop.f32.mrb[0].mxu0
      %2301 = vdwg.mxu0
      %v2302 = vadd.f32 %v2190, %v2279
      %v2303 = vadd.f32 %v2191, %v2284
      %v2304 = vadd.f32 %v2192, %v2289
      %v2305 = vadd.f32 %v2193, %v2294
      %v2306 = vadd.f32 %v2194, %v2299
      %s2307 = scalar_lea.vmem %s3, 64
      %v2308 = vld [vmem:[%s2307] sm:$0xff]
      %v2310 = vsel %vm1424, %v1263, 0
      %v2313 = vsel %vm1424, %v1266, 0
      %v2316 = vsel %vm1424, %v1271, 0
      %v2319 = vsel %vm1424, %v1274, 0
      %v2322 = vsel %vm1424, %v1279, 0
      %2324 = vmatprep.subr.mxu0 0.0
      %2325 = vmatpush1.msra.mxu0 %v2308
      %2326 = vmatprep.subr.mxu0 0.0
      %2327 = vmatpush1.msra.mxu0 0.0
      %2328 = vmatprep.subr.mxu0 0.0
      %2329 = vmatpush1.msra.mxu0 0.0
      %2330 = vmatprep.subr.mxu0 0.0
      %2331 = vmatpush1.msra.mxu0 0.0
      %2332 = vmatprep.subr.mxu0 0.0
      %2333 = vmatpush1.msra.mxu0 0.0
      %2334 = vmatprep.subr.mxu0 0.0
      %2335 = vmatpush1.msra.mxu0 0.0
      %2336 = vmatprep.subr.mxu0 0.0
      %2337 = vmatpush1.msra.mxu0 0.0
      %2338 = vmatprep.subr.mxu0 0.0
      %2339 = vmatpush1.msra.mxu0 0.0
      %2340 = vmatprep.subr.mxu0 0.0
      %2341 = vmatpush1.msra.mxu0 0.0
      %2342 = vmatprep.subr.mxu0 0.0
      %2343 = vmatpush1.msra.mxu0 0.0
      %2344 = vmatprep.subr.mxu0 0.0
      %2345 = vmatpush1.msra.mxu0 0.0
      %2346 = vmatprep.subr.mxu0 0.0
      %2347 = vmatpush1.msra.mxu0 0.0
      %2348 = vmatprep.subr.mxu0 0.0
      %2349 = vmatpush1.msra.mxu0 0.0
      %2350 = vmatprep.subr.mxu0 0.0
      %2351 = vmatpush1.msra.mxu0 0.0
      %2352 = vmatprep.subr.mxu0 0.0
      %2353 = vmatpush1.msra.mxu0 0.0
      %2354 = vmatprep.subr.mxu0 0.0
      %2355 = vmatpush1.msra.mxu0 0.0
      %2356 = vmatprep.subr.mxu0 0.0
      %2357 = vmatpush1.msra.mxu0 0.0
      %2358 = vmatprep.subr.mxu0 0.0
      %2359 = vmatpush1.msra.mxu0 0.0
      %2360 = vmatprep.subr.mxu0 0.0
      %2361 = vmatpush1.msra.mxu0 0.0
      %2362 = vmatprep.subr.mxu0 0.0
      %2363 = vmatpush1.msra.mxu0 0.0
      %2364 = vmatprep.subr.mxu0 0.0
      %2365 = vmatpush1.msra.mxu0 0.0
      %2366 = vmatprep.subr.mxu0 0.0
      %2367 = vmatpush1.msra.mxu0 0.0
      %2368 = vmatprep.subr.mxu0 0.0
      %2369 = vmatpush1.msra.mxu0 0.0
      %2370 = vmatprep.subr.mxu0 0.0
      %2371 = vmatpush1.msra.mxu0 0.0
      %2372 = vmatprep.subr.mxu0 0.0
      %2373 = vmatpush1.msra.mxu0 0.0
      %2374 = vmatprep.subr.mxu0 0.0
      %2375 = vmatpush1.msra.mxu0 0.0
      %2376 = vmatprep.subr.mxu0 0.0
      %2377 = vmatpush1.msra.mxu0 0.0
      %2378 = vmatprep.subr.mxu0 0.0
      %2379 = vmatpush1.msra.mxu0 0.0
      %2380 = vmatprep.subr.mxu0 0.0
      %2381 = vmatpush1.msra.mxu0 0.0
      %2382 = vmatprep.subr.mxu0 0.0
      %2383 = vmatpush1.msra.mxu0 0.0
      %2384 = vmatprep.subr.mxu0 0.0
      %2385 = vmatpush1.msra.mxu0 0.0
      %2386 = vmatprep.subr.mxu0 0.0
      %2387 = vmatpush1.msra.mxu0 0.0
      %2388 = vmatprep.mubr.f32.mxu0 0.0
      %2389 = vmatmul.mubr.f32.gmra.mrb[0].mxu0 %v2310
      %v2390 = vpop.f32.mrb[0].mxu0
      %v2391 = vadd.f32 0.0, %v2390
      %v2392 = vpop.f32.mrb[0].mxu0
      %2393 = vmatprep.mubr.f32.mxu0 0.0
      %2394 = vmatmul.mubr.f32.gmra.mrb[0].mxu0 %v2313
      %v2395 = vpop.f32.mrb[0].mxu0
      %v2396 = vadd.f32 0.0, %v2395
      %v2397 = vpop.f32.mrb[0].mxu0
      %2398 = vmatprep.mubr.f32.mxu0 0.0
      %2399 = vmatmul.mubr.f32.gmra.mrb[0].mxu0 %v2316
      %v2400 = vpop.f32.mrb[0].mxu0
      %v2401 = vadd.f32 0.0, %v2400
      %v2402 = vpop.f32.mrb[0].mxu0
      %2403 = vmatprep.mubr.f32.mxu0 0.0
      %2404 = vmatmul.mubr.f32.gmra.mrb[0].mxu0 %v2319
      %v2405 = vpop.f32.mrb[0].mxu0
      %v2406 = vadd.f32 0.0, %v2405
      %v2407 = vpop.f32.mrb[0].mxu0
      %2408 = vmatprep.mubr.f32.mxu0 0.0
      %2409 = vmatmul.mubr.f32.gmra.mrb[0].mxu0 %v2322
      %v2410 = vpop.f32.mrb[0].mxu0
      %v2411 = vadd.f32 0.0, %v2410
      %v2412 = vpop.f32.mrb[0].mxu0
      %2413 = vdwg.mxu0
      %v2414 = vadd.f32 %v2302, %v2391
      %v2415 = vadd.f32 %v2303, %v2396
      %v2416 = vadd.f32 %v2304, %v2401
      %v2417 = vadd.f32 %v2305, %v2406
      %v2418 = vadd.f32 %v2306, %v2411
      %s2419 = scalar_lea.vmem %s3, 72
      %v2420 = vld [vmem:[%s2419] sm:$0xff]
      %v2422 = vsel %vm1424, %v1282, 0
      %v2425 = vsel %vm1424, %v1287, 0
      %v2428 = vsel %vm1424, %v1290, 0
      %v2431 = vsel %vm1424, %v1295, 0
      %v2434 = vsel %vm1424, %v1298, 0
      %2436 = vmatprep.subr.mxu0 0.0
      %2437 = vmatpush1.msra.mxu0 %v2420
      %2438 = vmatprep.subr.mxu0 0.0
      %2439 = vmatpush1.msra.mxu0 0.0
      %2440 = vmatprep.subr.mxu0 0.0
      %2441 = vmatpush1.msra.mxu0 0.0
      %2442 = vmatprep.subr.mxu0 0.0
      %2443 = vmatpush1.msra.mxu0 0.0
      %2444 = vmatprep.subr.mxu0 0.0
      %2445 = vmatpush1.msra.mxu0 0.0
      %2446 = vmatprep.subr.mxu0 0.0
      %2447 = vmatpush1.msra.mxu0 0.0
      %2448 = vmatprep.subr.mxu0 0.0
      %2449 = vmatpush1.msra.mxu0 0.0
      %2450 = vmatprep.subr.mxu0 0.0
      %2451 = vmatpush1.msra.mxu0 0.0
      %2452 = vmatprep.subr.mxu0 0.0
      %2453 = vmatpush1.msra.mxu0 0.0
      %2454 = vmatprep.subr.mxu0 0.0
      %2455 = vmatpush1.msra.mxu0 0.0
      %2456 = vmatprep.subr.mxu0 0.0
      %2457 = vmatpush1.msra.mxu0 0.0
      %2458 = vmatprep.subr.mxu0 0.0
      %2459 = vmatpush1.msra.mxu0 0.0
      %2460 = vmatprep.subr.mxu0 0.0
      %2461 = vmatpush1.msra.mxu0 0.0
      %2462 = vmatprep.subr.mxu0 0.0
      %2463 = vmatpush1.msra.mxu0 0.0
      %2464 = vmatprep.subr.mxu0 0.0
      %2465 = vmatpush1.msra.mxu0 0.0
      %2466 = vmatprep.subr.mxu0 0.0
      %2467 = vmatpush1.msra.mxu0 0.0
      %2468 = vmatprep.subr.mxu0 0.0
      %2469 = vmatpush1.msra.mxu0 0.0
      %2470 = vmatprep.subr.mxu0 0.0
      %2471 = vmatpush1.msra.mxu0 0.0
      %2472 = vmatprep.subr.mxu0 0.0
      %2473 = vmatpush1.msra.mxu0 0.0
      %2474 = vmatprep.subr.mxu0 0.0
      %2475 = vmatpush1.msra.mxu0 0.0
      %2476 = vmatprep.subr.mxu0 0.0
      %2477 = vmatpush1.msra.mxu0 0.0
      %2478 = vmatprep.subr.mxu0 0.0
      %2479 = vmatpush1.msra.mxu0 0.0
      %2480 = vmatprep.subr.mxu0 0.0
      %2481 = vmatpush1.msra.mxu0 0.0
      %2482 = vmatprep.subr.mxu0 0.0
      %2483 = vmatpush1.msra.mxu0 0.0
      %2484 = vmatprep.subr.mxu0 0.0
      %2485 = vmatpush1.msra.mxu0 0.0
      %2486 = vmatprep.subr.mxu0 0.0
      %2487 = vmatpush1.msra.mxu0 0.0
      %2488 = vmatprep.subr.mxu0 0.0
      %2489 = vmatpush1.msra.mxu0 0.0
      %2490 = vmatprep.subr.mxu0 0.0
      %2491 = vmatpush1.msra.mxu0 0.0
      %2492 = vmatprep.subr.mxu0 0.0
      %2493 = vmatpush1.msra.mxu0 0.0
      %2494 = vmatprep.subr.mxu0 0.0
      %2495 = vmatpush1.msra.mxu0 0.0
      %2496 = vmatprep.subr.mxu0 0.0
      %2497 = vmatpush1.msra.mxu0 0.0
      %2498 = vmatprep.subr.mxu0 0.0
      %2499 = vmatpush1.msra.mxu0 0.0
      %2500 = vmatprep.mubr.f32.mxu0 0.0
      %2501 = vmatmul.mubr.f32.gmra.mrb[0].mxu0 %v2422
      %v2502 = vpop.f32.mrb[0].mxu0
      %v2503 = vadd.f32 0.0, %v2502
      %v2504 = vpop.f32.mrb[0].mxu0
      %2505 = vmatprep.mubr.f32.mxu0 0.0
      %2506 = vmatmul.mubr.f32.gmra.mrb[0].mxu0 %v2425
      %v2507 = vpop.f32.mrb[0].mxu0
      %v2508 = vadd.f32 0.0, %v2507
      %v2509 = vpop.f32.mrb[0].mxu0
      %2510 = vmatprep.mubr.f32.mxu0 0.0
      %2511 = vmatmul.mubr.f32.gmra.mrb[0].mxu0 %v2428
      %v2512 = vpop.f32.mrb[0].mxu0
      %v2513 = vadd.f32 0.0, %v2512
      %v2514 = vpop.f32.mrb[0].mxu0
      %2515 = vmatprep.mubr.f32.mxu0 0.0
      %2516 = vmatmul.mubr.f32.gmra.mrb[0].mxu0 %v2431
      %v2517 = vpop.f32.mrb[0].mxu0
      %v2518 = vadd.f32 0.0, %v2517
      %v2519 = vpop.f32.mrb[0].mxu0
      %2520 = vmatprep.mubr.f32.mxu0 0.0
      %2521 = vmatmul.mubr.f32.gmra.mrb[0].mxu0 %v2434
      %v2522 = vpop.f32.mrb[0].mxu0
      %v2523 = vadd.f32 0.0, %v2522
      %v2524 = vpop.f32.mrb[0].mxu0
      %2525 = vdwg.mxu0
      %v2526 = vadd.f32 %v2414, %v2503
      %v2527 = vadd.f32 %v2415, %v2508
      %v2528 = vadd.f32 %v2416, %v2513
      %v2529 = vadd.f32 %v2417, %v2518
      %v2530 = vadd.f32 %v2418, %v2523
      %s2531 = scalar_lea.vmem %s3, 80
      %v2532 = vld [vmem:[%s2531] sm:$0xff]
      %v2534 = vsel %vm1424, %v1303, 0
      %v2537 = vsel %vm1424, %v1306, 0
      %v2540 = vsel %vm1424, %v1311, 0
      %v2543 = vsel %vm1424, %v1314, 0
      %v2546 = vsel %vm1424, %v1319, 0
      %2548 = vmatprep.subr.mxu0 0.0
      %2549 = vmatpush1.msra.mxu0 %v2532
      %2550 = vmatprep.subr.mxu0 0.0
      %2551 = vmatpush1.msra.mxu0 0.0
      %2552 = vmatprep.subr.mxu0 0.0
      %2553 = vmatpush1.msra.mxu0 0.0
      %2554 = vmatprep.subr.mxu0 0.0
      %2555 = vmatpush1.msra.mxu0 0.0
      %2556 = vmatprep.subr.mxu0 0.0
      %2557 = vmatpush1.msra.mxu0 0.0
      %2558 = vmatprep.subr.mxu0 0.0
      %2559 = vmatpush1.msra.mxu0 0.0
      %2560 = vmatprep.subr.mxu0 0.0
      %2561 = vmatpush1.msra.mxu0 0.0
      %2562 = vmatprep.subr.mxu0 0.0
      %2563 = vmatpush1.msra.mxu0 0.0
      %2564 = vmatprep.subr.mxu0 0.0
      %2565 = vmatpush1.msra.mxu0 0.0
      %2566 = vmatprep.subr.mxu0 0.0
      %2567 = vmatpush1.msra.mxu0 0.0
      %2568 = vmatprep.subr.mxu0 0.0
      %2569 = vmatpush1.msra.mxu0 0.0
      %2570 = vmatprep.subr.mxu0 0.0
      %2571 = vmatpush1.msra.mxu0 0.0
      %2572 = vmatprep.subr.mxu0 0.0
      %2573 = vmatpush1.msra.mxu0 0.0
      %2574 = vmatprep.subr.mxu0 0.0
      %2575 = vmatpush1.msra.mxu0 0.0
      %2576 = vmatprep.subr.mxu0 0.0
      %2577 = vmatpush1.msra.mxu0 0.0
      %2578 = vmatprep.subr.mxu0 0.0
      %2579 = vmatpush1.msra.mxu0 0.0
      %2580 = vmatprep.subr.mxu0 0.0
      %2581 = vmatpush1.msra.mxu0 0.0
      %2582 = vmatprep.subr.mxu0 0.0
      %2583 = vmatpush1.msra.mxu0 0.0
      %2584 = vmatprep.subr.mxu0 0.0
      %2585 = vmatpush1.msra.mxu0 0.0
      %2586 = vmatprep.subr.mxu0 0.0
      %2587 = vmatpush1.msra.mxu0 0.0
      %2588 = vmatprep.subr.mxu0 0.0
      %2589 = vmatpush1.msra.mxu0 0.0
      %2590 = vmatprep.subr.mxu0 0.0
      %2591 = vmatpush1.msra.mxu0 0.0
      %2592 = vmatprep.subr.mxu0 0.0
      %2593 = vmatpush1.msra.mxu0 0.0
      %2594 = vmatprep.subr.mxu0 0.0
      %2595 = vmatpush1.msra.mxu0 0.0
      %2596 = vmatprep.subr.mxu0 0.0
      %2597 = vmatpush1.msra.mxu0 0.0
      %2598 = vmatprep.subr.mxu0 0.0
      %2599 = vmatpush1.msra.mxu0 0.0
      %2600 = vmatprep.subr.mxu0 0.0
      %2601 = vmatpush1.msra.mxu0 0.0
      %2602 = vmatprep.subr.mxu0 0.0
      %2603 = vmatpush1.msra.mxu0 0.0
      %2604 = vmatprep.subr.mxu0 0.0
      %2605 = vmatpush1.msra.mxu0 0.0
      %2606 = vmatprep.subr.mxu0 0.0
      %2607 = vmatpush1.msra.mxu0 0.0
      %2608 = vmatprep.subr.mxu0 0.0
      %2609 = vmatpush1.msra.mxu0 0.0
      %2610 = vmatprep.subr.mxu0 0.0
      %2611 = vmatpush1.msra.mxu0 0.0
      %2612 = vmatprep.mubr.f32.mxu0 0.0
      %2613 = vmatmul.mubr.f32.gmra.mrb[0].mxu0 %v2534
      %v2614 = vpop.f32.mrb[0].mxu0
      %v2615 = vadd.f32 0.0, %v2614
      %v2616 = vpop.f32.mrb[0].mxu0
      %2617 = vmatprep.mubr.f32.mxu0 0.0
      %2618 = vmatmul.mubr.f32.gmra.mrb[0].mxu0 %v2537
      %v2619 = vpop.f32.mrb[0].mxu0
      %v2620 = vadd.f32 0.0, %v2619
      %v2621 = vpop.f32.mrb[0].mxu0
      %2622 = vmatprep.mubr.f32.mxu0 0.0
      %2623 = vmatmul.mubr.f32.gmra.mrb[0].mxu0 %v2540
      %v2624 = vpop.f32.mrb[0].mxu0
      %v2625 = vadd.f32 0.0, %v2624
      %v2626 = vpop.f32.mrb[0].mxu0
      %2627 = vmatprep.mubr.f32.mxu0 0.0
      %2628 = vmatmul.mubr.f32.gmra.mrb[0].mxu0 %v2543
      %v2629 = vpop.f32.mrb[0].mxu0
      %v2630 = vadd.f32 0.0, %v2629
      %v2631 = vpop.f32.mrb[0].mxu0
      %2632 = vmatprep.mubr.f32.mxu0 0.0
      %2633 = vmatmul.mubr.f32.gmra.mrb[0].mxu0 %v2546
      %v2634 = vpop.f32.mrb[0].mxu0
      %v2635 = vadd.f32 0.0, %v2634
      %v2636 = vpop.f32.mrb[0].mxu0
      %2637 = vdwg.mxu0
      %v2638 = vadd.f32 %v2526, %v2615
      %v2639 = vadd.f32 %v2527, %v2620
      %v2640 = vadd.f32 %v2528, %v2625
      %v2641 = vadd.f32 %v2529, %v2630
      %v2642 = vadd.f32 %v2530, %v2635
      %s2643 = scalar_lea.vmem %s3, 88
      %v2644 = vld [vmem:[%s2643] sm:$0xff]
      %v2646 = vsel %vm1424, %v1322, 0
      %v2649 = vsel %vm1424, %v1327, 0
      %v2652 = vsel %vm1424, %v1330, 0
      %v2655 = vsel %vm1424, %v1335, 0
      %v2658 = vsel %vm1424, %v1338, 0
      %2660 = vmatprep.subr.mxu0 0.0
      %2661 = vmatpush1.msra.mxu0 %v2644
      %2662 = vmatprep.subr.mxu0 0.0
      %2663 = vmatpush1.msra.mxu0 0.0
      %2664 = vmatprep.subr.mxu0 0.0
      %2665 = vmatpush1.msra.mxu0 0.0
      %2666 = vmatprep.subr.mxu0 0.0
      %2667 = vmatpush1.msra.mxu0 0.0
      %2668 = vmatprep.subr.mxu0 0.0
      %2669 = vmatpush1.msra.mxu0 0.0
      %2670 = vmatprep.subr.mxu0 0.0
      %2671 = vmatpush1.msra.mxu0 0.0
      %2672 = vmatprep.subr.mxu0 0.0
      %2673 = vmatpush1.msra.mxu0 0.0
      %2674 = vmatprep.subr.mxu0 0.0
      %2675 = vmatpush1.msra.mxu0 0.0
      %2676 = vmatprep.subr.mxu0 0.0
      %2677 = vmatpush1.msra.mxu0 0.0
      %2678 = vmatprep.subr.mxu0 0.0
      %2679 = vmatpush1.msra.mxu0 0.0
      %2680 = vmatprep.subr.mxu0 0.0
      %2681 = vmatpush1.msra.mxu0 0.0
      %2682 = vmatprep.subr.mxu0 0.0
      %2683 = vmatpush1.msra.mxu0 0.0
      %2684 = vmatprep.subr.mxu0 0.0
      %2685 = vmatpush1.msra.mxu0 0.0
      %2686 = vmatprep.subr.mxu0 0.0
      %2687 = vmatpush1.msra.mxu0 0.0
      %2688 = vmatprep.subr.mxu0 0.0
      %2689 = vmatpush1.msra.mxu0 0.0
      %2690 = vmatprep.subr.mxu0 0.0
      %2691 = vmatpush1.msra.mxu0 0.0
      %2692 = vmatprep.subr.mxu0 0.0
      %2693 = vmatpush1.msra.mxu0 0.0
      %2694 = vmatprep.subr.mxu0 0.0
      %2695 = vmatpush1.msra.mxu0 0.0
      %2696 = vmatprep.subr.mxu0 0.0
      %2697 = vmatpush1.msra.mxu0 0.0
      %2698 = vmatprep.subr.mxu0 0.0
      %2699 = vmatpush1.msra.mxu0 0.0
      %2700 = vmatprep.subr.mxu0 0.0
      %2701 = vmatpush1.msra.mxu0 0.0
      %2702 = vmatprep.subr.mxu0 0.0
      %2703 = vmatpush1.msra.mxu0 0.0
      %2704 = vmatprep.subr.mxu0 0.0
      %2705 = vmatpush1.msra.mxu0 0.0
      %2706 = vmatprep.subr.mxu0 0.0
      %2707 = vmatpush1.msra.mxu0 0.0
      %2708 = vmatprep.subr.mxu0 0.0
      %2709 = vmatpush1.msra.mxu0 0.0
      %2710 = vmatprep.subr.mxu0 0.0
      %2711 = vmatpush1.msra.mxu0 0.0
      %2712 = vmatprep.subr.mxu0 0.0
      %2713 = vmatpush1.msra.mxu0 0.0
      %2714 = vmatprep.subr.mxu0 0.0
      %2715 = vmatpush1.msra.mxu0 0.0
      %2716 = vmatprep.subr.mxu0 0.0
      %2717 = vmatpush1.msra.mxu0 0.0
      %2718 = vmatprep.subr.mxu0 0.0
      %2719 = vmatpush1.msra.mxu0 0.0
      %2720 = vmatprep.subr.mxu0 0.0
      %2721 = vmatpush1.msra.mxu0 0.0
      %2722 = vmatprep.subr.mxu0 0.0
      %2723 = vmatpush1.msra.mxu0 0.0
      %2724 = vmatprep.mubr.f32.mxu0 0.0
      %2725 = vmatmul.mubr.f32.gmra.mrb[0].mxu0 %v2646
      %v2726 = vpop.f32.mrb[0].mxu0
      %v2727 = vadd.f32 0.0, %v2726
      %v2728 = vpop.f32.mrb[0].mxu0
      %2729 = vmatprep.mubr.f32.mxu0 0.0
      %2730 = vmatmul.mubr.f32.gmra.mrb[0].mxu0 %v2649
      %v2731 = vpop.f32.mrb[0].mxu0
      %v2732 = vadd.f32 0.0, %v2731
      %v2733 = vpop.f32.mrb[0].mxu0
      %2734 = vmatprep.mubr.f32.mxu0 0.0
      %2735 = vmatmul.mubr.f32.gmra.mrb[0].mxu0 %v2652
      %v2736 = vpop.f32.mrb[0].mxu0
      %v2737 = vadd.f32 0.0, %v2736
      %v2738 = vpop.f32.mrb[0].mxu0
      %2739 = vmatprep.mubr.f32.mxu0 0.0
      %2740 = vmatmul.mubr.f32.gmra.mrb[0].mxu0 %v2655
      %v2741 = vpop.f32.mrb[0].mxu0
      %v2742 = vadd.f32 0.0, %v2741
      %v2743 = vpop.f32.mrb[0].mxu0
      %2744 = vmatprep.mubr.f32.mxu0 0.0
      %2745 = vmatmul.mubr.f32.gmra.mrb[0].mxu0 %v2658
      %v2746 = vpop.f32.mrb[0].mxu0
      %v2747 = vadd.f32 0.0, %v2746
      %v2748 = vpop.f32.mrb[0].mxu0
      %2749 = vdwg.mxu0
      %v2750 = vadd.f32 %v2638, %v2727
      %v2751 = vadd.f32 %v2639, %v2732
      %v2752 = vadd.f32 %v2640, %v2737
      %v2753 = vadd.f32 %v2641, %v2742
      %v2754 = vadd.f32 %v2642, %v2747
      %s2755 = scalar_lea.vmem %s3, 96
      %v2756 = vld [vmem:[%s2755] sm:$0xff]
      %v2758 = vsel %vm1424, %v1343, 0
      %v2761 = vsel %vm1424, %v1346, 0
      %v2764 = vsel %vm1424, %v1351, 0
      %v2767 = vsel %vm1424, %v1354, 0
      %v2770 = vsel %vm1424, %v1359, 0
      %2772 = vmatprep.subr.mxu0 0.0
      %2773 = vmatpush1.msra.mxu0 %v2756
      %2774 = vmatprep.subr.mxu0 0.0
      %2775 = vmatpush1.msra.mxu0 0.0
      %2776 = vmatprep.subr.mxu0 0.0
      %2777 = vmatpush1.msra.mxu0 0.0
      %2778 = vmatprep.subr.mxu0 0.0
      %2779 = vmatpush1.msra.mxu0 0.0
      %2780 = vmatprep.subr.mxu0 0.0
      %2781 = vmatpush1.msra.mxu0 0.0
      %2782 = vmatprep.subr.mxu0 0.0
      %2783 = vmatpush1.msra.mxu0 0.0
      %2784 = vmatprep.subr.mxu0 0.0
      %2785 = vmatpush1.msra.mxu0 0.0
      %2786 = vmatprep.subr.mxu0 0.0
      %2787 = vmatpush1.msra.mxu0 0.0
      %2788 = vmatprep.subr.mxu0 0.0
      %2789 = vmatpush1.msra.mxu0 0.0
      %2790 = vmatprep.subr.mxu0 0.0
      %2791 = vmatpush1.msra.mxu0 0.0
      %2792 = vmatprep.subr.mxu0 0.0
      %2793 = vmatpush1.msra.mxu0 0.0
      %2794 = vmatprep.subr.mxu0 0.0
      %2795 = vmatpush1.msra.mxu0 0.0
      %2796 = vmatprep.subr.mxu0 0.0
      %2797 = vmatpush1.msra.mxu0 0.0
      %2798 = vmatprep.subr.mxu0 0.0
      %2799 = vmatpush1.msra.mxu0 0.0
      %2800 = vmatprep.subr.mxu0 0.0
      %2801 = vmatpush1.msra.mxu0 0.0
      %2802 = vmatprep.subr.mxu0 0.0
      %2803 = vmatpush1.msra.mxu0 0.0
      %2804 = vmatprep.subr.mxu0 0.0
      %2805 = vmatpush1.msra.mxu0 0.0
      %2806 = vmatprep.subr.mxu0 0.0
      %2807 = vmatpush1.msra.mxu0 0.0
      %2808 = vmatprep.subr.mxu0 0.0
      %2809 = vmatpush1.msra.mxu0 0.0
      %2810 = vmatprep.subr.mxu0 0.0
      %2811 = vmatpush1.msra.mxu0 0.0
      %2812 = vmatprep.subr.mxu0 0.0
      %2813 = vmatpush1.msra.mxu0 0.0
      %2814 = vmatprep.subr.mxu0 0.0
      %2815 = vmatpush1.msra.mxu0 0.0
      %2816 = vmatprep.subr.mxu0 0.0
      %2817 = vmatpush1.msra.mxu0 0.0
      %2818 = vmatprep.subr.mxu0 0.0
      %2819 = vmatpush1.msra.mxu0 0.0
      %2820 = vmatprep.subr.mxu0 0.0
      %2821 = vmatpush1.msra.mxu0 0.0
      %2822 = vmatprep.subr.mxu0 0.0
      %2823 = vmatpush1.msra.mxu0 0.0
      %2824 = vmatprep.subr.mxu0 0.0
      %2825 = vmatpush1.msra.mxu0 0.0
      %2826 = vmatprep.subr.mxu0 0.0
      %2827 = vmatpush1.msra.mxu0 0.0
      %2828 = vmatprep.subr.mxu0 0.0
      %2829 = vmatpush1.msra.mxu0 0.0
      %2830 = vmatprep.subr.mxu0 0.0
      %2831 = vmatpush1.msra.mxu0 0.0
      %2832 = vmatprep.subr.mxu0 0.0
      %2833 = vmatpush1.msra.mxu0 0.0
      %2834 = vmatprep.subr.mxu0 0.0
      %2835 = vmatpush1.msra.mxu0 0.0
      %2836 = vmatprep.mubr.f32.mxu0 0.0
      %2837 = vmatmul.mubr.f32.gmra.mrb[0].mxu0 %v2758
      %v2838 = vpop.f32.mrb[0].mxu0
      %v2839 = vadd.f32 0.0, %v2838
      %v2840 = vpop.f32.mrb[0].mxu0
      %2841 = vmatprep.mubr.f32.mxu0 0.0
      %2842 = vmatmul.mubr.f32.gmra.mrb[0].mxu0 %v2761
      %v2843 = vpop.f32.mrb[0].mxu0
      %v2844 = vadd.f32 0.0, %v2843
      %v2845 = vpop.f32.mrb[0].mxu0
      %2846 = vmatprep.mubr.f32.mxu0 0.0
      %2847 = vmatmul.mubr.f32.gmra.mrb[0].mxu0 %v2764
      %v2848 = vpop.f32.mrb[0].mxu0
      %v2849 = vadd.f32 0.0, %v2848
      %v2850 = vpop.f32.mrb[0].mxu0
      %2851 = vmatprep.mubr.f32.mxu0 0.0
      %2852 = vmatmul.mubr.f32.gmra.mrb[0].mxu0 %v2767
      %v2853 = vpop.f32.mrb[0].mxu0
      %v2854 = vadd.f32 0.0, %v2853
      %v2855 = vpop.f32.mrb[0].mxu0
      %2856 = vmatprep.mubr.f32.mxu0 0.0
      %2857 = vmatmul.mubr.f32.gmra.mrb[0].mxu0 %v2770
      %v2858 = vpop.f32.mrb[0].mxu0
      %v2859 = vadd.f32 0.0, %v2858
      %v2860 = vpop.f32.mrb[0].mxu0
      %2861 = vdwg.mxu0
      %v2862 = vadd.f32 %v2750, %v2839
      %v2863 = vadd.f32 %v2751, %v2844
      %v2864 = vadd.f32 %v2752, %v2849
      %v2865 = vadd.f32 %v2753, %v2854
      %v2866 = vadd.f32 %v2754, %v2859
      %s2867 = scalar_lea.vmem %s3, 104
      %v2868 = vld [vmem:[%s2867] sm:$0xff]
      %v2870 = vsel %vm1424, %v1362, 0
      %v2873 = vsel %vm1424, %v1367, 0
      %v2876 = vsel %vm1424, %v1370, 0
      %v2879 = vsel %vm1424, %v1375, 0
      %v2882 = vsel %vm1424, %v1378, 0
      %2884 = vmatprep.subr.mxu0 0.0
      %2885 = vmatpush1.msra.mxu0 %v2868
      %2886 = vmatprep.subr.mxu0 0.0
      %2887 = vmatpush1.msra.mxu0 0.0
      %2888 = vmatprep.subr.mxu0 0.0
      %2889 = vmatpush1.msra.mxu0 0.0
      %2890 = vmatprep.subr.mxu0 0.0
      %2891 = vmatpush1.msra.mxu0 0.0
      %2892 = vmatprep.subr.mxu0 0.0
      %2893 = vmatpush1.msra.mxu0 0.0
      %2894 = vmatprep.subr.mxu0 0.0
      %2895 = vmatpush1.msra.mxu0 0.0
      %2896 = vmatprep.subr.mxu0 0.0
      %2897 = vmatpush1.msra.mxu0 0.0
      %2898 = vmatprep.subr.mxu0 0.0
      %2899 = vmatpush1.msra.mxu0 0.0
      %2900 = vmatprep.subr.mxu0 0.0
      %2901 = vmatpush1.msra.mxu0 0.0
      %2902 = vmatprep.subr.mxu0 0.0
      %2903 = vmatpush1.msra.mxu0 0.0
      %2904 = vmatprep.subr.mxu0 0.0
      %2905 = vmatpush1.msra.mxu0 0.0
      %2906 = vmatprep.subr.mxu0 0.0
      %2907 = vmatpush1.msra.mxu0 0.0
      %2908 = vmatprep.subr.mxu0 0.0
      %2909 = vmatpush1.msra.mxu0 0.0
      %2910 = vmatprep.subr.mxu0 0.0
      %2911 = vmatpush1.msra.mxu0 0.0
      %2912 = vmatprep.subr.mxu0 0.0
      %2913 = vmatpush1.msra.mxu0 0.0
      %2914 = vmatprep.subr.mxu0 0.0
      %2915 = vmatpush1.msra.mxu0 0.0
      %2916 = vmatprep.subr.mxu0 0.0
      %2917 = vmatpush1.msra.mxu0 0.0
      %2918 = vmatprep.subr.mxu0 0.0
      %2919 = vmatpush1.msra.mxu0 0.0
      %2920 = vmatprep.subr.mxu0 0.0
      %2921 = vmatpush1.msra.mxu0 0.0
      %2922 = vmatprep.subr.mxu0 0.0
      %2923 = vmatpush1.msra.mxu0 0.0
      %2924 = vmatprep.subr.mxu0 0.0
      %2925 = vmatpush1.msra.mxu0 0.0
      %2926 = vmatprep.subr.mxu0 0.0
      %2927 = vmatpush1.msra.mxu0 0.0
      %2928 = vmatprep.subr.mxu0 0.0
      %2929 = vmatpush1.msra.mxu0 0.0
      %2930 = vmatprep.subr.mxu0 0.0
      %2931 = vmatpush1.msra.mxu0 0.0
      %2932 = vmatprep.subr.mxu0 0.0
      %2933 = vmatpush1.msra.mxu0 0.0
      %2934 = vmatprep.subr.mxu0 0.0
      %2935 = vmatpush1.msra.mxu0 0.0
      %2936 = vmatprep.subr.mxu0 0.0
      %2937 = vmatpush1.msra.mxu0 0.0
      %2938 = vmatprep.subr.mxu0 0.0
      %2939 = vmatpush1.msra.mxu0 0.0
      %2940 = vmatprep.subr.mxu0 0.0
      %2941 = vmatpush1.msra.mxu0 0.0
      %2942 = vmatprep.subr.mxu0 0.0
      %2943 = vmatpush1.msra.mxu0 0.0
      %2944 = vmatprep.subr.mxu0 0.0
      %2945 = vmatpush1.msra.mxu0 0.0
      %2946 = vmatprep.subr.mxu0 0.0
      %2947 = vmatpush1.msra.mxu0 0.0
      %2948 = vmatprep.mubr.f32.mxu0 0.0
      %2949 = vmatmul.mubr.f32.gmra.mrb[0].mxu0 %v2870
      %v2950 = vpop.f32.mrb[0].mxu0
      %v2951 = vadd.f32 0.0, %v2950
      %v2952 = vpop.f32.mrb[0].mxu0
      %2953 = vmatprep.mubr.f32.mxu0 0.0
      %2954 = vmatmul.mubr.f32.gmra.mrb[0].mxu0 %v2873
      %v2955 = vpop.f32.mrb[0].mxu0
      %v2956 = vadd.f32 0.0, %v2955
      %v2957 = vpop.f32.mrb[0].mxu0
      %2958 = vmatprep.mubr.f32.mxu0 0.0
      %2959 = vmatmul.mubr.f32.gmra.mrb[0].mxu0 %v2876
      %v2960 = vpop.f32.mrb[0].mxu0
      %v2961 = vadd.f32 0.0, %v2960
      %v2962 = vpop.f32.mrb[0].mxu0
      %2963 = vmatprep.mubr.f32.mxu0 0.0
      %2964 = vmatmul.mubr.f32.gmra.mrb[0].mxu0 %v2879
      %v2965 = vpop.f32.mrb[0].mxu0
      %v2966 = vadd.f32 0.0, %v2965
      %v2967 = vpop.f32.mrb[0].mxu0
      %2968 = vmatprep.mubr.f32.mxu0 0.0
      %2969 = vmatmul.mubr.f32.gmra.mrb[0].mxu0 %v2882
      %v2970 = vpop.f32.mrb[0].mxu0
      %v2971 = vadd.f32 0.0, %v2970
      %v2972 = vpop.f32.mrb[0].mxu0
      %2973 = vdwg.mxu0
      %v2974 = vadd.f32 %v2862, %v2951
      %v2975 = vadd.f32 %v2863, %v2956
      %v2976 = vadd.f32 %v2864, %v2961
      %v2977 = vadd.f32 %v2865, %v2966
      %v2978 = vadd.f32 %v2866, %v2971
      %s2979 = scalar_lea.vmem %s3, 112
      %v2980 = vld [vmem:[%s2979] sm:$0xff]
      %v2982 = vsel %vm1424, %v1383, 0
      %v2985 = vsel %vm1424, %v1386, 0
      %v2988 = vsel %vm1424, %v1391, 0
      %v2991 = vsel %vm1424, %v1394, 0
      %v2994 = vsel %vm1424, %v1399, 0
      %2996 = vmatprep.subr.mxu0 0.0
      %2997 = vmatpush1.msra.mxu0 %v2980
      %2998 = vmatprep.subr.mxu0 0.0
      %2999 = vmatpush1.msra.mxu0 0.0
      %3000 = vmatprep.subr.mxu0 0.0
      %3001 = vmatpush1.msra.mxu0 0.0
      %3002 = vmatprep.subr.mxu0 0.0
      %3003 = vmatpush1.msra.mxu0 0.0
      %3004 = vmatprep.subr.mxu0 0.0
      %3005 = vmatpush1.msra.mxu0 0.0
      %3006 = vmatprep.subr.mxu0 0.0
      %3007 = vmatpush1.msra.mxu0 0.0
      %3008 = vmatprep.subr.mxu0 0.0
      %3009 = vmatpush1.msra.mxu0 0.0
      %3010 = vmatprep.subr.mxu0 0.0
      %3011 = vmatpush1.msra.mxu0 0.0
      %3012 = vmatprep.subr.mxu0 0.0
      %3013 = vmatpush1.msra.mxu0 0.0
      %3014 = vmatprep.subr.mxu0 0.0
      %3015 = vmatpush1.msra.mxu0 0.0
      %3016 = vmatprep.subr.mxu0 0.0
      %3017 = vmatpush1.msra.mxu0 0.0
      %3018 = vmatprep.subr.mxu0 0.0
      %3019 = vmatpush1.msra.mxu0 0.0
      %3020 = vmatprep.subr.mxu0 0.0
      %3021 = vmatpush1.msra.mxu0 0.0
      %3022 = vmatprep.subr.mxu0 0.0
      %3023 = vmatpush1.msra.mxu0 0.0
      %3024 = vmatprep.subr.mxu0 0.0
      %3025 = vmatpush1.msra.mxu0 0.0
      %3026 = vmatprep.subr.mxu0 0.0
      %3027 = vmatpush1.msra.mxu0 0.0
      %3028 = vmatprep.subr.mxu0 0.0
      %3029 = vmatpush1.msra.mxu0 0.0
      %3030 = vmatprep.subr.mxu0 0.0
      %3031 = vmatpush1.msra.mxu0 0.0
      %3032 = vmatprep.subr.mxu0 0.0
      %3033 = vmatpush1.msra.mxu0 0.0
      %3034 = vmatprep.subr.mxu0 0.0
      %3035 = vmatpush1.msra.mxu0 0.0
      %3036 = vmatprep.subr.mxu0 0.0
      %3037 = vmatpush1.msra.mxu0 0.0
      %3038 = vmatprep.subr.mxu0 0.0
      %3039 = vmatpush1.msra.mxu0 0.0
      %3040 = vmatprep.subr.mxu0 0.0
      %3041 = vmatpush1.msra.mxu0 0.0
      %3042 = vmatprep.subr.mxu0 0.0
      %3043 = vmatpush1.msra.mxu0 0.0
      %3044 = vmatprep.subr.mxu0 0.0
      %3045 = vmatpush1.msra.mxu0 0.0
      %3046 = vmatprep.subr.mxu0 0.0
      %3047 = vmatpush1.msra.mxu0 0.0
      %3048 = vmatprep.subr.mxu0 0.0
      %3049 = vmatpush1.msra.mxu0 0.0
      %3050 = vmatprep.subr.mxu0 0.0
      %3051 = vmatpush1.msra.mxu0 0.0
      %3052 = vmatprep.subr.mxu0 0.0
      %3053 = vmatpush1.msra.mxu0 0.0
      %3054 = vmatprep.subr.mxu0 0.0
      %3055 = vmatpush1.msra.mxu0 0.0
      %3056 = vmatprep.subr.mxu0 0.0
      %3057 = vmatpush1.msra.mxu0 0.0
      %3058 = vmatprep.subr.mxu0 0.0
      %3059 = vmatpush1.msra.mxu0 0.0
      %3060 = vmatprep.mubr.f32.mxu0 0.0
      %3061 = vmatmul.mubr.f32.gmra.mrb[0].mxu0 %v2982
      %v3062 = vpop.f32.mrb[0].mxu0
      %v3063 = vadd.f32 0.0, %v3062
      %v3064 = vpop.f32.mrb[0].mxu0
      %3065 = vmatprep.mubr.f32.mxu0 0.0
      %3066 = vmatmul.mubr.f32.gmra.mrb[0].mxu0 %v2985
      %v3067 = vpop.f32.mrb[0].mxu0
      %v3068 = vadd.f32 0.0, %v3067
      %v3069 = vpop.f32.mrb[0].mxu0
      %3070 = vmatprep.mubr.f32.mxu0 0.0
      %3071 = vmatmul.mubr.f32.gmra.mrb[0].mxu0 %v2988
      %v3072 = vpop.f32.mrb[0].mxu0
      %v3073 = vadd.f32 0.0, %v3072
      %v3074 = vpop.f32.mrb[0].mxu0
      %3075 = vmatprep.mubr.f32.mxu0 0.0
      %3076 = vmatmul.mubr.f32.gmra.mrb[0].mxu0 %v2991
      %v3077 = vpop.f32.mrb[0].mxu0
      %v3078 = vadd.f32 0.0, %v3077
      %v3079 = vpop.f32.mrb[0].mxu0
      %3080 = vmatprep.mubr.f32.mxu0 0.0
      %3081 = vmatmul.mubr.f32.gmra.mrb[0].mxu0 %v2994
      %v3082 = vpop.f32.mrb[0].mxu0
      %v3083 = vadd.f32 0.0, %v3082
      %v3084 = vpop.f32.mrb[0].mxu0
      %3085 = vdwg.mxu0
      %v3086 = vadd.f32 %v2974, %v3063
      %v3087 = vadd.f32 %v2975, %v3068
      %v3088 = vadd.f32 %v2976, %v3073
      %v3089 = vadd.f32 %v2977, %v3078
      %v3090 = vadd.f32 %v2978, %v3083
      %s3091 = scalar_lea.vmem %s3, 120
      %v3092 = vld [vmem:[%s3091] sm:$0xff]
      %v3094 = vsel %vm1424, %v1402, 0
      %v3097 = vsel %vm1424, %v1407, 0
      %v3100 = vsel %vm1424, %v1410, 0
      %v3103 = vsel %vm1424, %v1415, 0
      %v3106 = vsel %vm1424, %v1418, 0
      %3108 = vmatprep.subr.mxu0 0.0
      %3109 = vmatpush1.msra.mxu0 %v3092
      %3110 = vmatprep.subr.mxu0 0.0
      %3111 = vmatpush1.msra.mxu0 0.0
      %3112 = vmatprep.subr.mxu0 0.0
      %3113 = vmatpush1.msra.mxu0 0.0
      %3114 = vmatprep.subr.mxu0 0.0
      %3115 = vmatpush1.msra.mxu0 0.0
      %3116 = vmatprep.subr.mxu0 0.0
      %3117 = vmatpush1.msra.mxu0 0.0
      %3118 = vmatprep.subr.mxu0 0.0
      %3119 = vmatpush1.msra.mxu0 0.0
      %3120 = vmatprep.subr.mxu0 0.0
      %3121 = vmatpush1.msra.mxu0 0.0
      %3122 = vmatprep.subr.mxu0 0.0
      %3123 = vmatpush1.msra.mxu0 0.0
      %3124 = vmatprep.subr.mxu0 0.0
      %3125 = vmatpush1.msra.mxu0 0.0
      %3126 = vmatprep.subr.mxu0 0.0
      %3127 = vmatpush1.msra.mxu0 0.0
      %3128 = vmatprep.subr.mxu0 0.0
      %3129 = vmatpush1.msra.mxu0 0.0
      %3130 = vmatprep.subr.mxu0 0.0
      %3131 = vmatpush1.msra.mxu0 0.0
      %3132 = vmatprep.subr.mxu0 0.0
      %3133 = vmatpush1.msra.mxu0 0.0
      %3134 = vmatprep.subr.mxu0 0.0
      %3135 = vmatpush1.msra.mxu0 0.0
      %3136 = vmatprep.subr.mxu0 0.0
      %3137 = vmatpush1.msra.mxu0 0.0
      %3138 = vmatprep.subr.mxu0 0.0
      %3139 = vmatpush1.msra.mxu0 0.0
      %3140 = vmatprep.subr.mxu0 0.0
      %3141 = vmatpush1.msra.mxu0 0.0
      %3142 = vmatprep.subr.mxu0 0.0
      %3143 = vmatpush1.msra.mxu0 0.0
      %3144 = vmatprep.subr.mxu0 0.0
      %3145 = vmatpush1.msra.mxu0 0.0
      %3146 = vmatprep.subr.mxu0 0.0
      %3147 = vmatpush1.msra.mxu0 0.0
      %3148 = vmatprep.subr.mxu0 0.0
      %3149 = vmatpush1.msra.mxu0 0.0
      %3150 = vmatprep.subr.mxu0 0.0
      %3151 = vmatpush1.msra.mxu0 0.0
      %3152 = vmatprep.subr.mxu0 0.0
      %3153 = vmatpush1.msra.mxu0 0.0
      %3154 = vmatprep.subr.mxu0 0.0
      %3155 = vmatpush1.msra.mxu0 0.0
      %3156 = vmatprep.subr.mxu0 0.0
      %3157 = vmatpush1.msra.mxu0 0.0
      %3158 = vmatprep.subr.mxu0 0.0
      %3159 = vmatpush1.msra.mxu0 0.0
      %3160 = vmatprep.subr.mxu0 0.0
      %3161 = vmatpush1.msra.mxu0 0.0
      %3162 = vmatprep.subr.mxu0 0.0
      %3163 = vmatpush1.msra.mxu0 0.0
      %3164 = vmatprep.subr.mxu0 0.0
      %3165 = vmatpush1.msra.mxu0 0.0
      %3166 = vmatprep.subr.mxu0 0.0
      %3167 = vmatpush1.msra.mxu0 0.0
      %3168 = vmatprep.subr.mxu0 0.0
      %3169 = vmatpush1.msra.mxu0 0.0
      %3170 = vmatprep.subr.mxu0 0.0
      %3171 = vmatpush1.msra.mxu0 0.0
      %3172 = vmatprep.mubr.f32.mxu0 0.0
      %3173 = vmatmul.mubr.f32.gmra.mrb[0].mxu0 %v3094
      %v3174 = vpop.f32.mrb[0].mxu0
      %v3175 = vadd.f32 0.0, %v3174
      %v3176 = vpop.f32.mrb[0].mxu0
      %3177 = vmatprep.mubr.f32.mxu0 0.0
      %3178 = vmatmul.mubr.f32.gmra.mrb[0].mxu0 %v3097
      %v3179 = vpop.f32.mrb[0].mxu0
      %v3180 = vadd.f32 0.0, %v3179
      %v3181 = vpop.f32.mrb[0].mxu0
      %3182 = vmatprep.mubr.f32.mxu0 0.0
      %3183 = vmatmul.mubr.f32.gmra.mrb[0].mxu0 %v3100
      %v3184 = vpop.f32.mrb[0].mxu0
      %v3185 = vadd.f32 0.0, %v3184
      %v3186 = vpop.f32.mrb[0].mxu0
      %3187 = vmatprep.mubr.f32.mxu0 0.0
      %3188 = vmatmul.mubr.f32.gmra.mrb[0].mxu0 %v3103
      %v3189 = vpop.f32.mrb[0].mxu0
      %v3190 = vadd.f32 0.0, %v3189
      %v3191 = vpop.f32.mrb[0].mxu0
      %3192 = vmatprep.mubr.f32.mxu0 0.0
      %3193 = vmatmul.mubr.f32.gmra.mrb[0].mxu0 %v3106
      %v3194 = vpop.f32.mrb[0].mxu0
      %v3195 = vadd.f32 0.0, %v3194
      %v3196 = vpop.f32.mrb[0].mxu0
      %3197 = vdwg.mxu0
      %v3198 = vadd.f32 %v3086, %v3175
      %v3199 = vadd.f32 %v3087, %v3180
      %v3200 = vadd.f32 %v3088, %v3185
      %v3201 = vadd.f32 %v3089, %v3190
      %v3202 = vadd.f32 %v3090, %v3195
      %vm3203 = vcmp.ge.f32.partialorder %v3198, 0.0
      %vm3204 = vcmp.ge.f32.partialorder %v3199, 0.0
      %vm3205 = vcmp.ge.f32.partialorder %v3200, 0.0
      %vm3206 = vcmp.ge.f32.partialorder %v3201, 0.0
      %vm3207 = vcmp.ge.f32.partialorder %v3202, 0.0
      %v3208 = vmul.f32 %v3198, 0.2
      %v3209 = vmul.f32 %v3199, 0.2
      %v3210 = vmul.f32 %v3200, 0.2
      %v3211 = vmul.f32 %v3201, 0.2
      %v3212 = vmul.f32 %v3202, 0.2
      %v3213 = vsel %vm3203, %v3198, %v3208
      %v3214 = vsel %vm3204, %v3199, %v3209
      %v3215 = vsel %vm3205, %v3200, %v3210
      %v3216 = vsel %vm3206, %v3201, %v3211
      %v3217 = vsel %vm3207, %v3202, %v3212
      %v3218 = vld [vmem:[%s4] sm:$0xff]
      %v3219 = vld [vmem:[%s4 + $0x8] sm:$0xff]
      %v3220 = vld [vmem:[%s4 + $0x10] sm:$0xff]
      %v3221 = vld [vmem:[%s4 + $0x18] sm:$0xff]
      %v3222 = vld [vmem:[%s4 + $0x20] sm:$0xff]
      %v3223 = vmul.f32 %v3213, %v3218
      %v3224 = vmul.f32 %v3214, %v3219
      %v3225 = vmul.f32 %v3215, %v3220
      %v3226 = vmul.f32 %v3216, %v3221
      %v3227 = vmul.f32 %v3217, %v3222
      %v3228 = vsel %vm947, %v3223, 0.0
      %v3229 = vsel %vm947, %v3224, 0.0
      %v3230 = vadd.f32 %v3228, %v3229
      %v3231 = vsel %vm947, %v3225, 0.0
      %v3232 = vadd.f32 %v3230, %v3231
      %v3233 = vsel %vm947, %v3226, 0.0
      %v3234 = vadd.f32 %v3232, %v3233
      %v3235 = vsel %vm947, %v3227, 0.0
      %v3236 = vadd.f32 %v3234, %v3235
      %3237 = vadd.xlane.f32.xlu0 %v3236
      %v3238 = vpop.xlane.xlu0 %3237
      %v3239 = vrot.slane %v3238, 4
      %v3240 = vadd.f32 %v3238, %v3239
      %v3241 = vrot.slane %v3240, 2
      %v3242 = vadd.f32 %v3240, %v3241
      %v3243 = vrot.slane %v3242, 1
      %v3244 = vadd.f32 %v3242, %v3243
      %s3245 = vtos %v3244
      %v3246 = vstv %s3245
      %3247 = vst [vmem:[%s222] sm:$0xff] %v3246
      %p3248 = scmp.lt.s32.totalorder %s16, 1
      %s3249 = scalar_select %p3248, %s16, 1
      %s3250 = smul.addr %s3249, 8
      %s3251 = scalar_lea.vmem %s5, %s3250
      // Predicated region
      $region41: #{cnn_d_forward.1} parent=39 // pred_check
        %p3252 = pneg %p144
      $region42: #{cnn_d_forward.1} parent=39 // pred_check_branch
        %3254 = sbr.rel (%p3252) target = $region44
      $region43: #{cnn_d_forward.1} parent=39 // pred_region
        _
      $region44: #{cnn_d_forward.1} parent=39 // pred_fallthru
        _
    $region40: #{cnn_d_forward.1} parent=5 // pred_fallthru
      _
    %p3255 = scmp.le.s32.totalorder 2, %s11
    // Predicated region
    $region45: #{cnn_d_forward.1} parent=5 // pred_check
      %p3256 = pneg %p3255
    $region46: #{cnn_d_forward.1} parent=5 // pred_check_branch
      %3258 = sbr.rel (%p3256) target = $region48
    $region47: #{cnn_d_forward.1} parent=5 // pred_region
      %s3259 = ssub.s32 %s11, 2
      // Predicated region
      $region49: #{cnn_d_forward.1} parent=47 // pred_check
        %p3260 = pneg %p150
      $region50: #{cnn_d_forward.1} parent=47 // pred_check_branch
        %3262 = sbr.rel (%p3260) target = $region52
      $region51: #{cnn_d_forward.1} parent=47 // pred_region
        %p3263 = scmp.lt.s32.totalorder %s17, 1
        %s3264 = scalar_select %p3263, %s17, 1
        %s3265 = smul.addr %s3264, 8
        %s3266 = scalar_lea.vmem %s5, %s3265
      $region52: #{cnn_d_forward.1} parent=47 // pred_fallthru
        _
    $region48: #{cnn_d_forward.1} parent=5 // pred_fallthru
      _
  $region6: #{cnn_d_forward.1} parent=0 // loop_footer
    %s15 = sadd.s32 1, %s11
  $region7: #{cnn_d_forward.1} parent=0 // loop_footer_branch
    %10 = sbr.rel target = $region3
  $region8: #{cnn_d_forward.1} parent=0 // loop_exit
    _

</llo_original>
